<compile_context>
chip_gen: v7x
topology: tpu7x:2x2x1
jax: 0.10.0
libtpu: 0.0.40
codegen_flags: <defaults>
</compile_context>

<pallas_src>
import functools

import jax
import jax.numpy as jnp
from jax.experimental import pallas as pl
from jax.experimental.pallas import tpu as pltpu

LN_EPS = 1e-5


def _layernorm(x, gamma, beta):
    mu = jnp.mean(x, axis=-1, keepdims=True)
    var = jnp.mean((x - mu) ** 2, axis=-1, keepdims=True)
    return (x - mu) * jax.lax.rsqrt(var + LN_EPS) * gamma + beta


def _erf(x):
    # Abramowitz & Stegun 7.1.26 (max abs err 1.5e-7): exp + VPU arithmetic only.
    a1, a2, a3, a4, a5 = 0.254829592, -0.284496736, 1.421413741, -1.453152027, 1.061405429
    p = 0.3275911
    ax = jnp.abs(x)
    t = 1.0 / (1.0 + p * ax)
    poly = ((((a5 * t + a4) * t + a3) * t + a2) * t + a1) * t
    y = 1.0 - poly * jnp.exp(-ax * ax)
    return jnp.where(x < 0.0, -y, y)


def _gelu_exact(x):
    # nn.GELU() default = exact erf GELU.
    return 0.5 * x * (1.0 + _erf(x * 0.7071067811865476))


def _vit_kernel(p_ref, we_ref, be_ref,
                g1_ref, be1_ref, wqkv_ref, wout_ref, bout_ref,
                g2_ref, be2_ref, w1_ref, b1_ref, w2_ref, b2_ref,
                o_ref, *, heads, dim_head):
    """One grid step = (one batch tile, one transformer layer)."""
    layer = pl.program_id(1)
    bf16 = jnp.bfloat16
    bb, N, D = o_ref.shape
    inner = heads * dim_head
    scale = dim_head ** -0.5

    @pl.when(layer == 0)
    def _():
        # Fused patch embedding: patches @ W_embed + b_embed (== Conv2d k=stride=patch).
        pe = jnp.dot(p_ref[...].reshape(bb * N, -1), we_ref[...],
                     preferred_element_type=jnp.float32) + be_ref[...]
        o_ref[...] = pe.reshape(bb, N, D)

    x = o_ref[...].reshape(bb * N, D)      # fp32 residual stream, VMEM-resident across layers

    # ---------------- Attention (PreNorm) ----------------
    xn = _layernorm(x, g1_ref[0], be1_ref[0]).astype(bf16)
    qkv = jnp.dot(xn, wqkv_ref[0], preferred_element_type=jnp.float32)   # (bb*N, 3*inner)

    q_all = (qkv[:, :inner] * scale).reshape(bb, N, inner)   # softmax scale folded into q
    k_all = qkv[:, inner:2 * inner].reshape(bb, N, inner)
    v_all = qkv[:, 2 * inner:3 * inner].reshape(bb, N, inner)
    w_out = wout_ref[0]                                      # (inner, D) bf16

    proj = jnp.zeros((bb * N, D), jnp.float32)               # out-projection accumulator
    for h in range(heads):                                   # static unroll over heads
        sl = slice(h * dim_head, (h + 1) * dim_head)
        qh = q_all[:, :, sl].astype(bf16)
        kh = k_all[:, :, sl].astype(bf16)
        vh = v_all[:, :, sl].astype(bf16)
        s = jnp.einsum('bqd,bkd->bqk', qh, kh,
                       preferred_element_type=jnp.float32)   # (bb, N, N)
        s = s - jnp.max(s, axis=-1, keepdims=True)
        p = jnp.exp(s)
        p = p * pl.reciprocal(jnp.sum(p, axis=-1, keepdims=True), approx=True)
        oh = jnp.einsum('bqk,bkd->bqd', p.astype(bf16), vh,
                        preferred_element_type=jnp.float32)  # (bb, N, dim_head)
        # Fold the head directly into the output projection (no concat / relayout).
        proj = proj + jnp.dot(oh.reshape(bb * N, dim_head).astype(bf16), w_out[sl, :],
                              preferred_element_type=jnp.float32)
    x = x + proj + bout_ref[0]

    # ---------------- FeedForward (PreNorm) ----------------
    xn = _layernorm(x, g2_ref[0], be2_ref[0]).astype(bf16)
    h1 = jnp.dot(xn, w1_ref[0], preferred_element_type=jnp.float32) + b1_ref[0]
    h1 = _gelu_exact(h1)
    ff = jnp.dot(h1.astype(bf16), w2_ref[0], preferred_element_type=jnp.float32) + b2_ref[0]
    # TODO(synk): for production ViT sizes (mlp_dim ~ 3072-4096) additionally chunk w1/w2
    # over mlp_dim (extra grid axis) so the fused layer stays inside v7x's 64 MiB VMEM.

    o_ref[...] = (x + ff).reshape(bb, N, D)


def vit_forward(img, params, *, patch_size, heads, dim_head, batch_block=None):
    """Full ViT forward (patch embed + transformer) in a single pallas_call.

    Returns (x, None, None, None) to mirror the PyTorch module.
    """
    B, C, H, W = img.shape
    ph = pw = patch_size
    assert H % ph == 0 and W % pw == 0
    gh, gw = H // ph, W // pw
    N = gh * gw
    P = C * ph * pw
    D = params["w_embed"].shape[-1]
    depth = params["w_qkv"].shape[0]
    inner = heads * dim_head
    mlp_dim = params["w1"].shape[-1]
    assert params["w_qkv"].shape == (depth, D, 3 * inner)

    # im2col patch extraction in the wrapper (pure layout plumbing; == Conv2d k=stride=patch).
    patches = img.reshape(B, C, gh, ph, gw, pw).transpose(0, 2, 4, 1, 3, 5).reshape(B, N, P)
    patches = patches.astype(jnp.bfloat16)

    # bf16 weights: ~2x MXU throughput, half the weight DMA / VMEM footprint.
    w_embed = params["w_embed"].astype(jnp.bfloat16)
    wqkv = params["w_qkv"].astype(jnp.bfloat16)
    wout = params["w_out"].astype(jnp.bfloat16)
    w1 = params["w1"].astype(jnp.bfloat16)
    w2 = params["w2"].astype(jnp.bfloat16)

    bb = batch_block if batch_block is not None else min(B, 8)
    assert B % bb == 0, "batch must be divisible by the batch block"

    kern = functools.partial(_vit_kernel, heads=heads, dim_head=dim_head)

    x_map = lambda b, d: (b, 0, 0)      # per-batch tile, constant over depth (stays in VMEM)
    w_map = lambda b, d: (d, 0, 0)      # per-layer weights, streamed over depth
    e_map = lambda b, d: (0, 0)         # embedding weights, resident

    out = pl.pallas_call(
        kern,
        out_shape=jax.ShapeDtypeStruct((B, N, D), jnp.float32),
        grid=(B // bb, depth),
        in_specs=[
            pl.BlockSpec((bb, N, P), x_map),              # patches (bf16)
            pl.BlockSpec((P, D), e_map),                  # w_embed (bf16)
            pl.BlockSpec((1, D), e_map),                  # b_embed
            pl.BlockSpec((1, 1, D), w_map),               # ln1 gamma
            pl.BlockSpec((1, 1, D), w_map),               # ln1 beta
            pl.BlockSpec((1, D, 3 * inner), w_map),       # w_qkv (bf16)
            pl.BlockSpec((1, inner, D), w_map),           # w_out (bf16)
            pl.BlockSpec((1, 1, D), w_map),               # b_out
            pl.BlockSpec((1, 1, D), w_map),               # ln2 gamma
            pl.BlockSpec((1, 1, D), w_map),               # ln2 beta
            pl.BlockSpec((1, D, mlp_dim), w_map),         # w1 (bf16)
            pl.BlockSpec((1, 1, mlp_dim), w_map),         # b1
            pl.BlockSpec((1, mlp_dim, D), w_map),         # w2 (bf16)
            pl.BlockSpec((1, 1, D), w_map),               # b2
        ],
        out_specs=pl.BlockSpec((bb, N, D), x_map),
        compiler_params=pltpu.CompilerParams(
            dimension_semantics=("parallel", "arbitrary"),
            vmem_limit_bytes=48 * 1024 * 1024,
        ),
    )(patches, w_embed, params["b_embed"], params["ln1_g"], params["ln1_b"],
      wqkv, wout, params["b_out"], params["ln2_g"], params["ln2_b"],
      w1, params["b1"], w2, params["b2"])
    return out, None, None, None


# ---------------- pure-JAX fp32 reference for verification ----------------
def _reference_forward(img, p, *, patch_size, heads, dim_head):
    B, C, H, W = img.shape
    ph = pw = patch_size
    gh, gw = H // ph, W // pw
    patches = img.reshape(B, C, gh, ph, gw, pw).transpose(0, 2, 4, 1, 3, 5)
    patches = patches.reshape(B, gh * gw, C * ph * pw)
    x = patches @ p["w_embed"] + p["b_embed"]            # PatchEmbed (conv proj)
    # TODO(synk): PatchEmbed definition not provided; assumed standard conv projection (no norm).
    depth = p["w_qkv"].shape[0]
    inner = heads * dim_head
    scale = dim_head ** -0.5
    Bn, N, _ = x.shape
    for i in range(depth):
        xn = _layernorm(x, p["ln1_g"][i], p["ln1_b"][i])
        qkv = xn @ p["w_qkv"][i]
        q, k, v = jnp.split(qkv, 3, axis=-1)
        q = q.reshape(Bn, N, heads, dim_head).transpose(0, 2, 1, 3)
        k = k.reshape(Bn, N, heads, dim_head).transpose(0, 2, 1, 3)
        v = v.reshape(Bn, N, heads, dim_head).transpose(0, 2, 1, 3)
        s = jnp.einsum("bhid,bhjd->bhij", q, k) * scale
        a = jax.nn.softmax(s, axis=-1)
        o = jnp.einsum("bhij,bhjd->bhid", a, v)
        o = o.transpose(0, 2, 1, 3).reshape(Bn, N, inner)
        x = o @ p["w_out"][i] + p["b_out"][i] + x
        xn = _layernorm(x, p["ln2_g"][i], p["ln2_b"][i])
        h = jax.nn.gelu(xn @ p["w1"][i] + p["b1"][i], approximate=False)
        x = h @ p["w2"][i] + p["b2"][i] + x
    return x


def init_params(key, depth, dim, heads, dim_head, mlp_dim, patch_dim):
    inner = heads * dim_head
    ks = jax.random.split(key, 13)
    return {
        "w_embed": 0.02 * jax.random.normal(ks[11], (patch_dim, dim), jnp.float32),
        "b_embed": 0.05 * jax.random.normal(ks[12], (1, dim), jnp.float32),
        "ln1_g": 1.0 + 0.05 * jax.random.normal(ks[0], (depth, 1, dim), jnp.float32),
        "ln1_b": 0.05 * jax.random.normal(ks[1], (depth, 1, dim), jnp.float32),
        "w_qkv": 0.02 * jax.random.normal(ks[2], (depth, dim, 3 * inner), jnp.float32),
        "w_out": 0.02 * jax.random.normal(ks[3], (depth, inner, dim), jnp.float32),
        "b_out": 0.05 * jax.random.normal(ks[4], (depth, 1, dim), jnp.float32),
        "ln2_g": 1.0 + 0.05 * jax.random.normal(ks[5], (depth, 1, dim), jnp.float32),
        "ln2_b": 0.05 * jax.random.normal(ks[6], (depth, 1, dim), jnp.float32),
        "w1": 0.02 * jax.random.normal(ks[7], (depth, dim, mlp_dim), jnp.float32),
        "b1": 0.05 * jax.random.normal(ks[8], (depth, 1, mlp_dim), jnp.float32),
        "w2": 0.02 * jax.random.normal(ks[9], (depth, mlp_dim, dim), jnp.float32),
        "b2": 0.05 * jax.random.normal(ks[10], (depth, 1, dim), jnp.float32),
    }


if __name__ == "__main__":
    # Small ViT config: image 16x16, patch 4 -> 16 tokens; dim=32, depth=2, heads=4,
    # dim_head=8, mlp_dim=64, batch=2, channels=3.
    B, C, H, W = 2, 3, 16, 16
    patch = 4
    dim, depth, heads, dim_head, mlp_dim = 32, 2, 4, 8, 64
    patch_dim = C * patch * patch

    key = jax.random.PRNGKey(0)
    kx, kp = jax.random.split(key)
    img = jax.random.normal(kx, (B, C, H, W), jnp.float32)
    params = init_params(kp, depth, dim, heads, dim_head, mlp_dim, patch_dim)

    ref = _reference_forward(img, params, patch_size=patch, heads=heads, dim_head=dim_head)
    ref = jax.block_until_ready(ref)

    out, _, _, _ = vit_forward(img, params, patch_size=patch, heads=heads, dim_head=dim_head)
    out = jax.block_until_ready(out)

    N = (H // patch) * (W // patch)
    assert out.shape == (B, N, dim)
    # bf16 MXU inputs + approx softmax reciprocal => loosened tolerance vs fp32 reference.
    err = float(jnp.max(jnp.abs(out - ref)))
    assert jnp.allclose(out, ref, atol=3e-2, rtol=3e-2), f"mismatch vs reference, max abs err {err}"

    print("KERNEL_OK")
</pallas_src>

<mosaic_0001>
module attributes {stable_mosaic.version = 11 : i64} {
  func.func @_vit_kernel(%arg0: i32, %arg1: i32, %arg2: memref<2x16x48xbf16, #tpu.memory_space<vmem>>, %arg3: memref<48x32xbf16, #tpu.memory_space<vmem>>, %arg4: memref<1x32xf32, #tpu.memory_space<vmem>>, %arg5: memref<1x1x32xf32, #tpu.memory_space<vmem>>, %arg6: memref<1x1x32xf32, #tpu.memory_space<vmem>>, %arg7: memref<1x32x96xbf16, #tpu.memory_space<vmem>>, %arg8: memref<1x32x32xbf16, #tpu.memory_space<vmem>>, %arg9: memref<1x1x32xf32, #tpu.memory_space<vmem>>, %arg10: memref<1x1x32xf32, #tpu.memory_space<vmem>>, %arg11: memref<1x1x32xf32, #tpu.memory_space<vmem>>, %arg12: memref<1x32x64xbf16, #tpu.memory_space<vmem>>, %arg13: memref<1x1x64xf32, #tpu.memory_space<vmem>>, %arg14: memref<1x64x32xbf16, #tpu.memory_space<vmem>>, %arg15: memref<1x1x32xf32, #tpu.memory_space<vmem>>, %arg16: memref<2x16x32xf32, #tpu.memory_space<vmem>>) attributes {dimension_semantics = [#tpu.dimension_semantics<parallel>, #tpu.dimension_semantics<arbitrary>], iteration_bounds = array<i64: 1, 2>, scalar_prefetch = 0 : i64, scratch_operands = 0 : i64, tpu.core_type = #tpu.core_type<tc>, window_params = [{transform_indices = @transform_0, window_bounds = array<i64: 2, 16, 48>}, {pipeline_mode = #tpu.pipeline_mode<synchronous>, transform_indices = @transform_1, window_bounds = array<i64: 48, 32>}, {pipeline_mode = #tpu.pipeline_mode<synchronous>, transform_indices = @transform_2, window_bounds = array<i64: 1, 32>}, {transform_indices = @transform_3, window_bounds = array<i64: 1, 1, 32>}, {transform_indices = @transform_4, window_bounds = array<i64: 1, 1, 32>}, {transform_indices = @transform_5, window_bounds = array<i64: 1, 32, 96>}, {transform_indices = @transform_6, window_bounds = array<i64: 1, 32, 32>}, {transform_indices = @transform_7, window_bounds = array<i64: 1, 1, 32>}, {transform_indices = @transform_8, window_bounds = array<i64: 1, 1, 32>}, {transform_indices = @transform_9, window_bounds = array<i64: 1, 1, 32>}, {transform_indices = @transform_10, window_bounds = array<i64: 1, 32, 64>}, {transform_indices = @transform_11, window_bounds = array<i64: 1, 1, 64>}, {transform_indices = @transform_12, window_bounds = array<i64: 1, 64, 32>}, {transform_indices = @transform_13, window_bounds = array<i64: 1, 1, 32>}, {transform_indices = @transform_14, window_bounds = array<i64: 2, 16, 32>}]} {
    %c0_i32 = arith.constant 0 : i32
    %0 = arith.cmpi eq, %arg1, %c0_i32 : i32
    %1 = arith.extui %0 : i1 to i32
    %c0_i32_0 = arith.constant 0 : i32
    %2 = arith.cmpi ne, %1, %c0_i32_0 : i32
    scf.if %2 {
      %c0_88 = arith.constant 0 : index
      %c0_89 = arith.constant 0 : index
      %c0_90 = arith.constant 0 : index
      %232 = vector.load %arg2[%c0_88, %c0_89, %c0_90] : memref<2x16x48xbf16, #tpu.memory_space<vmem>>, vector<2x16x48xbf16>
      %233 = vector.shape_cast %232 : vector<2x16x48xbf16> to vector<32x48xbf16>
      %c0_91 = arith.constant 0 : index
      %c0_92 = arith.constant 0 : index
      %234 = vector.load %arg3[%c0_91, %c0_92] : memref<48x32xbf16, #tpu.memory_space<vmem>>, vector<48x32xbf16>
      %cst_93 = arith.constant dense<0.000000e+00> : vector<32x32xf32>
      %235 = tpu.matmul %233, %234, %cst_93 {dimension_numbers = #tpu.dot_dimension_numbers<[1], [0], [0], [1], [0, 0, 1, 1], [], []>} : vector<32x48xbf16>, vector<48x32xbf16>, vector<32x32xf32> -> vector<32x32xf32>
      %c0_94 = arith.constant 0 : index
      %c0_95 = arith.constant 0 : index
      %236 = vector.load %arg4[%c0_94, %c0_95] : memref<1x32xf32, #tpu.memory_space<vmem>>, vector<1x32xf32>
      %237 = vector.broadcast %236 : vector<1x32xf32> to vector<32x32xf32>
      %238 = arith.addf %235, %237 : vector<32x32xf32>
      %239 = vector.shape_cast %238 : vector<32x32xf32> to vector<2x16x32xf32>
      %c0_96 = arith.constant 0 : index
      %c0_97 = arith.constant 0 : index
      %c0_98 = arith.constant 0 : index
      %240 = vector.load %arg16[%c0_96, %c0_97, %c0_98] : memref<2x16x32xf32, #tpu.memory_space<vmem>>, vector<2x16x32xf32>
      tpu.vector_store %arg16[%c0_96, %c0_97, %c0_98], %239 {strides = array<i32>} : memref<2x16x32xf32, #tpu.memory_space<vmem>>, vector<2x16x32xf32>,
    } else {
    }
    %c0 = arith.constant 0 : index
    %c0_1 = arith.constant 0 : index
    %c0_2 = arith.constant 0 : index
    %3 = vector.load %arg16[%c0, %c0_1, %c0_2] : memref<2x16x32xf32, #tpu.memory_space<vmem>>, vector<2x16x32xf32>
    %4 = vector.shape_cast %3 : vector<2x16x32xf32> to vector<32x32xf32>
    %c0_3 = arith.constant 0 : index
    %c0_4 = arith.constant 0 : index
    %c0_5 = arith.constant 0 : index
    %5 = vector.load %arg5[%c0_3, %c0_4, %c0_5] : memref<1x1x32xf32, #tpu.memory_space<vmem>>, vector<1x1x32xf32>
    %6 = vector.shape_cast %5 : vector<1x1x32xf32> to vector<1x32xf32>
    %c0_6 = arith.constant 0 : index
    %c0_7 = arith.constant 0 : index
    %c0_8 = arith.constant 0 : index
    %7 = vector.load %arg6[%c0_6, %c0_7, %c0_8] : memref<1x1x32xf32, #tpu.memory_space<vmem>>, vector<1x1x32xf32>
    %8 = vector.shape_cast %7 : vector<1x1x32xf32> to vector<1x32xf32>
    %cst = arith.constant dense<0.000000e+00> : vector<32xf32>
    %9 = vector.multi_reduction <add>, %4, %cst [1] : vector<32x32xf32> to vector<32xf32>
    %10 = vector.shape_cast %9 : vector<32xf32> to vector<32x1xf32>
    %cst_9 = arith.constant 3.200000e+01 : f32
    %11 = vector.broadcast %cst_9 : f32 to vector<32x1xf32>
    %12 = arith.divf %10, %11 : vector<32x1xf32>
    %13 = vector.broadcast %12 : vector<32x1xf32> to vector<32x32xf32>
    %14 = arith.subf %4, %13 : vector<32x32xf32>
    %15 = arith.mulf %14, %14 : vector<32x32xf32>
    %cst_10 = arith.constant dense<0.000000e+00> : vector<32xf32>
    %16 = vector.multi_reduction <add>, %15, %cst_10 [1] : vector<32x32xf32> to vector<32xf32>
    %17 = vector.shape_cast %16 : vector<32xf32> to vector<32x1xf32>
    %cst_11 = arith.constant 3.200000e+01 : f32
    %18 = vector.broadcast %cst_11 : f32 to vector<32x1xf32>
    %19 = arith.divf %17, %18 : vector<32x1xf32>
    %20 = vector.broadcast %12 : vector<32x1xf32> to vector<32x32xf32>
    %21 = arith.subf %4, %20 : vector<32x32xf32>
    %cst_12 = arith.constant 9.99999974E-6 : f32
    %22 = vector.broadcast %cst_12 : f32 to vector<32x1xf32>
    %23 = arith.addf %19, %22 : vector<32x1xf32>
    %24 = math.rsqrt %23 : vector<32x1xf32>
    %25 = vector.broadcast %24 : vector<32x1xf32> to vector<32x32xf32>
    %26 = arith.mulf %21, %25 : vector<32x32xf32>
    %27 = vector.broadcast %6 : vector<1x32xf32> to vector<32x32xf32>
    %28 = arith.mulf %26, %27 : vector<32x32xf32>
    %29 = vector.broadcast %8 : vector<1x32xf32> to vector<32x32xf32>
    %30 = arith.addf %28, %29 : vector<32x32xf32>
    %31 = arith.truncf %30 : vector<32x32xf32> to vector<32x32xbf16>
    %c0_13 = arith.constant 0 : index
    %c0_14 = arith.constant 0 : index
    %c0_15 = arith.constant 0 : index
    %32 = vector.load %arg7[%c0_13, %c0_14, %c0_15] : memref<1x32x96xbf16, #tpu.memory_space<vmem>>, vector<1x32x96xbf16>
    %33 = vector.shape_cast %32 : vector<1x32x96xbf16> to vector<32x96xbf16>
    %cst_16 = arith.constant dense<0.000000e+00> : vector<32x96xf32>
    %34 = tpu.matmul %31, %33, %cst_16 {dimension_numbers = #tpu.dot_dimension_numbers<[1], [0], [0], [1], [0, 0, 1, 1], [], []>} : vector<32x32xbf16>, vector<32x96xbf16>, vector<32x96xf32> -> vector<32x96xf32>
    %35 = vector.extract_strided_slice %34 {offsets = [0, 0], sizes = [32, 32], strides = [1, 1]} : vector<32x96xf32> to vector<32x32xf32>
    %cst_17 = arith.constant 0.353553385 : f32
    %36 = vector.broadcast %cst_17 : f32 to vector<32x32xf32>
    %37 = arith.mulf %35, %36 : vector<32x32xf32>
    %38 = vector.shape_cast %37 : vector<32x32xf32> to vector<2x16x32xf32>
    %39 = vector.extract_strided_slice %34 {offsets = [0, 32], sizes = [32, 32], strides = [1, 1]} : vector<32x96xf32> to vector<32x32xf32>
    %40 = vector.shape_cast %39 : vector<32x32xf32> to vector<2x16x32xf32>
    %41 = vector.extract_strided_slice %34 {offsets = [0, 64], sizes = [32, 32], strides = [1, 1]} : vector<32x96xf32> to vector<32x32xf32>
    %42 = vector.shape_cast %41 : vector<32x32xf32> to vector<2x16x32xf32>
    %c0_18 = arith.constant 0 : index
    %c0_19 = arith.constant 0 : index
    %c0_20 = arith.constant 0 : index
    %43 = vector.load %arg8[%c0_18, %c0_19, %c0_20] : memref<1x32x32xbf16, #tpu.memory_space<vmem>>, vector<1x32x32xbf16>
    %44 = vector.shape_cast %43 : vector<1x32x32xbf16> to vector<32x32xbf16>
    %cst_21 = arith.constant 0.000000e+00 : f32
    %45 = vector.broadcast %cst_21 : f32 to vector<32x32xf32>
    %46 = vector.extract_strided_slice %38 {offsets = [0, 0, 0], sizes = [2, 16, 8], strides = [1, 1, 1]} : vector<2x16x32xf32> to vector<2x16x8xf32>
    %47 = arith.truncf %46 : vector<2x16x8xf32> to vector<2x16x8xbf16>
    %48 = vector.extract_strided_slice %40 {offsets = [0, 0, 0], sizes = [2, 16, 8], strides = [1, 1, 1]} : vector<2x16x32xf32> to vector<2x16x8xf32>
    %49 = arith.truncf %48 : vector<2x16x8xf32> to vector<2x16x8xbf16>
    %50 = vector.extract_strided_slice %42 {offsets = [0, 0, 0], sizes = [2, 16, 8], strides = [1, 1, 1]} : vector<2x16x32xf32> to vector<2x16x8xf32>
    %51 = arith.truncf %50 : vector<2x16x8xf32> to vector<2x16x8xbf16>
    "tpu.trace_start"() <{level = 10 : i32, message = "bqd,bkd->bqk"}> : () -> ()
    %cst_22 = arith.constant dense<0.000000e+00> : vector<2x16x16xf32>
    %52 = tpu.matmul %47, %49, %cst_22 {dimension_numbers = #tpu.dot_dimension_numbers<[2], [2], [1], [1], [0, 0, 0, 1, 1, 1], [0], [0]>} : vector<2x16x8xbf16>, vector<2x16x8xbf16>, vector<2x16x16xf32> -> vector<2x16x16xf32>
    "tpu.trace_stop"() : () -> ()
    %cst_23 = arith.constant dense<0xFF800000> : vector<2x16xf32>
    %53 = vector.multi_reduction <maximumf>, %52, %cst_23 [2] : vector<2x16x16xf32> to vector<2x16xf32>
    %54 = vector.shape_cast %53 : vector<2x16xf32> to vector<2x16x1xf32>
    %55 = vector.broadcast %54 : vector<2x16x1xf32> to vector<2x16x16xf32>
    %56 = arith.subf %52, %55 : vector<2x16x16xf32>
    %57 = math.exp %56 : vector<2x16x16xf32>
    %cst_24 = arith.constant dense<0.000000e+00> : vector<2x16xf32>
    %58 = vector.multi_reduction <add>, %57, %cst_24 [2] : vector<2x16x16xf32> to vector<2x16xf32>
    %59 = vector.shape_cast %58 : vector<2x16xf32> to vector<2x16x1xf32>
    %60 = tpu.reciprocal %59 {approx = true} : vector<2x16x1xf32> -> vector<2x16x1xf32>
    %61 = vector.broadcast %60 : vector<2x16x1xf32> to vector<2x16x16xf32>
    %62 = arith.mulf %57, %61 : vector<2x16x16xf32>
    %63 = arith.truncf %62 : vector<2x16x16xf32> to vector<2x16x16xbf16>
    "tpu.trace_start"() <{level = 10 : i32, message = "bqk,bkd->bqd"}> : () -> ()
    %cst_25 = arith.constant dense<0.000000e+00> : vector<2x16x8xf32>
    %64 = tpu.matmul %63, %51, %cst_25 {dimension_numbers = #tpu.dot_dimension_numbers<[2], [1], [1], [2], [0, 0, 0, 1, 1, 2], [0], [0]>} : vector<2x16x16xbf16>, vector<2x16x8xbf16>, vector<2x16x8xf32> -> vector<2x16x8xf32>
    "tpu.trace_stop"() : () -> ()
    %65 = vector.shape_cast %64 : vector<2x16x8xf32> to vector<32x8xf32>
    %66 = arith.truncf %65 : vector<32x8xf32> to vector<32x8xbf16>
    %67 = vector.extract_strided_slice %44 {offsets = [0, 0], sizes = [8, 32], strides = [1, 1]} : vector<32x32xbf16> to vector<8x32xbf16>
    %cst_26 = arith.constant dense<0.000000e+00> : vector<32x32xf32>
    %68 = tpu.matmul %66, %67, %cst_26 {dimension_numbers = #tpu.dot_dimension_numbers<[1], [0], [0], [1], [0, 0, 1, 1], [], []>} : vector<32x8xbf16>, vector<8x32xbf16>, vector<32x32xf32> -> vector<32x32xf32>
    %69 = arith.addf %45, %68 : vector<32x32xf32>
    %70 = vector.extract_strided_slice %38 {offsets = [0, 0, 8], sizes = [2, 16, 8], strides = [1, 1, 1]} : vector<2x16x32xf32> to vector<2x16x8xf32>
    %71 = arith.truncf %70 : vector<2x16x8xf32> to vector<2x16x8xbf16>
    %72 = vector.extract_strided_slice %40 {offsets = [0, 0, 8], sizes = [2, 16, 8], strides = [1, 1, 1]} : vector<2x16x32xf32> to vector<2x16x8xf32>
    %73 = arith.truncf %72 : vector<2x16x8xf32> to vector<2x16x8xbf16>
    %74 = vector.extract_strided_slice %42 {offsets = [0, 0, 8], sizes = [2, 16, 8], strides = [1, 1, 1]} : vector<2x16x32xf32> to vector<2x16x8xf32>
    %75 = arith.truncf %74 : vector<2x16x8xf32> to vector<2x16x8xbf16>
    "tpu.trace_start"() <{level = 10 : i32, message = "bqd,bkd->bqk"}> : () -> ()
    %cst_27 = arith.constant dense<0.000000e+00> : vector<2x16x16xf32>
    %76 = tpu.matmul %71, %73, %cst_27 {dimension_numbers = #tpu.dot_dimension_numbers<[2], [2], [1], [1], [0, 0, 0, 1, 1, 1], [0], [0]>} : vector<2x16x8xbf16>, vector<2x16x8xbf16>, vector<2x16x16xf32> -> vector<2x16x16xf32>
    "tpu.trace_stop"() : () -> ()
    %cst_28 = arith.constant dense<0xFF800000> : vector<2x16xf32>
    %77 = vector.multi_reduction <maximumf>, %76, %cst_28 [2] : vector<2x16x16xf32> to vector<2x16xf32>
    %78 = vector.shape_cast %77 : vector<2x16xf32> to vector<2x16x1xf32>
    %79 = vector.broadcast %78 : vector<2x16x1xf32> to vector<2x16x16xf32>
    %80 = arith.subf %76, %79 : vector<2x16x16xf32>
    %81 = math.exp %80 : vector<2x16x16xf32>
    %cst_29 = arith.constant dense<0.000000e+00> : vector<2x16xf32>
    %82 = vector.multi_reduction <add>, %81, %cst_29 [2] : vector<2x16x16xf32> to vector<2x16xf32>
    %83 = vector.shape_cast %82 : vector<2x16xf32> to vector<2x16x1xf32>
    %84 = tpu.reciprocal %83 {approx = true} : vector<2x16x1xf32> -> vector<2x16x1xf32>
    %85 = vector.broadcast %84 : vector<2x16x1xf32> to vector<2x16x16xf32>
    %86 = arith.mulf %81, %85 : vector<2x16x16xf32>
    %87 = arith.truncf %86 : vector<2x16x16xf32> to vector<2x16x16xbf16>
    "tpu.trace_start"() <{level = 10 : i32, message = "bqk,bkd->bqd"}> : () -> ()
    %cst_30 = arith.constant dense<0.000000e+00> : vector<2x16x8xf32>
    %88 = tpu.matmul %87, %75, %cst_30 {dimension_numbers = #tpu.dot_dimension_numbers<[2], [1], [1], [2], [0, 0, 0, 1, 1, 2], [0], [0]>} : vector<2x16x16xbf16>, vector<2x16x8xbf16>, vector<2x16x8xf32> -> vector<2x16x8xf32>
    "tpu.trace_stop"() : () -> ()
    %89 = vector.shape_cast %88 : vector<2x16x8xf32> to vector<32x8xf32>
    %90 = arith.truncf %89 : vector<32x8xf32> to vector<32x8xbf16>
    %91 = vector.extract_strided_slice %44 {offsets = [8, 0], sizes = [8, 32], strides = [1, 1]} : vector<32x32xbf16> to vector<8x32xbf16>
    %cst_31 = arith.constant dense<0.000000e+00> : vector<32x32xf32>
    %92 = tpu.matmul %90, %91, %cst_31 {dimension_numbers = #tpu.dot_dimension_numbers<[1], [0], [0], [1], [0, 0, 1, 1], [], []>} : vector<32x8xbf16>, vector<8x32xbf16>, vector<32x32xf32> -> vector<32x32xf32>
    %93 = arith.addf %69, %92 : vector<32x32xf32>
    %94 = vector.extract_strided_slice %38 {offsets = [0, 0, 16], sizes = [2, 16, 8], strides = [1, 1, 1]} : vector<2x16x32xf32> to vector<2x16x8xf32>
    %95 = arith.truncf %94 : vector<2x16x8xf32> to vector<2x16x8xbf16>
    %96 = vector.extract_strided_slice %40 {offsets = [0, 0, 16], sizes = [2, 16, 8], strides = [1, 1, 1]} : vector<2x16x32xf32> to vector<2x16x8xf32>
    %97 = arith.truncf %96 : vector<2x16x8xf32> to vector<2x16x8xbf16>
    %98 = vector.extract_strided_slice %42 {offsets = [0, 0, 16], sizes = [2, 16, 8], strides = [1, 1, 1]} : vector<2x16x32xf32> to vector<2x16x8xf32>
    %99 = arith.truncf %98 : vector<2x16x8xf32> to vector<2x16x8xbf16>
    "tpu.trace_start"() <{level = 10 : i32, message = "bqd,bkd->bqk"}> : () -> ()
    %cst_32 = arith.constant dense<0.000000e+00> : vector<2x16x16xf32>
    %100 = tpu.matmul %95, %97, %cst_32 {dimension_numbers = #tpu.dot_dimension_numbers<[2], [2], [1], [1], [0, 0, 0, 1, 1, 1], [0], [0]>} : vector<2x16x8xbf16>, vector<2x16x8xbf16>, vector<2x16x16xf32> -> vector<2x16x16xf32>
    "tpu.trace_stop"() : () -> ()
    %cst_33 = arith.constant dense<0xFF800000> : vector<2x16xf32>
    %101 = vector.multi_reduction <maximumf>, %100, %cst_33 [2] : vector<2x16x16xf32> to vector<2x16xf32>
    %102 = vector.shape_cast %101 : vector<2x16xf32> to vector<2x16x1xf32>
    %103 = vector.broadcast %102 : vector<2x16x1xf32> to vector<2x16x16xf32>
    %104 = arith.subf %100, %103 : vector<2x16x16xf32>
    %105 = math.exp %104 : vector<2x16x16xf32>
    %cst_34 = arith.constant dense<0.000000e+00> : vector<2x16xf32>
    %106 = vector.multi_reduction <add>, %105, %cst_34 [2] : vector<2x16x16xf32> to vector<2x16xf32>
    %107 = vector.shape_cast %106 : vector<2x16xf32> to vector<2x16x1xf32>
    %108 = tpu.reciprocal %107 {approx = true} : vector<2x16x1xf32> -> vector<2x16x1xf32>
    %109 = vector.broadcast %108 : vector<2x16x1xf32> to vector<2x16x16xf32>
    %110 = arith.mulf %105, %109 : vector<2x16x16xf32>
    %111 = arith.truncf %110 : vector<2x16x16xf32> to vector<2x16x16xbf16>
    "tpu.trace_start"() <{level = 10 : i32, message = "bqk,bkd->bqd"}> : () -> ()
    %cst_35 = arith.constant dense<0.000000e+00> : vector<2x16x8xf32>
    %112 = tpu.matmul %111, %99, %cst_35 {dimension_numbers = #tpu.dot_dimension_numbers<[2], [1], [1], [2], [0, 0, 0, 1, 1, 2], [0], [0]>} : vector<2x16x16xbf16>, vector<2x16x8xbf16>, vector<2x16x8xf32> -> vector<2x16x8xf32>
    "tpu.trace_stop"() : () -> ()
    %113 = vector.shape_cast %112 : vector<2x16x8xf32> to vector<32x8xf32>
    %114 = arith.truncf %113 : vector<32x8xf32> to vector<32x8xbf16>
    %115 = vector.extract_strided_slice %44 {offsets = [16, 0], sizes = [8, 32], strides = [1, 1]} : vector<32x32xbf16> to vector<8x32xbf16>
    %cst_36 = arith.constant dense<0.000000e+00> : vector<32x32xf32>
    %116 = tpu.matmul %114, %115, %cst_36 {dimension_numbers = #tpu.dot_dimension_numbers<[1], [0], [0], [1], [0, 0, 1, 1], [], []>} : vector<32x8xbf16>, vector<8x32xbf16>, vector<32x32xf32> -> vector<32x32xf32>
    %117 = arith.addf %93, %116 : vector<32x32xf32>
    %118 = vector.extract_strided_slice %38 {offsets = [0, 0, 24], sizes = [2, 16, 8], strides = [1, 1, 1]} : vector<2x16x32xf32> to vector<2x16x8xf32>
    %119 = arith.truncf %118 : vector<2x16x8xf32> to vector<2x16x8xbf16>
    %120 = vector.extract_strided_slice %40 {offsets = [0, 0, 24], sizes = [2, 16, 8], strides = [1, 1, 1]} : vector<2x16x32xf32> to vector<2x16x8xf32>
    %121 = arith.truncf %120 : vector<2x16x8xf32> to vector<2x16x8xbf16>
    %122 = vector.extract_strided_slice %42 {offsets = [0, 0, 24], sizes = [2, 16, 8], strides = [1, 1, 1]} : vector<2x16x32xf32> to vector<2x16x8xf32>
    %123 = arith.truncf %122 : vector<2x16x8xf32> to vector<2x16x8xbf16>
    "tpu.trace_start"() <{level = 10 : i32, message = "bqd,bkd->bqk"}> : () -> ()
    %cst_37 = arith.constant dense<0.000000e+00> : vector<2x16x16xf32>
    %124 = tpu.matmul %119, %121, %cst_37 {dimension_numbers = #tpu.dot_dimension_numbers<[2], [2], [1], [1], [0, 0, 0, 1, 1, 1], [0], [0]>} : vector<2x16x8xbf16>, vector<2x16x8xbf16>, vector<2x16x16xf32> -> vector<2x16x16xf32>
    "tpu.trace_stop"() : () -> ()
    %cst_38 = arith.constant dense<0xFF800000> : vector<2x16xf32>
    %125 = vector.multi_reduction <maximumf>, %124, %cst_38 [2] : vector<2x16x16xf32> to vector<2x16xf32>
    %126 = vector.shape_cast %125 : vector<2x16xf32> to vector<2x16x1xf32>
    %127 = vector.broadcast %126 : vector<2x16x1xf32> to vector<2x16x16xf32>
    %128 = arith.subf %124, %127 : vector<2x16x16xf32>
    %129 = math.exp %128 : vector<2x16x16xf32>
    %cst_39 = arith.constant dense<0.000000e+00> : vector<2x16xf32>
    %130 = vector.multi_reduction <add>, %129, %cst_39 [2] : vector<2x16x16xf32> to vector<2x16xf32>
    %131 = vector.shape_cast %130 : vector<2x16xf32> to vector<2x16x1xf32>
    %132 = tpu.reciprocal %131 {approx = true} : vector<2x16x1xf32> -> vector<2x16x1xf32>
    %133 = vector.broadcast %132 : vector<2x16x1xf32> to vector<2x16x16xf32>
    %134 = arith.mulf %129, %133 : vector<2x16x16xf32>
    %135 = arith.truncf %134 : vector<2x16x16xf32> to vector<2x16x16xbf16>
    "tpu.trace_start"() <{level = 10 : i32, message = "bqk,bkd->bqd"}> : () -> ()
    %cst_40 = arith.constant dense<0.000000e+00> : vector<2x16x8xf32>
    %136 = tpu.matmul %135, %123, %cst_40 {dimension_numbers = #tpu.dot_dimension_numbers<[2], [1], [1], [2], [0, 0, 0, 1, 1, 2], [0], [0]>} : vector<2x16x16xbf16>, vector<2x16x8xbf16>, vector<2x16x8xf32> -> vector<2x16x8xf32>
    "tpu.trace_stop"() : () -> ()
    %137 = vector.shape_cast %136 : vector<2x16x8xf32> to vector<32x8xf32>
    %138 = arith.truncf %137 : vector<32x8xf32> to vector<32x8xbf16>
    %139 = vector.extract_strided_slice %44 {offsets = [24, 0], sizes = [8, 32], strides = [1, 1]} : vector<32x32xbf16> to vector<8x32xbf16>
    %cst_41 = arith.constant dense<0.000000e+00> : vector<32x32xf32>
    %140 = tpu.matmul %138, %139, %cst_41 {dimension_numbers = #tpu.dot_dimension_numbers<[1], [0], [0], [1], [0, 0, 1, 1], [], []>} : vector<32x8xbf16>, vector<8x32xbf16>, vector<32x32xf32> -> vector<32x32xf32>
    %141 = arith.addf %117, %140 : vector<32x32xf32>
    %142 = arith.addf %4, %141 : vector<32x32xf32>
    %c0_42 = arith.constant 0 : index
    %c0_43 = arith.constant 0 : index
    %c0_44 = arith.constant 0 : index
    %143 = vector.load %arg9[%c0_42, %c0_43, %c0_44] : memref<1x1x32xf32, #tpu.memory_space<vmem>>, vector<1x1x32xf32>
    %144 = vector.shape_cast %143 : vector<1x1x32xf32> to vector<1x32xf32>
    %145 = vector.broadcast %144 : vector<1x32xf32> to vector<32x32xf32>
    %146 = arith.addf %142, %145 : vector<32x32xf32>
    %c0_45 = arith.constant 0 : index
    %c0_46 = arith.constant 0 : index
    %c0_47 = arith.constant 0 : index
    %147 = vector.load %arg10[%c0_45, %c0_46, %c0_47] : memref<1x1x32xf32, #tpu.memory_space<vmem>>, vector<1x1x32xf32>
    %148 = vector.shape_cast %147 : vector<1x1x32xf32> to vector<1x32xf32>
    %c0_48 = arith.constant 0 : index
    %c0_49 = arith.constant 0 : index
    %c0_50 = arith.constant 0 : index
    %149 = vector.load %arg11[%c0_48, %c0_49, %c0_50] : memref<1x1x32xf32, #tpu.memory_space<vmem>>, vector<1x1x32xf32>
    %150 = vector.shape_cast %149 : vector<1x1x32xf32> to vector<1x32xf32>
    %cst_51 = arith.constant dense<0.000000e+00> : vector<32xf32>
    %151 = vector.multi_reduction <add>, %146, %cst_51 [1] : vector<32x32xf32> to vector<32xf32>
    %152 = vector.shape_cast %151 : vector<32xf32> to vector<32x1xf32>
    %cst_52 = arith.constant 3.200000e+01 : f32
    %153 = vector.broadcast %cst_52 : f32 to vector<32x1xf32>
    %154 = arith.divf %152, %153 : vector<32x1xf32>
    %155 = vector.broadcast %154 : vector<32x1xf32> to vector<32x32xf32>
    %156 = arith.subf %146, %155 : vector<32x32xf32>
    %157 = arith.mulf %156, %156 : vector<32x32xf32>
    %cst_53 = arith.constant dense<0.000000e+00> : vector<32xf32>
    %158 = vector.multi_reduction <add>, %157, %cst_53 [1] : vector<32x32xf32> to vector<32xf32>
    %159 = vector.shape_cast %158 : vector<32xf32> to vector<32x1xf32>
    %cst_54 = arith.constant 3.200000e+01 : f32
    %160 = vector.broadcast %cst_54 : f32 to vector<32x1xf32>
    %161 = arith.divf %159, %160 : vector<32x1xf32>
    %162 = vector.broadcast %154 : vector<32x1xf32> to vector<32x32xf32>
    %163 = arith.subf %146, %162 : vector<32x32xf32>
    %cst_55 = arith.constant 9.99999974E-6 : f32
    %164 = vector.broadcast %cst_55 : f32 to vector<32x1xf32>
    %165 = arith.addf %161, %164 : vector<32x1xf32>
    %166 = math.rsqrt %165 : vector<32x1xf32>
    %167 = vector.broadcast %166 : vector<32x1xf32> to vector<32x32xf32>
    %168 = arith.mulf %163, %167 : vector<32x32xf32>
    %169 = vector.broadcast %148 : vector<1x32xf32> to vector<32x32xf32>
    %170 = arith.mulf %168, %169 : vector<32x32xf32>
    %171 = vector.broadcast %150 : vector<1x32xf32> to vector<32x32xf32>
    %172 = arith.addf %170, %171 : vector<32x32xf32>
    %173 = arith.truncf %172 : vector<32x32xf32> to vector<32x32xbf16>
    %c0_56 = arith.constant 0 : index
    %c0_57 = arith.constant 0 : index
    %c0_58 = arith.constant 0 : index
    %174 = vector.load %arg12[%c0_56, %c0_57, %c0_58] : memref<1x32x64xbf16, #tpu.memory_space<vmem>>, vector<1x32x64xbf16>
    %175 = vector.shape_cast %174 : vector<1x32x64xbf16> to vector<32x64xbf16>
    %cst_59 = arith.constant dense<0.000000e+00> : vector<32x64xf32>
    %176 = tpu.matmul %173, %175, %cst_59 {dimension_numbers = #tpu.dot_dimension_numbers<[1], [0], [0], [1], [0, 0, 1, 1], [], []>} : vector<32x32xbf16>, vector<32x64xbf16>, vector<32x64xf32> -> vector<32x64xf32>
    %c0_60 = arith.constant 0 : index
    %c0_61 = arith.constant 0 : index
    %c0_62 = arith.constant 0 : index
    %177 = vector.load %arg13[%c0_60, %c0_61, %c0_62] : memref<1x1x64xf32, #tpu.memory_space<vmem>>, vector<1x1x64xf32>
    %178 = vector.shape_cast %177 : vector<1x1x64xf32> to vector<1x64xf32>
    %179 = vector.broadcast %178 : vector<1x64xf32> to vector<32x64xf32>
    %180 = arith.addf %176, %179 : vector<32x64xf32>
    %cst_63 = arith.constant 5.000000e-01 : f32
    %181 = vector.broadcast %cst_63 : f32 to vector<32x64xf32>
    %182 = arith.mulf %181, %180 : vector<32x64xf32>
    %cst_64 = arith.constant 0.707106769 : f32
    %183 = vector.broadcast %cst_64 : f32 to vector<32x64xf32>
    %184 = arith.mulf %180, %183 : vector<32x64xf32>
    %185 = math.absf %184 : vector<32x64xf32>
    %cst_65 = arith.constant 0.327591091 : f32
    %186 = vector.broadcast %cst_65 : f32 to vector<32x64xf32>
    %187 = arith.mulf %186, %185 : vector<32x64xf32>
    %cst_66 = arith.constant 1.000000e+00 : f32
    %188 = vector.broadcast %cst_66 : f32 to vector<32x64xf32>
    %189 = arith.addf %188, %187 : vector<32x64xf32>
    %cst_67 = arith.constant 1.000000e+00 : f32
    %190 = vector.broadcast %cst_67 : f32 to vector<32x64xf32>
    %191 = arith.divf %190, %189 : vector<32x64xf32>
    %cst_68 = arith.constant 1.06140542 : f32
    %192 = vector.broadcast %cst_68 : f32 to vector<32x64xf32>
    %193 = arith.mulf %192, %191 : vector<32x64xf32>
    %cst_69 = arith.constant -1.45315206 : f32
    %194 = vector.broadcast %cst_69 : f32 to vector<32x64xf32>
    %195 = arith.addf %193, %194 : vector<32x64xf32>
    %196 = arith.mulf %195, %191 : vector<32x64xf32>
    %cst_70 = arith.constant 1.42141378 : f32
    %197 = vector.broadcast %cst_70 : f32 to vector<32x64xf32>
    %198 = arith.addf %196, %197 : vector<32x64xf32>
    %199 = arith.mulf %198, %191 : vector<32x64xf32>
    %cst_71 = arith.constant -0.284496725 : f32
    %200 = vector.broadcast %cst_71 : f32 to vector<32x64xf32>
    %201 = arith.addf %199, %200 : vector<32x64xf32>
    %202 = arith.mulf %201, %191 : vector<32x64xf32>
    %cst_72 = arith.constant 0.254829586 : f32
    %203 = vector.broadcast %cst_72 : f32 to vector<32x64xf32>
    %204 = arith.addf %202, %203 : vector<32x64xf32>
    %205 = arith.mulf %204, %191 : vector<32x64xf32>
    %cst_73 = arith.constant 0.000000e+00 : f32
    %206 = vector.broadcast %cst_73 : f32 to vector<32x64xf32>
    %207 = arith.subf %206, %185 : vector<32x64xf32>
    %208 = arith.mulf %207, %185 : vector<32x64xf32>
    %209 = math.exp %208 : vector<32x64xf32>
    %210 = arith.mulf %205, %209 : vector<32x64xf32>
    %cst_74 = arith.constant 1.000000e+00 : f32
    %211 = vector.broadcast %cst_74 : f32 to vector<32x64xf32>
    %212 = arith.subf %211, %210 : vector<32x64xf32>
    %cst_75 = arith.constant 0.000000e+00 : f32
    %213 = vector.broadcast %cst_75 : f32 to vector<32x64xf32>
    %214 = arith.cmpf olt, %184, %213 : vector<32x64xf32>
    %cst_76 = arith.constant 0.000000e+00 : f32
    %215 = vector.broadcast %cst_76 : f32 to vector<32x64xf32>
    %216 = arith.subf %215, %212 : vector<32x64xf32>
    %217 = arith.select %214, %216, %212 : vector<32x64xi1>, vector<32x64xf32>
    %cst_77 = arith.constant 1.000000e+00 : f32
    %218 = vector.broadcast %cst_77 : f32 to vector<32x64xf32>
    %219 = arith.addf %218, %217 : vector<32x64xf32>
    %220 = arith.mulf %182, %219 : vector<32x64xf32>
    %221 = arith.truncf %220 : vector<32x64xf32> to vector<32x64xbf16>
    %c0_78 = arith.constant 0 : index
    %c0_79 = arith.constant 0 : index
    %c0_80 = arith.constant 0 : index
    %222 = vector.load %arg14[%c0_78, %c0_79, %c0_80] : memref<1x64x32xbf16, #tpu.memory_space<vmem>>, vector<1x64x32xbf16>
    %223 = vector.shape_cast %222 : vector<1x64x32xbf16> to vector<64x32xbf16>
    %cst_81 = arith.constant dense<0.000000e+00> : vector<32x32xf32>
    %224 = tpu.matmul %221, %223, %cst_81 {dimension_numbers = #tpu.dot_dimension_numbers<[1], [0], [0], [1], [0, 0, 1, 1], [], []>} : vector<32x64xbf16>, vector<64x32xbf16>, vector<32x32xf32> -> vector<32x32xf32>
    %c0_82 = arith.constant 0 : index
    %c0_83 = arith.constant 0 : index
    %c0_84 = arith.constant 0 : index
    %225 = vector.load %arg15[%c0_82, %c0_83, %c0_84] : memref<1x1x32xf32, #tpu.memory_space<vmem>>, vector<1x1x32xf32>
    %226 = vector.shape_cast %225 : vector<1x1x32xf32> to vector<1x32xf32>
    %227 = vector.broadcast %226 : vector<1x32xf32> to vector<32x32xf32>
    %228 = arith.addf %224, %227 : vector<32x32xf32>
    %229 = arith.addf %146, %228 : vector<32x32xf32>
    %230 = vector.shape_cast %229 : vector<32x32xf32> to vector<2x16x32xf32>
    %c0_85 = arith.constant 0 : index
    %c0_86 = arith.constant 0 : index
    %c0_87 = arith.constant 0 : index
    %231 = vector.load %arg16[%c0_85, %c0_86, %c0_87] : memref<2x16x32xf32, #tpu.memory_space<vmem>>, vector<2x16x32xf32>
    tpu.vector_store %arg16[%c0_85, %c0_86, %c0_87], %230 {strides = array<i32>} : memref<2x16x32xf32, #tpu.memory_space<vmem>>, vector<2x16x32xf32>,
    return
  }
  func.func @transform_0(%arg0: i32, %arg1: i32) -> (i32, i32, i32) {
    %c0_i32 = arith.constant 0 : i32
    %c0_i32_0 = arith.constant 0 : i32
    %c0_i32_1 = arith.constant 0 : i32
    return %arg0, %c0_i32, %c0_i32_0 : i32, i32, i32
  }
  func.func @transform_1(%arg0: i32, %arg1: i32) -> (i32, i32) {
    %c0_i32 = arith.constant 0 : i32
    %c0_i32_0 = arith.constant 0 : i32
    %c0_i32_1 = arith.constant 0 : i32
    return %c0_i32, %c0_i32_0 : i32, i32
  }
  func.func @transform_2(%arg0: i32, %arg1: i32) -> (i32, i32) {
    %c0_i32 = arith.constant 0 : i32
    %c0_i32_0 = arith.constant 0 : i32
    %c0_i32_1 = arith.constant 0 : i32
    return %c0_i32, %c0_i32_0 : i32, i32
  }
  func.func @transform_3(%arg0: i32, %arg1: i32) -> (i32, i32, i32) {
    %c0_i32 = arith.constant 0 : i32
    %c0_i32_0 = arith.constant 0 : i32
    %c0_i32_1 = arith.constant 0 : i32
    return %arg1, %c0_i32, %c0_i32_0 : i32, i32, i32
  }
  func.func @transform_4(%arg0: i32, %arg1: i32) -> (i32, i32, i32) {
    %c0_i32 = arith.constant 0 : i32
    %c0_i32_0 = arith.constant 0 : i32
    %c0_i32_1 = arith.constant 0 : i32
    return %arg1, %c0_i32, %c0_i32_0 : i32, i32, i32
  }
  func.func @transform_5(%arg0: i32, %arg1: i32) -> (i32, i32, i32) {
    %c0_i32 = arith.constant 0 : i32
    %c0_i32_0 = arith.constant 0 : i32
    %c0_i32_1 = arith.constant 0 : i32
    return %arg1, %c0_i32, %c0_i32_0 : i32, i32, i32
  }
  func.func @transform_6(%arg0: i32, %arg1: i32) -> (i32, i32, i32) {
    %c0_i32 = arith.constant 0 : i32
    %c0_i32_0 = arith.constant 0 : i32
    %c0_i32_1 = arith.constant 0 : i32
    return %arg1, %c0_i32, %c0_i32_0 : i32, i32, i32
  }
  func.func @transform_7(%arg0: i32, %arg1: i32) -> (i32, i32, i32) {
    %c0_i32 = arith.constant 0 : i32
    %c0_i32_0 = arith.constant 0 : i32
    %c0_i32_1 = arith.constant 0 : i32
    return %arg1, %c0_i32, %c0_i32_0 : i32, i32, i32
  }
  func.func @transform_8(%arg0: i32, %arg1: i32) -> (i32, i32, i32) {
    %c0_i32 = arith.constant 0 : i32
    %c0_i32_0 = arith.constant 0 : i32
    %c0_i32_1 = arith.constant 0 : i32
    return %arg1, %c0_i32, %c0_i32_0 : i32, i32, i32
  }
  func.func @transform_9(%arg0: i32, %arg1: i32) -> (i32, i32, i32) {
    %c0_i32 = arith.constant 0 : i32
    %c0_i32_0 = arith.constant 0 : i32
    %c0_i32_1 = arith.constant 0 : i32
    return %arg1, %c0_i32, %c0_i32_0 : i32, i32, i32
  }
  func.func @transform_10(%arg0: i32, %arg1: i32) -> (i32, i32, i32) {
    %c0_i32 = arith.constant 0 : i32
    %c0_i32_0 = arith.constant 0 : i32
    %c0_i32_1 = arith.constant 0 : i32
    return %arg1, %c0_i32, %c0_i32_0 : i32, i32, i32
  }
  func.func @transform_11(%arg0: i32, %arg1: i32) -> (i32, i32, i32) {
    %c0_i32 = arith.constant 0 : i32
    %c0_i32_0 = arith.constant 0 : i32
    %c0_i32_1 = arith.constant 0 : i32
    return %arg1, %c0_i32, %c0_i32_0 : i32, i32, i32
  }
  func.func @transform_12(%arg0: i32, %arg1: i32) -> (i32, i32, i32) {
    %c0_i32 = arith.constant 0 : i32
    %c0_i32_0 = arith.constant 0 : i32
    %c0_i32_1 = arith.constant 0 : i32
    return %arg1, %c0_i32, %c0_i32_0 : i32, i32, i32
  }
  func.func @transform_13(%arg0: i32, %arg1: i32) -> (i32, i32, i32) {
    %c0_i32 = arith.constant 0 : i32
    %c0_i32_0 = arith.constant 0 : i32
    %c0_i32_1 = arith.constant 0 : i32
    return %arg1, %c0_i32, %c0_i32_0 : i32, i32, i32
  }
  func.func @transform_14(%arg0: i32, %arg1: i32) -> (i32, i32, i32) {
    %c0_i32 = arith.constant 0 : i32
    %c0_i32_0 = arith.constant 0 : i32
    %c0_i32_1 = arith.constant 0 : i32
    return %arg0, %c0_i32, %c0_i32_0 : i32, i32, i32
  }
}

</mosaic_0001>

<llo_original>
// kernel: tpu_custom_call.1
$region0: #{tpu_custom_call.1}
  #allocation0 [shape = 'u32[]', space=smem, size = 0x4, offset = 0x4, fixed_abs, tag = 'smem constant byte address 0x4 - core index']
  #allocation1 [shape = 'u32[144,128]{1,0:T(1,128)}', space=vmem, size = 0x12000, scoped, tag = 'internal scratch']
  %s0 = inlined_call_operand.vmem [shape: bf16[2,16,48], index: 0, kind: input, shape index: {}]
  %s1 = inlined_call_operand.vmem [shape: bf16[48,32], index: 1, kind: input, shape index: {}]
  %s2 = inlined_call_operand.hbm [shape: f32[1,32], index: 2, kind: input, shape index: {}]
  %s3 = inlined_call_operand.vmem [shape: f32[2,1,32], index: 3, kind: input, shape index: {}]
  %s4 = inlined_call_operand.vmem [shape: f32[2,1,32], index: 4, kind: input, shape index: {}]
  %s5 = inlined_call_operand.vmem [shape: bf16[2,32,96], index: 5, kind: input, shape index: {}]
  %s6 = inlined_call_operand.vmem [shape: bf16[2,32,32], index: 6, kind: input, shape index: {}]
  %s7 = inlined_call_operand.vmem [shape: f32[2,1,32], index: 7, kind: input, shape index: {}]
  %s8 = inlined_call_operand.vmem [shape: f32[2,1,32], index: 8, kind: input, shape index: {}]
  %s9 = inlined_call_operand.vmem [shape: f32[2,1,32], index: 9, kind: input, shape index: {}]
  %s10 = inlined_call_operand.vmem [shape: bf16[2,32,64], index: 10, kind: input, shape index: {}]
  %s11 = inlined_call_operand.vmem [shape: f32[2,1,64], index: 11, kind: input, shape index: {}]
  %s12 = inlined_call_operand.vmem [shape: bf16[2,64,32], index: 12, kind: input, shape index: {}]
  %s13 = inlined_call_operand.vmem [shape: f32[2,1,32], index: 13, kind: input, shape index: {}]
  %s14 = inlined_call_operand.hbm [shape: f32[2,16,32], index: 14, kind: output, shape index: {}]
  %s15 = sld [smem:[#allocation0]]
  $region97: #{tpu_custom_call.1} parent=0
    _
  %s17 = ssub.s32 1, %s15
  %s18 = scalar_select 0, %s17, %s15
  $region1: #{tpu_custom_call.1} parent=0
    #allocation2 [shape = 'u8[512]{0}', space=vmem, size = 0x400, scoped, tag = 'input window, operand 2, single buffered']
    #allocation3 [shape = 's32[2]{0}', space=sflag, size = 0x8, scoped, tag = 'scoped memory for tpu_custom_call.1']
    #allocation4 [shape = 's32[2]{0}', space=sflag, size = 0x8, scoped, tag = 'scoped memory for tpu_custom_call.1']
    #allocation5 [shape = 'u8[16384]{0}', space=vmem, size = 0x4000, scoped, tag = 'output window, operand 0, single buffered']
    %19 = vsyncpa [#allocation3], 0
    %20 = vsyncpa [#allocation4], 0
    loop: start=0, step=1, limit=4
    $region2: #{tpu_custom_call.1} parent=1 // loop_pre_header
      _
    $region3: #{tpu_custom_call.1} parent=1 // loop_header
      %s22 = sphi 0, %s26
      %p23 = scmp.ge.s32.totalorder %s22, 4
      %s29 = sphi 0, %s41
      %s30 = sphi 0, %s37
      %s31 = sphi 0, %s29
      %s32 = sphi 0, %s30
      %s33 = sphi 0, %s31
      %s34 = sphi 0, %s32
      %s44 = sphi 0, %s46
      %s47 = sphi 0, %s44
      %s48 = sphi 0, %s47
      %s64 = sphi 0, %s48
      %s68 = sphi 0, %s68
      %s70 = sphi 0, %s68
      %s71 = sphi 0, %s70
      %s85 = sphi 0, %s71
      %s89 = sphi 0, %s89
      %s91 = sphi 0, %s89
      %s92 = sphi 0, %s91
      %s106 = sphi 0, %s92
      %s112 = sphi 0, %s114
      %s115 = sphi 0, %s112
      %s116 = sphi 0, %s115
      %s132 = sphi 0, %s116
      %s138 = sphi 0, %s140
      %s141 = sphi 0, %s138
      %s142 = sphi 0, %s141
      %s158 = sphi 0, %s142
      %s164 = sphi 0, %s166
      %s167 = sphi 0, %s164
      %s168 = sphi 0, %s167
      %s184 = sphi 0, %s168
      %s190 = sphi 0, %s192
      %s193 = sphi 0, %s190
      %s194 = sphi 0, %s193
      %s210 = sphi 0, %s194
      %s216 = sphi 0, %s218
      %s219 = sphi 0, %s216
      %s220 = sphi 0, %s219
      %s236 = sphi 0, %s220
      %s242 = sphi 0, %s244
      %s245 = sphi 0, %s242
      %s246 = sphi 0, %s245
      %s262 = sphi 0, %s246
      %s268 = sphi 0, %s270
      %s271 = sphi 0, %s268
      %s272 = sphi 0, %s271
      %s288 = sphi 0, %s272
      %s294 = sphi 0, %s296
      %s297 = sphi 0, %s294
      %s298 = sphi 0, %s297
      %s314 = sphi 0, %s298
      %s320 = sphi 0, %s322
      %s323 = sphi 0, %s320
      %s324 = sphi 0, %s323
      %s340 = sphi 0, %s324
      %s346 = sphi 0, %s348
      %s349 = sphi 0, %s346
      %s350 = sphi 0, %s349
      %s366 = sphi 0, %s350
      %s372 = sphi 0, %s374
      %s375 = sphi 0, %s372
      %s376 = sphi 0, %s375
      %s392 = sphi 0, %s376
      %s398 = sphi 0, %s400
      %s401 = sphi 0, %s398
      %s402 = sphi 0, %s401
      %s418 = sphi 0, %s402
    $region4: #{tpu_custom_call.1} parent=1 // loop_header_branch
      %25 = sbr.rel (%p23) target = $region8
    $region5: #{tpu_custom_call.1} parent=1 // loop_body
      %s27 = ssub.s32 %s22, 1
      %s28 = ssub.s32 %s22, 2
      %s35 = sadd.s32 1, %s30
      %p36 = scmp.ge.s32.totalorder %s35, 2
      %s37 = scalar_select %p36, 0, %s35
      %s38 = sadd.s32 1, %s29
      %s39 = scalar_select %p36, %s38, %s29
      %p40 = scmp.ge.s32.totalorder %s39, 1
      %s41 = scalar_select %p40, 0, %s39
      %s42 = ssub.s32 %s29, %s41
      %p43 = scmp.eq.s32.totalorder %s42, 0
      %s45 = sadd.s32 %s44, 1
      %s46 = scalar_select %p43, %s44, %s45
      %p49 = pneg %p43
      %p50 = scmp.eq.s32.totalorder %s22, 1
      %p51 = por %p49, %p50
      %p52 = scmp.ne.s32.totalorder %s44, %s47
      %p53 = scmp.eq.s32.totalorder %s22, 0
      %p54 = por %p52, %p53
      %p55 = scmp.ne.s32.totalorder %s44, %s47
      %p56 = scmp.eq.s32.totalorder %s27, 1
      %p57 = por %p55, %p56
      %p58 = scmp.ne.s32.totalorder %s47, %s48
      %p59 = scmp.eq.s32.totalorder %s27, 0
      %p60 = por %p58, %p59
      %p61 = scmp.ne.s32.totalorder %s47, %s48
      %p62 = scmp.eq.s32.totalorder %s28, 1
      %p63 = por %p61, %p62
      %p65 = scmp.ne.s32.totalorder %s48, %s64
      %p66 = scmp.eq.s32.totalorder %s28, 0
      %p67 = por %p65, %p66
      %s69 = sadd.s32 %s68, 1
      %p72 = scmp.eq.s32.totalorder %s22, 1
      %p73 = scmp.ne.s32.totalorder %s68, %s70
      %p74 = scmp.eq.s32.totalorder %s22, 0
      %p75 = por %p73, %p74
      %p76 = scmp.ne.s32.totalorder %s68, %s70
      %p77 = scmp.eq.s32.totalorder %s27, 1
      %p78 = por %p76, %p77
      %p79 = scmp.ne.s32.totalorder %s70, %s71
      %p80 = scmp.eq.s32.totalorder %s27, 0
      %p81 = por %p79, %p80
      %p82 = scmp.ne.s32.totalorder %s70, %s71
      %p83 = scmp.eq.s32.totalorder %s28, 1
      %p84 = por %p82, %p83
      %p86 = scmp.ne.s32.totalorder %s71, %s85
      %p87 = scmp.eq.s32.totalorder %s28, 0
      %p88 = por %p86, %p87
      %s90 = sadd.s32 %s89, 1
      %p93 = scmp.eq.s32.totalorder %s22, 1
      %p94 = scmp.ne.s32.totalorder %s89, %s91
      %p95 = scmp.eq.s32.totalorder %s22, 0
      %p96 = por %p94, %p95
      %p97 = scmp.ne.s32.totalorder %s89, %s91
      %p98 = scmp.eq.s32.totalorder %s27, 1
      %p99 = por %p97, %p98
      %p100 = scmp.ne.s32.totalorder %s91, %s92
      %p101 = scmp.eq.s32.totalorder %s27, 0
      %p102 = por %p100, %p101
      %p103 = scmp.ne.s32.totalorder %s91, %s92
      %p104 = scmp.eq.s32.totalorder %s28, 1
      %p105 = por %p103, %p104
      %p107 = scmp.ne.s32.totalorder %s92, %s106
      %p108 = scmp.eq.s32.totalorder %s28, 0
      %p109 = por %p107, %p108
      %s110 = ssub.s32 %s30, %s37
      %p111 = scmp.eq.s32.totalorder %s110, 0
      %s113 = sadd.s32 %s112, 1
      %s114 = scalar_select %p111, %s112, %s113
      %p117 = pneg %p111
      %p118 = scmp.eq.s32.totalorder %s22, 1
      %p119 = por %p117, %p118
      %p120 = scmp.ne.s32.totalorder %s112, %s115
      %p121 = scmp.eq.s32.totalorder %s22, 0
      %p122 = por %p120, %p121
      %p123 = scmp.ne.s32.totalorder %s112, %s115
      %p124 = scmp.eq.s32.totalorder %s27, 1
      %p125 = por %p123, %p124
      %p126 = scmp.ne.s32.totalorder %s115, %s116
      %p127 = scmp.eq.s32.totalorder %s27, 0
      %p128 = por %p126, %p127
      %p129 = scmp.ne.s32.totalorder %s115, %s116
      %p130 = scmp.eq.s32.totalorder %s28, 1
      %p131 = por %p129, %p130
      %p133 = scmp.ne.s32.totalorder %s116, %s132
      %p134 = scmp.eq.s32.totalorder %s28, 0
      %p135 = por %p133, %p134
      %s136 = ssub.s32 %s30, %s37
      %p137 = scmp.eq.s32.totalorder %s136, 0
      %s139 = sadd.s32 %s138, 1
      %s140 = scalar_select %p137, %s138, %s139
      %p143 = pneg %p137
      %p144 = scmp.eq.s32.totalorder %s22, 1
      %p145 = por %p143, %p144
      %p146 = scmp.ne.s32.totalorder %s138, %s141
      %p147 = scmp.eq.s32.totalorder %s22, 0
      %p148 = por %p146, %p147
      %p149 = scmp.ne.s32.totalorder %s138, %s141
      %p150 = scmp.eq.s32.totalorder %s27, 1
      %p151 = por %p149, %p150
      %p152 = scmp.ne.s32.totalorder %s141, %s142
      %p153 = scmp.eq.s32.totalorder %s27, 0
      %p154 = por %p152, %p153
      %p155 = scmp.ne.s32.totalorder %s141, %s142
      %p156 = scmp.eq.s32.totalorder %s28, 1
      %p157 = por %p155, %p156
      %p159 = scmp.ne.s32.totalorder %s142, %s158
      %p160 = scmp.eq.s32.totalorder %s28, 0
      %p161 = por %p159, %p160
      %s162 = ssub.s32 %s30, %s37
      %p163 = scmp.eq.s32.totalorder %s162, 0
      %s165 = sadd.s32 %s164, 1
      %s166 = scalar_select %p163, %s164, %s165
      %p169 = pneg %p163
      %p170 = scmp.eq.s32.totalorder %s22, 1
      %p171 = por %p169, %p170
      %p172 = scmp.ne.s32.totalorder %s164, %s167
      %p173 = scmp.eq.s32.totalorder %s22, 0
      %p174 = por %p172, %p173
      %p175 = scmp.ne.s32.totalorder %s164, %s167
      %p176 = scmp.eq.s32.totalorder %s27, 1
      %p177 = por %p175, %p176
      %p178 = scmp.ne.s32.totalorder %s167, %s168
      %p179 = scmp.eq.s32.totalorder %s27, 0
      %p180 = por %p178, %p179
      %p181 = scmp.ne.s32.totalorder %s167, %s168
      %p182 = scmp.eq.s32.totalorder %s28, 1
      %p183 = por %p181, %p182
      %p185 = scmp.ne.s32.totalorder %s168, %s184
      %p186 = scmp.eq.s32.totalorder %s28, 0
      %p187 = por %p185, %p186
      %s188 = ssub.s32 %s30, %s37
      %p189 = scmp.eq.s32.totalorder %s188, 0
      %s191 = sadd.s32 %s190, 1
      %s192 = scalar_select %p189, %s190, %s191
      %p195 = pneg %p189
      %p196 = scmp.eq.s32.totalorder %s22, 1
      %p197 = por %p195, %p196
      %p198 = scmp.ne.s32.totalorder %s190, %s193
      %p199 = scmp.eq.s32.totalorder %s22, 0
      %p200 = por %p198, %p199
      %p201 = scmp.ne.s32.totalorder %s190, %s193
      %p202 = scmp.eq.s32.totalorder %s27, 1
      %p203 = por %p201, %p202
      %p204 = scmp.ne.s32.totalorder %s193, %s194
      %p205 = scmp.eq.s32.totalorder %s27, 0
      %p206 = por %p204, %p205
      %p207 = scmp.ne.s32.totalorder %s193, %s194
      %p208 = scmp.eq.s32.totalorder %s28, 1
      %p209 = por %p207, %p208
      %p211 = scmp.ne.s32.totalorder %s194, %s210
      %p212 = scmp.eq.s32.totalorder %s28, 0
      %p213 = por %p211, %p212
      %s214 = ssub.s32 %s30, %s37
      %p215 = scmp.eq.s32.totalorder %s214, 0
      %s217 = sadd.s32 %s216, 1
      %s218 = scalar_select %p215, %s216, %s217
      %p221 = pneg %p215
      %p222 = scmp.eq.s32.totalorder %s22, 1
      %p223 = por %p221, %p222
      %p224 = scmp.ne.s32.totalorder %s216, %s219
      %p225 = scmp.eq.s32.totalorder %s22, 0
      %p226 = por %p224, %p225
      %p227 = scmp.ne.s32.totalorder %s216, %s219
      %p228 = scmp.eq.s32.totalorder %s27, 1
      %p229 = por %p227, %p228
      %p230 = scmp.ne.s32.totalorder %s219, %s220
      %p231 = scmp.eq.s32.totalorder %s27, 0
      %p232 = por %p230, %p231
      %p233 = scmp.ne.s32.totalorder %s219, %s220
      %p234 = scmp.eq.s32.totalorder %s28, 1
      %p235 = por %p233, %p234
      %p237 = scmp.ne.s32.totalorder %s220, %s236
      %p238 = scmp.eq.s32.totalorder %s28, 0
      %p239 = por %p237, %p238
      %s240 = ssub.s32 %s30, %s37
      %p241 = scmp.eq.s32.totalorder %s240, 0
      %s243 = sadd.s32 %s242, 1
      %s244 = scalar_select %p241, %s242, %s243
      %p247 = pneg %p241
      %p248 = scmp.eq.s32.totalorder %s22, 1
      %p249 = por %p247, %p248
      %p250 = scmp.ne.s32.totalorder %s242, %s245
      %p251 = scmp.eq.s32.totalorder %s22, 0
      %p252 = por %p250, %p251
      %p253 = scmp.ne.s32.totalorder %s242, %s245
      %p254 = scmp.eq.s32.totalorder %s27, 1
      %p255 = por %p253, %p254
      %p256 = scmp.ne.s32.totalorder %s245, %s246
      %p257 = scmp.eq.s32.totalorder %s27, 0
      %p258 = por %p256, %p257
      %p259 = scmp.ne.s32.totalorder %s245, %s246
      %p260 = scmp.eq.s32.totalorder %s28, 1
      %p261 = por %p259, %p260
      %p263 = scmp.ne.s32.totalorder %s246, %s262
      %p264 = scmp.eq.s32.totalorder %s28, 0
      %p265 = por %p263, %p264
      %s266 = ssub.s32 %s30, %s37
      %p267 = scmp.eq.s32.totalorder %s266, 0
      %s269 = sadd.s32 %s268, 1
      %s270 = scalar_select %p267, %s268, %s269
      %p273 = pneg %p267
      %p274 = scmp.eq.s32.totalorder %s22, 1
      %p275 = por %p273, %p274
      %p276 = scmp.ne.s32.totalorder %s268, %s271
      %p277 = scmp.eq.s32.totalorder %s22, 0
      %p278 = por %p276, %p277
      %p279 = scmp.ne.s32.totalorder %s268, %s271
      %p280 = scmp.eq.s32.totalorder %s27, 1
      %p281 = por %p279, %p280
      %p282 = scmp.ne.s32.totalorder %s271, %s272
      %p283 = scmp.eq.s32.totalorder %s27, 0
      %p284 = por %p282, %p283
      %p285 = scmp.ne.s32.totalorder %s271, %s272
      %p286 = scmp.eq.s32.totalorder %s28, 1
      %p287 = por %p285, %p286
      %p289 = scmp.ne.s32.totalorder %s272, %s288
      %p290 = scmp.eq.s32.totalorder %s28, 0
      %p291 = por %p289, %p290
      %s292 = ssub.s32 %s30, %s37
      %p293 = scmp.eq.s32.totalorder %s292, 0
      %s295 = sadd.s32 %s294, 1
      %s296 = scalar_select %p293, %s294, %s295
      %p299 = pneg %p293
      %p300 = scmp.eq.s32.totalorder %s22, 1
      %p301 = por %p299, %p300
      %p302 = scmp.ne.s32.totalorder %s294, %s297
      %p303 = scmp.eq.s32.totalorder %s22, 0
      %p304 = por %p302, %p303
      %p305 = scmp.ne.s32.totalorder %s294, %s297
      %p306 = scmp.eq.s32.totalorder %s27, 1
      %p307 = por %p305, %p306
      %p308 = scmp.ne.s32.totalorder %s297, %s298
      %p309 = scmp.eq.s32.totalorder %s27, 0
      %p310 = por %p308, %p309
      %p311 = scmp.ne.s32.totalorder %s297, %s298
      %p312 = scmp.eq.s32.totalorder %s28, 1
      %p313 = por %p311, %p312
      %p315 = scmp.ne.s32.totalorder %s298, %s314
      %p316 = scmp.eq.s32.totalorder %s28, 0
      %p317 = por %p315, %p316
      %s318 = ssub.s32 %s30, %s37
      %p319 = scmp.eq.s32.totalorder %s318, 0
      %s321 = sadd.s32 %s320, 1
      %s322 = scalar_select %p319, %s320, %s321
      %p325 = pneg %p319
      %p326 = scmp.eq.s32.totalorder %s22, 1
      %p327 = por %p325, %p326
      %p328 = scmp.ne.s32.totalorder %s320, %s323
      %p329 = scmp.eq.s32.totalorder %s22, 0
      %p330 = por %p328, %p329
      %p331 = scmp.ne.s32.totalorder %s320, %s323
      %p332 = scmp.eq.s32.totalorder %s27, 1
      %p333 = por %p331, %p332
      %p334 = scmp.ne.s32.totalorder %s323, %s324
      %p335 = scmp.eq.s32.totalorder %s27, 0
      %p336 = por %p334, %p335
      %p337 = scmp.ne.s32.totalorder %s323, %s324
      %p338 = scmp.eq.s32.totalorder %s28, 1
      %p339 = por %p337, %p338
      %p341 = scmp.ne.s32.totalorder %s324, %s340
      %p342 = scmp.eq.s32.totalorder %s28, 0
      %p343 = por %p341, %p342
      %s344 = ssub.s32 %s30, %s37
      %p345 = scmp.eq.s32.totalorder %s344, 0
      %s347 = sadd.s32 %s346, 1
      %s348 = scalar_select %p345, %s346, %s347
      %p351 = pneg %p345
      %p352 = scmp.eq.s32.totalorder %s22, 1
      %p353 = por %p351, %p352
      %p354 = scmp.ne.s32.totalorder %s346, %s349
      %p355 = scmp.eq.s32.totalorder %s22, 0
      %p356 = por %p354, %p355
      %p357 = scmp.ne.s32.totalorder %s346, %s349
      %p358 = scmp.eq.s32.totalorder %s27, 1
      %p359 = por %p357, %p358
      %p360 = scmp.ne.s32.totalorder %s349, %s350
      %p361 = scmp.eq.s32.totalorder %s27, 0
      %p362 = por %p360, %p361
      %p363 = scmp.ne.s32.totalorder %s349, %s350
      %p364 = scmp.eq.s32.totalorder %s28, 1
      %p365 = por %p363, %p364
      %p367 = scmp.ne.s32.totalorder %s350, %s366
      %p368 = scmp.eq.s32.totalorder %s28, 0
      %p369 = por %p367, %p368
      %s370 = ssub.s32 %s30, %s37
      %p371 = scmp.eq.s32.totalorder %s370, 0
      %s373 = sadd.s32 %s372, 1
      %s374 = scalar_select %p371, %s372, %s373
      %p377 = pneg %p371
      %p378 = scmp.eq.s32.totalorder %s22, 1
      %p379 = por %p377, %p378
      %p380 = scmp.ne.s32.totalorder %s372, %s375
      %p381 = scmp.eq.s32.totalorder %s22, 0
      %p382 = por %p380, %p381
      %p383 = scmp.ne.s32.totalorder %s372, %s375
      %p384 = scmp.eq.s32.totalorder %s27, 1
      %p385 = por %p383, %p384
      %p386 = scmp.ne.s32.totalorder %s375, %s376
      %p387 = scmp.eq.s32.totalorder %s27, 0
      %p388 = por %p386, %p387
      %p389 = scmp.ne.s32.totalorder %s375, %s376
      %p390 = scmp.eq.s32.totalorder %s28, 1
      %p391 = por %p389, %p390
      %p393 = scmp.ne.s32.totalorder %s376, %s392
      %p394 = scmp.eq.s32.totalorder %s28, 0
      %p395 = por %p393, %p394
      %s396 = ssub.s32 %s29, %s41
      %p397 = scmp.eq.s32.totalorder %s396, 0
      %s399 = sadd.s32 %s398, 1
      %s400 = scalar_select %p397, %s398, %s399
      %p403 = pneg %p397
      %p404 = scmp.eq.s32.totalorder %s22, 1
      %p405 = por %p403, %p404
      %p406 = scmp.ne.s32.totalorder %s398, %s401
      %p407 = scmp.eq.s32.totalorder %s22, 0
      %p408 = por %p406, %p407
      %p409 = scmp.ne.s32.totalorder %s398, %s401
      %p410 = scmp.eq.s32.totalorder %s27, 1
      %p411 = por %p409, %p410
      %p412 = scmp.ne.s32.totalorder %s401, %s402
      %p413 = scmp.eq.s32.totalorder %s27, 0
      %p414 = por %p412, %p413
      %p415 = scmp.ne.s32.totalorder %s401, %s402
      %p416 = scmp.eq.s32.totalorder %s28, 1
      %p417 = por %p415, %p416
      %p419 = scmp.ne.s32.totalorder %s402, %s418
      %p420 = scmp.eq.s32.totalorder %s28, 0
      %p421 = por %p419, %p420
      %p422 = scmp.le.s32.totalorder 1, %s22
      %p423 = scmp.lt.s32.totalorder %s22, 3
      %p424 = pnand %p422, %p423
      %p425 = pneg %p424
      // Predicated region
      $region9: #{tpu_custom_call.1} parent=5 // pred_check
        _
      $region10: #{tpu_custom_call.1} parent=5 // pred_check_branch
        %427 = sbr.rel (%p424) target = $region12
      $region11: #{tpu_custom_call.1} parent=5 // pred_region
        %s428 = ssub.s32 %s22, 1
        // Predicated region
        $region13: #{tpu_custom_call.1} parent=11 // pred_check
          %p429 = pneg %p60
        $region14: #{tpu_custom_call.1} parent=11 // pred_check_branch
          %431 = sbr.rel (%p429) target = $region16
        $region15: #{tpu_custom_call.1} parent=11 // pred_region
          %s432 = smul.u32 2, %s31
          %p433 = scmp.lt.s32.totalorder %s432, 1
          %s434 = scalar_select %p433, %s432, 1
          %s435 = smul.addr %s434, 2
          %s436 = smul.addr %s435, 4
          %s437 = scalar_lea.vmem %s0, %s436
          %s438 = smul.u32 2, %s31
        $region16: #{tpu_custom_call.1} parent=11 // pred_fallthru
          _
        // Predicated region
        $region17: #{tpu_custom_call.1} parent=11 // pred_check
          %p439 = pneg %p81
        $region18: #{tpu_custom_call.1} parent=11 // pred_check_branch
          %441 = sbr.rel (%p439) target = $region20
        $region19: #{tpu_custom_call.1} parent=11 // pred_region
          _
        $region20: #{tpu_custom_call.1} parent=11 // pred_fallthru
          _
        // Predicated region
        $region21: #{tpu_custom_call.1} parent=11 // pred_check
          %p442 = pneg %p102
        $region22: #{tpu_custom_call.1} parent=11 // pred_check_branch
          %444 = sbr.rel (%p442) target = $region24
        $region23: #{tpu_custom_call.1} parent=11 // pred_region
          %s446 = ssub.s32 16, 16
          %447 = vsyncadd [#allocation3], %s446
          %s449 = sshll.u32 [#allocation2], 4
          %s450 = int_to_ptr.vmem [resolvable:$true] %s449
          %452 = dma.hbm_to_vmem [thread:$0]  %s2, 16, %s450, [#allocation3]
        $region24: #{tpu_custom_call.1} parent=11 // pred_fallthru
          _
      $region12: #{tpu_custom_call.1} parent=5 // pred_fallthru
        _
      %p453 = scmp.lt.s32.totalorder %s22, 2
      // Predicated region
      $region25: #{tpu_custom_call.1} parent=5 // pred_check
        %p454 = pneg %p453
      $region26: #{tpu_custom_call.1} parent=5 // pred_check_branch
        %456 = sbr.rel (%p454) target = $region28
      $region27: #{tpu_custom_call.1} parent=5 // pred_region
        // Predicated region
        $region29: #{tpu_custom_call.1} parent=27 // pred_check
          %p457 = pneg %p122
        $region30: #{tpu_custom_call.1} parent=27 // pred_check_branch
          %459 = sbr.rel (%p457) target = $region32
        $region31: #{tpu_custom_call.1} parent=27 // pred_region
          %p460 = scmp.lt.s32.totalorder %s30, 1
          %s461 = scalar_select %p460, %s30, 1
          %s462 = scalar_lea.vmem %s3, %s461
        $region32: #{tpu_custom_call.1} parent=27 // pred_fallthru
          _
        // Predicated region
        $region33: #{tpu_custom_call.1} parent=27 // pred_check
          %p463 = pneg %p148
        $region34: #{tpu_custom_call.1} parent=27 // pred_check_branch
          %465 = sbr.rel (%p463) target = $region36
        $region35: #{tpu_custom_call.1} parent=27 // pred_region
          %p466 = scmp.lt.s32.totalorder %s30, 1
          %s467 = scalar_select %p466, %s30, 1
          %s468 = scalar_lea.vmem %s4, %s467
        $region36: #{tpu_custom_call.1} parent=27 // pred_fallthru
          _
        // Predicated region
        $region37: #{tpu_custom_call.1} parent=27 // pred_check
          %p469 = pneg %p174
        $region38: #{tpu_custom_call.1} parent=27 // pred_check_branch
          %471 = sbr.rel (%p469) target = $region40
        $region39: #{tpu_custom_call.1} parent=27 // pred_region
          %p472 = scmp.lt.s32.totalorder %s30, 1
          %s473 = scalar_select %p472, %s30, 1
          %s474 = smul.addr %s473, 4
          %s475 = smul.addr %s474, 4
          %s476 = scalar_lea.vmem %s5, %s475
        $region40: #{tpu_custom_call.1} parent=27 // pred_fallthru
          _
        // Predicated region
        $region41: #{tpu_custom_call.1} parent=27 // pred_check
          %p477 = pneg %p200
        $region42: #{tpu_custom_call.1} parent=27 // pred_check_branch
          %479 = sbr.rel (%p477) target = $region44
        $region43: #{tpu_custom_call.1} parent=27 // pred_region
          %p480 = scmp.lt.s32.totalorder %s30, 1
          %s481 = scalar_select %p480, %s30, 1
          %s482 = smul.addr %s481, 4
          %s483 = smul.addr %s482, 4
          %s484 = scalar_lea.vmem %s6, %s483
        $region44: #{tpu_custom_call.1} parent=27 // pred_fallthru
          _
        // Predicated region
        $region45: #{tpu_custom_call.1} parent=27 // pred_check
          %p485 = pneg %p226
        $region46: #{tpu_custom_call.1} parent=27 // pred_check_branch
          %487 = sbr.rel (%p485) target = $region48
        $region47: #{tpu_custom_call.1} parent=27 // pred_region
          %p488 = scmp.lt.s32.totalorder %s30, 1
          %s489 = scalar_select %p488, %s30, 1
          %s490 = scalar_lea.vmem %s7, %s489
        $region48: #{tpu_custom_call.1} parent=27 // pred_fallthru
          _
        // Predicated region
        $region49: #{tpu_custom_call.1} parent=27 // pred_check
          %p491 = pneg %p252
        $region50: #{tpu_custom_call.1} parent=27 // pred_check_branch
          %493 = sbr.rel (%p491) target = $region52
        $region51: #{tpu_custom_call.1} parent=27 // pred_region
          %p494 = scmp.lt.s32.totalorder %s30, 1
          %s495 = scalar_select %p494, %s30, 1
          %s496 = scalar_lea.vmem %s8, %s495
        $region52: #{tpu_custom_call.1} parent=27 // pred_fallthru
          _
        // Predicated region
        $region53: #{tpu_custom_call.1} parent=27 // pred_check
          %p497 = pneg %p278
        $region54: #{tpu_custom_call.1} parent=27 // pred_check_branch
          %499 = sbr.rel (%p497) target = $region56
        $region55: #{tpu_custom_call.1} parent=27 // pred_region
          %p500 = scmp.lt.s32.totalorder %s30, 1
          %s501 = scalar_select %p500, %s30, 1
          %s502 = scalar_lea.vmem %s9, %s501
        $region56: #{tpu_custom_call.1} parent=27 // pred_fallthru
          _
        // Predicated region
        $region57: #{tpu_custom_call.1} parent=27 // pred_check
          %p503 = pneg %p304
        $region58: #{tpu_custom_call.1} parent=27 // pred_check_branch
          %505 = sbr.rel (%p503) target = $region60
        $region59: #{tpu_custom_call.1} parent=27 // pred_region
          %p506 = scmp.lt.s32.totalorder %s30, 1
          %s507 = scalar_select %p506, %s30, 1
          %s508 = smul.addr %s507, 4
          %s509 = smul.addr %s508, 4
          %s510 = scalar_lea.vmem %s10, %s509
        $region60: #{tpu_custom_call.1} parent=27 // pred_fallthru
          _
        // Predicated region
        $region61: #{tpu_custom_call.1} parent=27 // pred_check
          %p511 = pneg %p330
        $region62: #{tpu_custom_call.1} parent=27 // pred_check_branch
          %513 = sbr.rel (%p511) target = $region64
        $region63: #{tpu_custom_call.1} parent=27 // pred_region
          %p514 = scmp.lt.s32.totalorder %s30, 1
          %s515 = scalar_select %p514, %s30, 1
          %s516 = scalar_lea.vmem %s11, %s515
        $region64: #{tpu_custom_call.1} parent=27 // pred_fallthru
          _
        // Predicated region
        $region65: #{tpu_custom_call.1} parent=27 // pred_check
          %p517 = pneg %p356
        $region66: #{tpu_custom_call.1} parent=27 // pred_check_branch
          %519 = sbr.rel (%p517) target = $region68
        $region67: #{tpu_custom_call.1} parent=27 // pred_region
          %p520 = scmp.lt.s32.totalorder %s30, 1
          %s521 = scalar_select %p520, %s30, 1
          %s522 = smul.addr %s521, 8
          %s523 = smul.addr %s522, 4
          %s524 = scalar_lea.vmem %s12, %s523
        $region68: #{tpu_custom_call.1} parent=27 // pred_fallthru
          _
        // Predicated region
        $region69: #{tpu_custom_call.1} parent=27 // pred_check
          %p525 = pneg %p382
        $region70: #{tpu_custom_call.1} parent=27 // pred_check_branch
          %527 = sbr.rel (%p525) target = $region72
        $region71: #{tpu_custom_call.1} parent=27 // pred_region
          %p528 = scmp.lt.s32.totalorder %s30, 1
          %s529 = scalar_select %p528, %s30, 1
          %s530 = scalar_lea.vmem %s13, %s529
        $region72: #{tpu_custom_call.1} parent=27 // pred_fallthru
          _
      $region28: #{tpu_custom_call.1} parent=5 // pred_fallthru
        _
      %p531 = scmp.le.s32.totalorder 1, %s22
      %p532 = scmp.lt.s32.totalorder %s22, 3
      %p533 = pnand %p531, %p532
      %p534 = pneg %p533
      // Predicated region
      $region73: #{tpu_custom_call.1} parent=5 // pred_check
        _
      $region74: #{tpu_custom_call.1} parent=5 // pred_check_branch
        %536 = sbr.rel (%p533) target = $region76
      $region75: #{tpu_custom_call.1} parent=5 // pred_region
        %s537 = ssub.s32 %s22, 1
        // Predicated region
        $region77: #{tpu_custom_call.1} parent=75 // pred_check
          %p538 = pneg %p102
        $region78: #{tpu_custom_call.1} parent=75 // pred_check_branch
          %540 = sbr.rel (%p538) target = $region80
        $region79: #{tpu_custom_call.1} parent=75 // pred_region
          %541 = dma.done [#allocation3], 16
        $region80: #{tpu_custom_call.1} parent=75 // pred_fallthru
          _
        %s542 = smul.u32 2, %s31
        %p543 = scmp.lt.s32.totalorder %s542, 1
        %s544 = scalar_select %p543, %s542, 1
        %s545 = smul.addr %s544, 2
        %s546 = smul.addr %s545, 4
        %s547 = scalar_lea.vmem %s0, %s546
        %p548 = pneg %p60
        %p549 = pneg %p57
        %p550 = pneg %p81
        %p551 = pneg %p78
        %p552 = pneg %p102
        %p553 = pneg %p99
        %p554 = scmp.lt.s32.totalorder %s32, 1
        %s555 = scalar_select %p554, %s32, 1
        %s556 = scalar_lea.vmem %s3, %s555
        %p557 = pneg %p128
        %p558 = pneg %p125
        %p559 = scmp.lt.s32.totalorder %s32, 1
        %s560 = scalar_select %p559, %s32, 1
        %s561 = scalar_lea.vmem %s4, %s560
        %p562 = pneg %p154
        %p563 = pneg %p151
        %p564 = scmp.lt.s32.totalorder %s32, 1
        %s565 = scalar_select %p564, %s32, 1
        %s566 = smul.addr %s565, 4
        %s567 = smul.addr %s566, 4
        %s568 = scalar_lea.vmem %s5, %s567
        %p569 = pneg %p180
        %p570 = pneg %p177
        %p571 = scmp.lt.s32.totalorder %s32, 1
        %s572 = scalar_select %p571, %s32, 1
        %s573 = smul.addr %s572, 4
        %s574 = smul.addr %s573, 4
        %s575 = scalar_lea.vmem %s6, %s574
        %p576 = pneg %p206
        %p577 = pneg %p203
        %p578 = scmp.lt.s32.totalorder %s32, 1
        %s579 = scalar_select %p578, %s32, 1
        %s580 = scalar_lea.vmem %s7, %s579
        %p581 = pneg %p232
        %p582 = pneg %p229
        %p583 = scmp.lt.s32.totalorder %s32, 1
        %s584 = scalar_select %p583, %s32, 1
        %s585 = scalar_lea.vmem %s8, %s584
        %p586 = pneg %p258
        %p587 = pneg %p255
        %p588 = scmp.lt.s32.totalorder %s32, 1
        %s589 = scalar_select %p588, %s32, 1
        %s590 = scalar_lea.vmem %s9, %s589
        %p591 = pneg %p284
        %p592 = pneg %p281
        %p593 = scmp.lt.s32.totalorder %s32, 1
        %s594 = scalar_select %p593, %s32, 1
        %s595 = smul.addr %s594, 4
        %s596 = smul.addr %s595, 4
        %s597 = scalar_lea.vmem %s10, %s596
        %p598 = pneg %p310
        %p599 = pneg %p307
        %p600 = scmp.lt.s32.totalorder %s32, 1
        %s601 = scalar_select %p600, %s32, 1
        %s602 = scalar_lea.vmem %s11, %s601
        %p603 = pneg %p336
        %p604 = pneg %p333
        %p605 = scmp.lt.s32.totalorder %s32, 1
        %s606 = scalar_select %p605, %s32, 1
        %s607 = smul.addr %s606, 8
        %s608 = smul.addr %s607, 4
        %s609 = scalar_lea.vmem %s12, %s608
        %p610 = pneg %p362
        %p611 = pneg %p359
        %p612 = scmp.lt.s32.totalorder %s32, 1
        %s613 = scalar_select %p612, %s32, 1
        %s614 = scalar_lea.vmem %s13, %s613
        %p615 = pneg %p388
        %p616 = pneg %p385
        %p617 = pneg %p414
        %p618 = pneg %p411
        %s619 = smul.u32 2, %s31
        %p620 = scmp.lt.s32.totalorder %s619, 1
        %s621 = scalar_select %p620, %s619, 1
        %s622 = smul.addr %s621, 2
        %s623 = smul.addr %s622, 4
        %s624 = scalar_lea.vmem %s0, %s623
        %s625 = smul.u32 2, %s31
        %p626 = scmp.lt.s32.totalorder %s32, 1
        %s627 = scalar_select %p626, %s32, 1
        %s628 = scalar_lea.vmem %s3, %s627
        %p629 = scmp.lt.s32.totalorder %s32, 1
        %s630 = scalar_select %p629, %s32, 1
        %s631 = scalar_lea.vmem %s4, %s630
        %p632 = scmp.lt.s32.totalorder %s32, 1
        %s633 = scalar_select %p632, %s32, 1
        %s634 = smul.addr %s633, 4
        %s635 = smul.addr %s634, 4
        %s636 = scalar_lea.vmem %s5, %s635
        %p637 = scmp.lt.s32.totalorder %s32, 1
        %s638 = scalar_select %p637, %s32, 1
        %s639 = smul.addr %s638, 4
        %s640 = smul.addr %s639, 4
        %s641 = scalar_lea.vmem %s6, %s640
        %p642 = scmp.lt.s32.totalorder %s32, 1
        %s643 = scalar_select %p642, %s32, 1
        %s644 = scalar_lea.vmem %s7, %s643
        %p645 = scmp.lt.s32.totalorder %s32, 1
        %s646 = scalar_select %p645, %s32, 1
        %s647 = scalar_lea.vmem %s8, %s646
        %p648 = scmp.lt.s32.totalorder %s32, 1
        %s649 = scalar_select %p648, %s32, 1
        %s650 = scalar_lea.vmem %s9, %s649
        %p651 = scmp.lt.s32.totalorder %s32, 1
        %s652 = scalar_select %p651, %s32, 1
        %s653 = smul.addr %s652, 4
        %s654 = smul.addr %s653, 4
        %s655 = scalar_lea.vmem %s10, %s654
        %p656 = scmp.lt.s32.totalorder %s32, 1
        %s657 = scalar_select %p656, %s32, 1
        %s658 = scalar_lea.vmem %s11, %s657
        %p659 = scmp.lt.s32.totalorder %s32, 1
        %s660 = scalar_select %p659, %s32, 1
        %s661 = smul.addr %s660, 8
        %s662 = smul.addr %s661, 4
        %s663 = scalar_lea.vmem %s12, %s662
        %p664 = scmp.lt.s32.totalorder %s32, 1
        %s665 = scalar_select %p664, %s32, 1
        %s666 = scalar_lea.vmem %s13, %s665
        %s667 = smul.u32 2, %s31
        %p669 = scmp.eq.s32.totalorder %s32, 0
        // Predicated region
        $region81: #{tpu_custom_call.1} parent=75 // pred_check
          %p670 = pneg %p669
        $region82: #{tpu_custom_call.1} parent=75 // pred_check_branch
          %672 = sbr.rel (%p670) target = $region84
        $region83: #{tpu_custom_call.1} parent=75 // pred_region
          %v673 = vld [vmem:[%s624] sm:$0xf]
          %v674 = vld [vmem:[%s624 + $0x4] sm:$0xf]
          %v675 = vld [vmem:[%s624 + $0x8] sm:$0xf]
          %v676 = vld [vmem:[%s624 + $0xc] sm:$0xf]
          %v677 = vld [vmem:[%s1] sm:$0xf]
          %v678 = vld [vmem:[%s1 + $0x4] sm:$0xf]
          %v679 = vld [vmem:[%s1 + $0x8] sm:$0xf]
          %v680 = vld [vmem:[%s1 + $0xc] sm:$0xf]
          %v681 = vld [vmem:[%s1 + $0x10] sm:$0xf]
          %v682 = vld [vmem:[%s1 + $0x14] sm:$0xf]
          %v683 = vld [vmem:[#allocation2] sm:$0x1]
          %v685 = vlaneseq
          %v686 = vshrl.u32 %v685, 7
          %v687 = vsub.s32 0, %v686
          %v688 = vrot.slane %v683, %v687
          %v694 = vunpack.c.l.b16 %v673
          %v695 = vunpack.c.l.b16 %v674
          %v696 = vunpack.c.l.b16 %v675
          %v697 = vunpack.c.l.b16 %v676
          %v698 = vpack.c.b16 %v695, %v694
          %v699 = vpack.c.b16 %v697, %v696
          %v706 = vunpack.c.l.b16 %v677
          %v707 = vunpack.c.l.b16 %v678
          %v708 = vunpack.c.l.b16 %v679
          %v709 = vunpack.c.l.b16 %v680
          %v710 = vunpack.c.l.b16 %v681
          %v711 = vunpack.c.l.b16 %v682
          %v712 = vpack.c.b16 %v707, %v706
          %v713 = vpack.c.b16 %v709, %v708
          %v714 = vpack.c.b16 %v711, %v710
          %vm718 = vcmask 392192
          %v720 = vsel %vm718, %v698, 0
          %v723 = vsel %vm718, %v699, 0
          %725 = vmatprep.subr.bf16.mxu0 0
          %726 = vmatpush1.bf16.msra.mxu0 %v712
          %727 = vmatprep.subr.bf16.mxu0 0
          %728 = vmatpush1.bf16.msra.mxu0 %v713
          %729 = vmatprep.subr.bf16.mxu0 0
          %730 = vmatpush1.bf16.msra.mxu0 %v714
          %731 = vmatprep.subr.bf16.mxu0 0
          %732 = vmatpush1.bf16.msra.mxu0 0
          %733 = vmatprep.subr.bf16.mxu0 0
          %734 = vmatpush1.bf16.msra.mxu0 0
          %735 = vmatprep.subr.bf16.mxu0 0
          %736 = vmatpush1.bf16.msra.mxu0 0
          %737 = vmatprep.subr.bf16.mxu0 0
          %738 = vmatpush1.bf16.msra.mxu0 0
          %739 = vmatprep.subr.bf16.mxu0 0
          %740 = vmatpush1.bf16.msra.mxu0 0
          %741 = vmatprep.subr.bf16.mxu0 0
          %742 = vmatpush1.bf16.msra.mxu0 0
          %743 = vmatprep.subr.bf16.mxu0 0
          %744 = vmatpush1.bf16.msra.mxu0 0
          %745 = vmatprep.subr.bf16.mxu0 0
          %746 = vmatpush1.bf16.msra.mxu0 0
          %747 = vmatprep.subr.bf16.mxu0 0
          %748 = vmatpush1.bf16.msra.mxu0 0
          %749 = vmatprep.subr.bf16.mxu0 0
          %750 = vmatpush1.bf16.msra.mxu0 0
          %751 = vmatprep.subr.bf16.mxu0 0
          %752 = vmatpush1.bf16.msra.mxu0 0
          %753 = vmatprep.subr.bf16.mxu0 0
          %754 = vmatpush1.bf16.msra.mxu0 0
          %755 = vmatprep.subr.bf16.mxu0 0
          %756 = vmatpush1.bf16.msra.mxu0 0
          %757 = vmatprep.mubr.bf16.mxu0 0
          %758 = vmatmul.mubr.bf16.gmra.mrb[0].mxu0 %v720
          %v759 = vpop.f32.mrb[0].mxu0
          %v760 = vadd.f32 %v688, %v759
          %v761 = vpop.f32.mrb[0].mxu0
          %v762 = vpop.f32.mrb[0].mxu0
          %v763 = vadd.f32 %v688, %v762
          %v764 = vpop.f32.mrb[0].mxu0
          %765 = vmatprep.mubr.bf16.mxu0 0
          %766 = vmatmul.mubr.bf16.gmra.mrb[0].mxu0 %v723
          %v767 = vpop.f32.mrb[0].mxu0
          %v768 = vadd.f32 %v688, %v767
          %v769 = vpop.f32.mrb[0].mxu0
          %v770 = vpop.f32.mrb[0].mxu0
          %v771 = vadd.f32 %v688, %v770
          %v772 = vpop.f32.mrb[0].mxu0
          %773 = vdwg.mxu0
          %vm774 = vcmask 261120
          %775 = vst.msk [vmem:[#allocation5] sm:$0xff] %vm774, %v760
          %776 = vst.msk [vmem:[#allocation5 + $0x8] sm:$0xff] %vm774, %v763
          %777 = vst.msk [vmem:[#allocation5 + $0x10] sm:$0xff] %vm774, %v768
          %778 = vst.msk [vmem:[#allocation5 + $0x18] sm:$0xff] %vm774, %v771
        $region84: #{tpu_custom_call.1} parent=75 // pred_fallthru
          _
        %v779 = vld [vmem:[#allocation5] sm:$0xff]
        %v780 = vld [vmem:[#allocation5 + $0x8] sm:$0xff]
        %v781 = vld [vmem:[#allocation5 + $0x10] sm:$0xff]
        %v782 = vld [vmem:[#allocation5 + $0x18] sm:$0xff]
        %v783 = vld [vmem:[%s628] sm:$0x1]
        %v784 = vld [vmem:[%s631] sm:$0x1]
        %vm785 = vcmask 261120
        %v786 = vsel %vm785, %v779, 0.0
        %787 = vadd.xlane.f32.xlu0 %v786
        %v788 = vpop.xlane.xlu0 %787
        %v789 = vsel %vm785, %v780, 0.0
        %790 = vadd.xlane.f32.xlu0 %v789
        %v791 = vpop.xlane.xlu0 %790
        %v792 = vsel %vm785, %v781, 0.0
        %793 = vadd.xlane.f32.xlu0 %v792
        %v794 = vpop.xlane.xlu0 %793
        %v795 = vsel %vm785, %v782, 0.0
        %796 = vadd.xlane.f32.xlu0 %v795
        %v797 = vpop.xlane.xlu0 %796
        %v798 = vrcp.pop 32.0
        %v799 = vmul.f32 %v788, %v798
        %v800 = vmul.f32 %v791, %v798
        %v801 = vmul.f32 %v794, %v798
        %v802 = vmul.f32 %v797, %v798
        %v803 = vsub.f32 %v779, %v799
        %v804 = vsub.f32 %v780, %v800
        %v805 = vsub.f32 %v781, %v801
        %v806 = vsub.f32 %v782, %v802
        %v807 = vmul.f32 %v803, %v803
        %v808 = vmul.f32 %v804, %v804
        %v809 = vmul.f32 %v805, %v805
        %v810 = vmul.f32 %v806, %v806
        %v811 = vsel %vm785, %v807, 0.0
        %812 = vadd.xlane.f32.xlu0 %v811
        %v813 = vpop.xlane.xlu0 %812
        %v814 = vsel %vm785, %v808, 0.0
        %815 = vadd.xlane.f32.xlu0 %v814
        %v816 = vpop.xlane.xlu0 %815
        %v817 = vsel %vm785, %v809, 0.0
        %818 = vadd.xlane.f32.xlu0 %v817
        %v819 = vpop.xlane.xlu0 %818
        %v820 = vsel %vm785, %v810, 0.0
        %821 = vadd.xlane.f32.xlu0 %v820
        %v822 = vpop.xlane.xlu0 %821
        %v823 = vmul.f32 %v813, %v798
        %v824 = vmul.f32 %v816, %v798
        %v825 = vmul.f32 %v819, %v798
        %v826 = vmul.f32 %v822, %v798
        %v827 = vadd.f32 %v823, 1e-05
        %v828 = vadd.f32 %v824, 1e-05
        %v829 = vadd.f32 %v825, 1e-05
        %v830 = vadd.f32 %v826, 1e-05
        %v831 = vrsqrt.pop %v827
        %v832 = vrsqrt.pop %v828
        %v833 = vrsqrt.pop %v829
        %v834 = vrsqrt.pop %v830
        %v835 = vmul.f32 %v803, %v831
        %v836 = vmul.f32 %v804, %v832
        %v837 = vmul.f32 %v805, %v833
        %v838 = vmul.f32 %v806, %v834
        %v840 = vlaneseq
        %v841 = vshrl.u32 %v840, 7
        %v842 = vsub.s32 0, %v841
        %v843 = vrot.slane %v783, %v842
        %v845 = vmul.f32 %v835, %v843
        %v846 = vmul.f32 %v836, %v843
        %v847 = vmul.f32 %v837, %v843
        %v848 = vmul.f32 %v838, %v843
        %v850 = vlaneseq
        %v851 = vshrl.u32 %v850, 7
        %v852 = vsub.s32 0, %v851
        %v853 = vrot.slane %v784, %v852
        %v855 = vadd.f32 %v845, %v853
        %v856 = vadd.f32 %v846, %v853
        %v857 = vadd.f32 %v847, %v853
        %v858 = vadd.f32 %v848, %v853
        %v859 = vpack.c.bf16 %v856, %v855
        %v860 = vpack.c.bf16 %v858, %v857
        %v861 = vld [vmem:[%s636] sm:$0xf]
        %v862 = vld [vmem:[%s636 + $0x4] sm:$0xf]
        %v863 = vld [vmem:[%s636 + $0x8] sm:$0xf]
        %v864 = vld [vmem:[%s636 + $0xc] sm:$0xf]
        %v869 = vunpack.c.l.b16 %v861
        %v870 = vunpack.c.l.b16 %v862
        %v871 = vunpack.c.l.b16 %v863
        %v872 = vunpack.c.l.b16 %v864
        %v873 = vpack.c.b16 %v870, %v869
        %v874 = vpack.c.b16 %v872, %v871
        %v878 = vsel %vm785, %v859, 0
        %v881 = vsel %vm785, %v860, 0
        %883 = vmatprep.subr.bf16.mxu0 0
        %884 = vmatpush1.bf16.msra.mxu0 %v873
        %885 = vmatprep.subr.bf16.mxu0 0
        %886 = vmatpush1.bf16.msra.mxu0 %v874
        %887 = vmatprep.subr.bf16.mxu0 0
        %888 = vmatpush1.bf16.msra.mxu0 0
        %889 = vmatprep.subr.bf16.mxu0 0
        %890 = vmatpush1.bf16.msra.mxu0 0
        %891 = vmatprep.subr.bf16.mxu0 0
        %892 = vmatpush1.bf16.msra.mxu0 0
        %893 = vmatprep.subr.bf16.mxu0 0
        %894 = vmatpush1.bf16.msra.mxu0 0
        %895 = vmatprep.subr.bf16.mxu0 0
        %896 = vmatpush1.bf16.msra.mxu0 0
        %897 = vmatprep.subr.bf16.mxu0 0
        %898 = vmatpush1.bf16.msra.mxu0 0
        %899 = vmatprep.subr.bf16.mxu0 0
        %900 = vmatpush1.bf16.msra.mxu0 0
        %901 = vmatprep.subr.bf16.mxu0 0
        %902 = vmatpush1.bf16.msra.mxu0 0
        %903 = vmatprep.subr.bf16.mxu0 0
        %904 = vmatpush1.bf16.msra.mxu0 0
        %905 = vmatprep.subr.bf16.mxu0 0
        %906 = vmatpush1.bf16.msra.mxu0 0
        %907 = vmatprep.subr.bf16.mxu0 0
        %908 = vmatpush1.bf16.msra.mxu0 0
        %909 = vmatprep.subr.bf16.mxu0 0
        %910 = vmatpush1.bf16.msra.mxu0 0
        %911 = vmatprep.subr.bf16.mxu0 0
        %912 = vmatpush1.bf16.msra.mxu0 0
        %913 = vmatprep.subr.bf16.mxu0 0
        %914 = vmatpush1.bf16.msra.mxu0 0
        %915 = vmatprep.mubr.bf16.mxu0 0
        %916 = vmatmul.mubr.bf16.gmra.mrb[0].mxu0 %v878
        %v917 = vpop.f32.mrb[0].mxu0
        %v918 = vadd.f32 0.0, %v917
        %v919 = vpop.f32.mrb[0].mxu0
        %v920 = vpop.f32.mrb[0].mxu0
        %v921 = vadd.f32 0.0, %v920
        %v922 = vpop.f32.mrb[0].mxu0
        %923 = vmatprep.mubr.bf16.mxu0 0
        %924 = vmatmul.mubr.bf16.gmra.mrb[0].mxu0 %v881
        %v925 = vpop.f32.mrb[0].mxu0
        %v926 = vadd.f32 0.0, %v925
        %v927 = vpop.f32.mrb[0].mxu0
        %v928 = vpop.f32.mrb[0].mxu0
        %v929 = vadd.f32 0.0, %v928
        %v930 = vpop.f32.mrb[0].mxu0
        %931 = vdwg.mxu0
        %v932 = vmul.f32 %v918, 0.35355338
        %v933 = vmul.f32 %v921, 0.35355338
        %v934 = vmul.f32 %v926, 0.35355338
        %v935 = vmul.f32 %v929, 0.35355338
        %v936 = vld [vmem:[%s641] sm:$0xf]
        %v937 = vld [vmem:[%s641 + $0x4] sm:$0xf]
        %v938 = vld [vmem:[%s641 + $0x8] sm:$0xf]
        %v939 = vld [vmem:[%s641 + $0xc] sm:$0xf]
        %v940 = vpack.c.bf16 %v933, %v932
        %v941 = vpack.c.bf16 %v935, %v934
        %v942 = vpack.c.bf16 %v921, %v918
        %v943 = vpack.c.bf16 %v929, %v926
        %945 = vrot.lane.b32.xlu0 %v942, 96
        %v946 = vpop.permute.xlu0 %945
        %vm947 = vcmask 64512
        %v949 = vsel %vm947, %v940, 0
        %v952 = vsel %vm947, %v946, 0
        %954 = vmatprep.subr.bf16.mxu0 0
        %955 = vmatpush1.bf16.xpose.msra.mxu0 %v952
        %956 = vmatprep.subr.bf16.mxu0 0
        %957 = vmatpush1.bf16.xpose.msra.mxu0 0
        %958 = vmatprep.subr.bf16.mxu0 0
        %959 = vmatpush1.bf16.xpose.msra.mxu0 0
        %960 = vmatprep.subr.bf16.mxu0 0
        %961 = vmatpush1.bf16.xpose.msra.mxu0 0
        %962 = vmatprep.subr.bf16.mxu0 0
        %963 = vmatpush1.bf16.xpose.msra.mxu0 0
        %964 = vmatprep.subr.bf16.mxu0 0
        %965 = vmatpush1.bf16.xpose.msra.mxu0 0
        %966 = vmatprep.subr.bf16.mxu0 0
        %967 = vmatpush1.bf16.xpose.msra.mxu0 0
        %968 = vmatprep.subr.bf16.mxu0 0
        %969 = vmatpush1.bf16.xpose.msra.mxu0 0
        %970 = vmatprep.subr.bf16.mxu0 0
        %971 = vmatpush1.bf16.xpose.msra.mxu0 0
        %972 = vmatprep.subr.bf16.mxu0 0
        %973 = vmatpush1.bf16.xpose.msra.mxu0 0
        %974 = vmatprep.subr.bf16.mxu0 0
        %975 = vmatpush1.bf16.xpose.msra.mxu0 0
        %976 = vmatprep.subr.bf16.mxu0 0
        %977 = vmatpush1.bf16.xpose.msra.mxu0 0
        %978 = vmatprep.subr.bf16.mxu0 0
        %979 = vmatpush1.bf16.xpose.msra.mxu0 0
        %980 = vmatprep.subr.bf16.mxu0 0
        %981 = vmatpush1.bf16.xpose.msra.mxu0 0
        %982 = vmatprep.subr.bf16.mxu0 0
        %983 = vmatpush1.bf16.xpose.msra.mxu0 0
        %984 = vmatprep.subr.bf16.mxu0 0
        %985 = vmatpush1.bf16.xpose.msra.mxu0 0
        %986 = vmatprep.mubr.bf16.mxu0 0
        %987 = vmatmul.mubr.bf16.gmra.mrb[0].mxu0 %v949
        %v988 = vpop.f32.mrb[0].mxu0
        %v989 = vadd.f32 0.0, %v988
        %v990 = vpop.f32.mrb[0].mxu0
        %v991 = vpop.f32.mrb[0].mxu0
        %v992 = vadd.f32 0.0, %v991
        %v993 = vpop.f32.mrb[0].mxu0
        %994 = vdwg.mxu0
        %996 = vrot.lane.b32.xlu0 %v943, 96
        %v997 = vpop.permute.xlu0 %996
        %v999 = vsel %vm947, %v941, 0
        %v1002 = vsel %vm947, %v997, 0
        %1004 = vmatprep.subr.bf16.mxu0 0
        %1005 = vmatpush1.bf16.xpose.msra.mxu0 %v1002
        %1006 = vmatprep.subr.bf16.mxu0 0
        %1007 = vmatpush1.bf16.xpose.msra.mxu0 0
        %1008 = vmatprep.subr.bf16.mxu0 0
        %1009 = vmatpush1.bf16.xpose.msra.mxu0 0
        %1010 = vmatprep.subr.bf16.mxu0 0
        %1011 = vmatpush1.bf16.xpose.msra.mxu0 0
        %1012 = vmatprep.subr.bf16.mxu0 0
        %1013 = vmatpush1.bf16.xpose.msra.mxu0 0
        %1014 = vmatprep.subr.bf16.mxu0 0
        %1015 = vmatpush1.bf16.xpose.msra.mxu0 0
        %1016 = vmatprep.subr.bf16.mxu0 0
        %1017 = vmatpush1.bf16.xpose.msra.mxu0 0
        %1018 = vmatprep.subr.bf16.mxu0 0
        %1019 = vmatpush1.bf16.xpose.msra.mxu0 0
        %1020 = vmatprep.subr.bf16.mxu0 0
        %1021 = vmatpush1.bf16.xpose.msra.mxu0 0
        %1022 = vmatprep.subr.bf16.mxu0 0
        %1023 = vmatpush1.bf16.xpose.msra.mxu0 0
        %1024 = vmatprep.subr.bf16.mxu0 0
        %1025 = vmatpush1.bf16.xpose.msra.mxu0 0
        %1026 = vmatprep.subr.bf16.mxu0 0
        %1027 = vmatpush1.bf16.xpose.msra.mxu0 0
        %1028 = vmatprep.subr.bf16.mxu0 0
        %1029 = vmatpush1.bf16.xpose.msra.mxu0 0
        %1030 = vmatprep.subr.bf16.mxu0 0
        %1031 = vmatpush1.bf16.xpose.msra.mxu0 0
        %1032 = vmatprep.subr.bf16.mxu0 0
        %1033 = vmatpush1.bf16.xpose.msra.mxu0 0
        %1034 = vmatprep.subr.bf16.mxu0 0
        %1035 = vmatpush1.bf16.xpose.msra.mxu0 0
        %1036 = vmatprep.mubr.bf16.mxu0 0
        %1037 = vmatmul.mubr.bf16.gmra.mrb[0].mxu0 %v999
        %v1038 = vpop.f32.mrb[0].mxu0
        %v1039 = vadd.f32 0.0, %v1038
        %v1040 = vpop.f32.mrb[0].mxu0
        %v1041 = vpop.f32.mrb[0].mxu0
        %v1042 = vadd.f32 0.0, %v1041
        %v1043 = vpop.f32.mrb[0].mxu0
        %1044 = vdwg.mxu0
        %vm1045 = vcmask 130048
        %v1046 = vsel %vm1045, %v989, -inf
        %1047 = vmax.xlane.f32.xlu0 %v1046
        %v1048 = vpop.xlane.xlu0 %1047
        %v1049 = vsel %vm1045, %v992, -inf
        %1050 = vmax.xlane.f32.xlu0 %v1049
        %v1051 = vpop.xlane.xlu0 %1050
        %v1052 = vsel %vm1045, %v1039, -inf
        %1053 = vmax.xlane.f32.xlu0 %v1052
        %v1054 = vpop.xlane.xlu0 %1053
        %v1055 = vsel %vm1045, %v1042, -inf
        %1056 = vmax.xlane.f32.xlu0 %v1055
        %v1057 = vpop.xlane.xlu0 %1056
        %v1058 = vsub.f32 %v989, %v1048
        %v1059 = vsub.f32 %v992, %v1051
        %v1060 = vsub.f32 %v1039, %v1054
        %v1061 = vsub.f32 %v1042, %v1057
        %v1062 = vmul.f32 %v1058, 1.442695
        %v1063 = vpow.pop %v1062
        %v1064 = vmul.f32 %v1059, 1.442695
        %v1065 = vpow.pop %v1064
        %v1066 = vmul.f32 %v1060, 1.442695
        %v1067 = vpow.pop %v1066
        %v1068 = vmul.f32 %v1061, 1.442695
        %v1069 = vpow.pop %v1068
        %v1070 = vsel %vm1045, %v1063, 0.0
        %1071 = vadd.xlane.f32.xlu0 %v1070
        %v1072 = vpop.xlane.xlu0 %1071
        %v1073 = vsel %vm1045, %v1065, 0.0
        %1074 = vadd.xlane.f32.xlu0 %v1073
        %v1075 = vpop.xlane.xlu0 %1074
        %v1076 = vsel %vm1045, %v1067, 0.0
        %1077 = vadd.xlane.f32.xlu0 %v1076
        %v1078 = vpop.xlane.xlu0 %1077
        %v1079 = vsel %vm1045, %v1069, 0.0
        %1080 = vadd.xlane.f32.xlu0 %v1079
        %v1081 = vpop.xlane.xlu0 %1080
        %v1082 = vrcp.pop %v1072
        %v1083 = vrcp.pop %v1075
        %v1084 = vrcp.pop %v1078
        %v1085 = vrcp.pop %v1081
        %v1086 = vmul.f32 %v1063, %v1082
        %v1087 = vmul.f32 %v1065, %v1083
        %v1088 = vmul.f32 %v1067, %v1084
        %v1089 = vmul.f32 %v1069, %v1085
        %v1090 = vpack.c.bf16 %v1087, %v1086
        %v1091 = vpack.c.bf16 %v1089, %v1088
        %1092 = vrot.lane.b32.xlu0 %v942, 64
        %v1093 = vpop.permute.xlu0 %1092
        %v1096 = vsel %vm1045, %v1090, 0
        %1098 = vmatprep.subr.bf16.mxu0 0
        %1099 = vmatpush1.bf16.msra.mxu0 %v1093
        %1100 = vmatprep.subr.bf16.mxu0 0
        %1101 = vmatpush1.bf16.msra.mxu0 0
        %1102 = vmatprep.subr.bf16.mxu0 0
        %1103 = vmatpush1.bf16.msra.mxu0 0
        %1104 = vmatprep.subr.bf16.mxu0 0
        %1105 = vmatpush1.bf16.msra.mxu0 0
        %1106 = vmatprep.subr.bf16.mxu0 0
        %1107 = vmatpush1.bf16.msra.mxu0 0
        %1108 = vmatprep.subr.bf16.mxu0 0
        %1109 = vmatpush1.bf16.msra.mxu0 0
        %1110 = vmatprep.subr.bf16.mxu0 0
        %1111 = vmatpush1.bf16.msra.mxu0 0
        %1112 = vmatprep.subr.bf16.mxu0 0
        %1113 = vmatpush1.bf16.msra.mxu0 0
        %1114 = vmatprep.subr.bf16.mxu0 0
        %1115 = vmatpush1.bf16.msra.mxu0 0
        %1116 = vmatprep.subr.bf16.mxu0 0
        %1117 = vmatpush1.bf16.msra.mxu0 0
        %1118 = vmatprep.subr.bf16.mxu0 0
        %1119 = vmatpush1.bf16.msra.mxu0 0
        %1120 = vmatprep.subr.bf16.mxu0 0
        %1121 = vmatpush1.bf16.msra.mxu0 0
        %1122 = vmatprep.subr.bf16.mxu0 0
        %1123 = vmatpush1.bf16.msra.mxu0 0
        %1124 = vmatprep.subr.bf16.mxu0 0
        %1125 = vmatpush1.bf16.msra.mxu0 0
        %1126 = vmatprep.subr.bf16.mxu0 0
        %1127 = vmatpush1.bf16.msra.mxu0 0
        %1128 = vmatprep.subr.bf16.mxu0 0
        %1129 = vmatpush1.bf16.msra.mxu0 0
        %1130 = vmatprep.mubr.bf16.mxu0 0
        %1131 = vmatmul.mubr.bf16.gmra.mrb[0].mxu0 %v1096
        %v1132 = vpop.f32.mrb[0].mxu0
        %v1133 = vadd.f32 0.0, %v1132
        %v1134 = vpop.f32.mrb[0].mxu0
        %v1135 = vpop.f32.mrb[0].mxu0
        %v1136 = vadd.f32 0.0, %v1135
        %v1137 = vpop.f32.mrb[0].mxu0
        %1138 = vdwg.mxu0
        %1139 = vrot.lane.b32.xlu0 %v943, 64
        %v1140 = vpop.permute.xlu0 %1139
        %v1143 = vsel %vm1045, %v1091, 0
        %1145 = vmatprep.subr.bf16.mxu0 0
        %1146 = vmatpush1.bf16.msra.mxu0 %v1140
        %1147 = vmatprep.subr.bf16.mxu0 0
        %1148 = vmatpush1.bf16.msra.mxu0 0
        %1149 = vmatprep.subr.bf16.mxu0 0
        %1150 = vmatpush1.bf16.msra.mxu0 0
        %1151 = vmatprep.subr.bf16.mxu0 0
        %1152 = vmatpush1.bf16.msra.mxu0 0
        %1153 = vmatprep.subr.bf16.mxu0 0
        %1154 = vmatpush1.bf16.msra.mxu0 0
        %1155 = vmatprep.subr.bf16.mxu0 0
        %1156 = vmatpush1.bf16.msra.mxu0 0
        %1157 = vmatprep.subr.bf16.mxu0 0
        %1158 = vmatpush1.bf16.msra.mxu0 0
        %1159 = vmatprep.subr.bf16.mxu0 0
        %1160 = vmatpush1.bf16.msra.mxu0 0
        %1161 = vmatprep.subr.bf16.mxu0 0
        %1162 = vmatpush1.bf16.msra.mxu0 0
        %1163 = vmatprep.subr.bf16.mxu0 0
        %1164 = vmatpush1.bf16.msra.mxu0 0
        %1165 = vmatprep.subr.bf16.mxu0 0
        %1166 = vmatpush1.bf16.msra.mxu0 0
        %1167 = vmatprep.subr.bf16.mxu0 0
        %1168 = vmatpush1.bf16.msra.mxu0 0
        %1169 = vmatprep.subr.bf16.mxu0 0
        %1170 = vmatpush1.bf16.msra.mxu0 0
        %1171 = vmatprep.subr.bf16.mxu0 0
        %1172 = vmatpush1.bf16.msra.mxu0 0
        %1173 = vmatprep.subr.bf16.mxu0 0
        %1174 = vmatpush1.bf16.msra.mxu0 0
        %1175 = vmatprep.subr.bf16.mxu0 0
        %1176 = vmatpush1.bf16.msra.mxu0 0
        %1177 = vmatprep.mubr.bf16.mxu0 0
        %1178 = vmatmul.mubr.bf16.gmra.mrb[0].mxu0 %v1143
        %v1179 = vpop.f32.mrb[0].mxu0
        %v1180 = vadd.f32 0.0, %v1179
        %v1181 = vpop.f32.mrb[0].mxu0
        %v1182 = vpop.f32.mrb[0].mxu0
        %v1183 = vadd.f32 0.0, %v1182
        %v1184 = vpop.f32.mrb[0].mxu0
        %1185 = vdwg.mxu0
        %v1186 = vpack.c.bf16 %v1136, %v1133
        %v1187 = vpack.c.bf16 %v1183, %v1180
        %1189 = vrot.lane.b32.xlu0 %v940, 120
        %v1190 = vpop.permute.xlu0 %1189
        %1191 = vrot.lane.b32.xlu0 %v942, 88
        %v1192 = vpop.permute.xlu0 %1191
        %v1194 = vsel %vm947, %v1190, 0
        %v1197 = vsel %vm947, %v1192, 0
        %1199 = vmatprep.subr.bf16.mxu0 0
        %1200 = vmatpush1.bf16.xpose.msra.mxu0 %v1197
        %1201 = vmatprep.subr.bf16.mxu0 0
        %1202 = vmatpush1.bf16.xpose.msra.mxu0 0
        %1203 = vmatprep.subr.bf16.mxu0 0
        %1204 = vmatpush1.bf16.xpose.msra.mxu0 0
        %1205 = vmatprep.subr.bf16.mxu0 0
        %1206 = vmatpush1.bf16.xpose.msra.mxu0 0
        %1207 = vmatprep.subr.bf16.mxu0 0
        %1208 = vmatpush1.bf16.xpose.msra.mxu0 0
        %1209 = vmatprep.subr.bf16.mxu0 0
        %1210 = vmatpush1.bf16.xpose.msra.mxu0 0
        %1211 = vmatprep.subr.bf16.mxu0 0
        %1212 = vmatpush1.bf16.xpose.msra.mxu0 0
        %1213 = vmatprep.subr.bf16.mxu0 0
        %1214 = vmatpush1.bf16.xpose.msra.mxu0 0
        %1215 = vmatprep.subr.bf16.mxu0 0
        %1216 = vmatpush1.bf16.xpose.msra.mxu0 0
        %1217 = vmatprep.subr.bf16.mxu0 0
        %1218 = vmatpush1.bf16.xpose.msra.mxu0 0
        %1219 = vmatprep.subr.bf16.mxu0 0
        %1220 = vmatpush1.bf16.xpose.msra.mxu0 0
        %1221 = vmatprep.subr.bf16.mxu0 0
        %1222 = vmatpush1.bf16.xpose.msra.mxu0 0
        %1223 = vmatprep.subr.bf16.mxu0 0
        %1224 = vmatpush1.bf16.xpose.msra.mxu0 0
        %1225 = vmatprep.subr.bf16.mxu0 0
        %1226 = vmatpush1.bf16.xpose.msra.mxu0 0
        %1227 = vmatprep.subr.bf16.mxu0 0
        %1228 = vmatpush1.bf16.xpose.msra.mxu0 0
        %1229 = vmatprep.subr.bf16.mxu0 0
        %1230 = vmatpush1.bf16.xpose.msra.mxu0 0
        %1231 = vmatprep.mubr.bf16.mxu0 0
        %1232 = vmatmul.mubr.bf16.gmra.mrb[0].mxu0 %v1194
        %v1233 = vpop.f32.mrb[0].mxu0
        %v1234 = vadd.f32 0.0, %v1233
        %v1235 = vpop.f32.mrb[0].mxu0
        %v1236 = vpop.f32.mrb[0].mxu0
        %v1237 = vadd.f32 0.0, %v1236
        %v1238 = vpop.f32.mrb[0].mxu0
        %1239 = vdwg.mxu0
        %1241 = vrot.lane.b32.xlu0 %v941, 120
        %v1242 = vpop.permute.xlu0 %1241
        %1243 = vrot.lane.b32.xlu0 %v943, 88
        %v1244 = vpop.permute.xlu0 %1243
        %v1246 = vsel %vm947, %v1242, 0
        %v1249 = vsel %vm947, %v1244, 0
        %1251 = vmatprep.subr.bf16.mxu0 0
        %1252 = vmatpush1.bf16.xpose.msra.mxu0 %v1249
        %1253 = vmatprep.subr.bf16.mxu0 0
        %1254 = vmatpush1.bf16.xpose.msra.mxu0 0
        %1255 = vmatprep.subr.bf16.mxu0 0
        %1256 = vmatpush1.bf16.xpose.msra.mxu0 0
        %1257 = vmatprep.subr.bf16.mxu0 0
        %1258 = vmatpush1.bf16.xpose.msra.mxu0 0
        %1259 = vmatprep.subr.bf16.mxu0 0
        %1260 = vmatpush1.bf16.xpose.msra.mxu0 0
        %1261 = vmatprep.subr.bf16.mxu0 0
        %1262 = vmatpush1.bf16.xpose.msra.mxu0 0
        %1263 = vmatprep.subr.bf16.mxu0 0
        %1264 = vmatpush1.bf16.xpose.msra.mxu0 0
        %1265 = vmatprep.subr.bf16.mxu0 0
        %1266 = vmatpush1.bf16.xpose.msra.mxu0 0
        %1267 = vmatprep.subr.bf16.mxu0 0
        %1268 = vmatpush1.bf16.xpose.msra.mxu0 0
        %1269 = vmatprep.subr.bf16.mxu0 0
        %1270 = vmatpush1.bf16.xpose.msra.mxu0 0
        %1271 = vmatprep.subr.bf16.mxu0 0
        %1272 = vmatpush1.bf16.xpose.msra.mxu0 0
        %1273 = vmatprep.subr.bf16.mxu0 0
        %1274 = vmatpush1.bf16.xpose.msra.mxu0 0
        %1275 = vmatprep.subr.bf16.mxu0 0
        %1276 = vmatpush1.bf16.xpose.msra.mxu0 0
        %1277 = vmatprep.subr.bf16.mxu0 0
        %1278 = vmatpush1.bf16.xpose.msra.mxu0 0
        %1279 = vmatprep.subr.bf16.mxu0 0
        %1280 = vmatpush1.bf16.xpose.msra.mxu0 0
        %1281 = vmatprep.subr.bf16.mxu0 0
        %1282 = vmatpush1.bf16.xpose.msra.mxu0 0
        %1283 = vmatprep.mubr.bf16.mxu0 0
        %1284 = vmatmul.mubr.bf16.gmra.mrb[0].mxu0 %v1246
        %v1285 = vpop.f32.mrb[0].mxu0
        %v1286 = vadd.f32 0.0, %v1285
        %v1287 = vpop.f32.mrb[0].mxu0
        %v1288 = vpop.f32.mrb[0].mxu0
        %v1289 = vadd.f32 0.0, %v1288
        %v1290 = vpop.f32.mrb[0].mxu0
        %1291 = vdwg.mxu0
        %v1292 = vsel %vm1045, %v1234, -inf
        %1293 = vmax.xlane.f32.xlu0 %v1292
        %v1294 = vpop.xlane.xlu0 %1293
        %v1295 = vsel %vm1045, %v1237, -inf
        %1296 = vmax.xlane.f32.xlu0 %v1295
        %v1297 = vpop.xlane.xlu0 %1296
        %v1298 = vsel %vm1045, %v1286, -inf
        %1299 = vmax.xlane.f32.xlu0 %v1298
        %v1300 = vpop.xlane.xlu0 %1299
        %v1301 = vsel %vm1045, %v1289, -inf
        %1302 = vmax.xlane.f32.xlu0 %v1301
        %v1303 = vpop.xlane.xlu0 %1302
        %v1304 = vsub.f32 %v1234, %v1294
        %v1305 = vsub.f32 %v1237, %v1297
        %v1306 = vsub.f32 %v1286, %v1300
        %v1307 = vsub.f32 %v1289, %v1303
        %v1308 = vmul.f32 %v1304, 1.442695
        %v1309 = vpow.pop %v1308
        %v1310 = vmul.f32 %v1305, 1.442695
        %v1311 = vpow.pop %v1310
        %v1312 = vmul.f32 %v1306, 1.442695
        %v1313 = vpow.pop %v1312
        %v1314 = vmul.f32 %v1307, 1.442695
        %v1315 = vpow.pop %v1314
        %v1316 = vsel %vm1045, %v1309, 0.0
        %1317 = vadd.xlane.f32.xlu0 %v1316
        %v1318 = vpop.xlane.xlu0 %1317
        %v1319 = vsel %vm1045, %v1311, 0.0
        %1320 = vadd.xlane.f32.xlu0 %v1319
        %v1321 = vpop.xlane.xlu0 %1320
        %v1322 = vsel %vm1045, %v1313, 0.0
        %1323 = vadd.xlane.f32.xlu0 %v1322
        %v1324 = vpop.xlane.xlu0 %1323
        %v1325 = vsel %vm1045, %v1315, 0.0
        %1326 = vadd.xlane.f32.xlu0 %v1325
        %v1327 = vpop.xlane.xlu0 %1326
        %v1328 = vrcp.pop %v1318
        %v1329 = vrcp.pop %v1321
        %v1330 = vrcp.pop %v1324
        %v1331 = vrcp.pop %v1327
        %v1332 = vmul.f32 %v1309, %v1328
        %v1333 = vmul.f32 %v1311, %v1329
        %v1334 = vmul.f32 %v1313, %v1330
        %v1335 = vmul.f32 %v1315, %v1331
        %v1336 = vpack.c.bf16 %v1333, %v1332
        %v1337 = vpack.c.bf16 %v1335, %v1334
        %1338 = vrot.lane.b32.xlu0 %v942, 56
        %v1339 = vpop.permute.xlu0 %1338
        %v1342 = vsel %vm1045, %v1336, 0
        %1344 = vmatprep.subr.bf16.mxu0 0
        %1345 = vmatpush1.bf16.msra.mxu0 %v1339
        %1346 = vmatprep.subr.bf16.mxu0 0
        %1347 = vmatpush1.bf16.msra.mxu0 0
        %1348 = vmatprep.subr.bf16.mxu0 0
        %1349 = vmatpush1.bf16.msra.mxu0 0
        %1350 = vmatprep.subr.bf16.mxu0 0
        %1351 = vmatpush1.bf16.msra.mxu0 0
        %1352 = vmatprep.subr.bf16.mxu0 0
        %1353 = vmatpush1.bf16.msra.mxu0 0
        %1354 = vmatprep.subr.bf16.mxu0 0
        %1355 = vmatpush1.bf16.msra.mxu0 0
        %1356 = vmatprep.subr.bf16.mxu0 0
        %1357 = vmatpush1.bf16.msra.mxu0 0
        %1358 = vmatprep.subr.bf16.mxu0 0
        %1359 = vmatpush1.bf16.msra.mxu0 0
        %1360 = vmatprep.subr.bf16.mxu0 0
        %1361 = vmatpush1.bf16.msra.mxu0 0
        %1362 = vmatprep.subr.bf16.mxu0 0
        %1363 = vmatpush1.bf16.msra.mxu0 0
        %1364 = vmatprep.subr.bf16.mxu0 0
        %1365 = vmatpush1.bf16.msra.mxu0 0
        %1366 = vmatprep.subr.bf16.mxu0 0
        %1367 = vmatpush1.bf16.msra.mxu0 0
        %1368 = vmatprep.subr.bf16.mxu0 0
        %1369 = vmatpush1.bf16.msra.mxu0 0
        %1370 = vmatprep.subr.bf16.mxu0 0
        %1371 = vmatpush1.bf16.msra.mxu0 0
        %1372 = vmatprep.subr.bf16.mxu0 0
        %1373 = vmatpush1.bf16.msra.mxu0 0
        %1374 = vmatprep.subr.bf16.mxu0 0
        %1375 = vmatpush1.bf16.msra.mxu0 0
        %1376 = vmatprep.mubr.bf16.mxu0 0
        %1377 = vmatmul.mubr.bf16.gmra.mrb[0].mxu0 %v1342
        %v1378 = vpop.f32.mrb[0].mxu0
        %v1379 = vadd.f32 0.0, %v1378
        %v1380 = vpop.f32.mrb[0].mxu0
        %v1381 = vpop.f32.mrb[0].mxu0
        %v1382 = vadd.f32 0.0, %v1381
        %v1383 = vpop.f32.mrb[0].mxu0
        %1384 = vdwg.mxu0
        %1385 = vrot.lane.b32.xlu0 %v943, 56
        %v1386 = vpop.permute.xlu0 %1385
        %v1389 = vsel %vm1045, %v1337, 0
        %1391 = vmatprep.subr.bf16.mxu0 0
        %1392 = vmatpush1.bf16.msra.mxu0 %v1386
        %1393 = vmatprep.subr.bf16.mxu0 0
        %1394 = vmatpush1.bf16.msra.mxu0 0
        %1395 = vmatprep.subr.bf16.mxu0 0
        %1396 = vmatpush1.bf16.msra.mxu0 0
        %1397 = vmatprep.subr.bf16.mxu0 0
        %1398 = vmatpush1.bf16.msra.mxu0 0
        %1399 = vmatprep.subr.bf16.mxu0 0
        %1400 = vmatpush1.bf16.msra.mxu0 0
        %1401 = vmatprep.subr.bf16.mxu0 0
        %1402 = vmatpush1.bf16.msra.mxu0 0
        %1403 = vmatprep.subr.bf16.mxu0 0
        %1404 = vmatpush1.bf16.msra.mxu0 0
        %1405 = vmatprep.subr.bf16.mxu0 0
        %1406 = vmatpush1.bf16.msra.mxu0 0
        %1407 = vmatprep.subr.bf16.mxu0 0
        %1408 = vmatpush1.bf16.msra.mxu0 0
        %1409 = vmatprep.subr.bf16.mxu0 0
        %1410 = vmatpush1.bf16.msra.mxu0 0
        %1411 = vmatprep.subr.bf16.mxu0 0
        %1412 = vmatpush1.bf16.msra.mxu0 0
        %1413 = vmatprep.subr.bf16.mxu0 0
        %1414 = vmatpush1.bf16.msra.mxu0 0
        %1415 = vmatprep.subr.bf16.mxu0 0
        %1416 = vmatpush1.bf16.msra.mxu0 0
        %1417 = vmatprep.subr.bf16.mxu0 0
        %1418 = vmatpush1.bf16.msra.mxu0 0
        %1419 = vmatprep.subr.bf16.mxu0 0
        %1420 = vmatpush1.bf16.msra.mxu0 0
        %1421 = vmatprep.subr.bf16.mxu0 0
        %1422 = vmatpush1.bf16.msra.mxu0 0
        %1423 = vmatprep.mubr.bf16.mxu0 0
        %1424 = vmatmul.mubr.bf16.gmra.mrb[0].mxu0 %v1389
        %v1425 = vpop.f32.mrb[0].mxu0
        %v1426 = vadd.f32 0.0, %v1425
        %v1427 = vpop.f32.mrb[0].mxu0
        %v1428 = vpop.f32.mrb[0].mxu0
        %v1429 = vadd.f32 0.0, %v1428
        %v1430 = vpop.f32.mrb[0].mxu0
        %1431 = vdwg.mxu0
        %v1432 = vpack.c.bf16 %v1382, %v1379
        %v1433 = vpack.c.bf16 %v1429, %v1426
        %v1435 = vsel %vm947, %v1432, 0
        %v1438 = vsel %vm947, %v1433, 0
        %vm1440 = vcmask 1043456
        %v1442 = vsel %vm1440, %v937, 0
        %1444 = vmatprep.subr.bf16.mxu0 0
        %1445 = vmatpush1.bf16.msra.mxu0 %v1442
        %1446 = vmatprep.subr.bf16.mxu0 0
        %1447 = vmatpush1.bf16.msra.mxu0 0
        %1448 = vmatprep.subr.bf16.mxu0 0
        %1449 = vmatpush1.bf16.msra.mxu0 0
        %1450 = vmatprep.subr.bf16.mxu0 0
        %1451 = vmatpush1.bf16.msra.mxu0 0
        %1452 = vmatprep.subr.bf16.mxu0 0
        %1453 = vmatpush1.bf16.msra.mxu0 0
        %1454 = vmatprep.subr.bf16.mxu0 0
        %1455 = vmatpush1.bf16.msra.mxu0 0
        %1456 = vmatprep.subr.bf16.mxu0 0
        %1457 = vmatpush1.bf16.msra.mxu0 0
        %1458 = vmatprep.subr.bf16.mxu0 0
        %1459 = vmatpush1.bf16.msra.mxu0 0
        %1460 = vmatprep.subr.bf16.mxu0 0
        %1461 = vmatpush1.bf16.msra.mxu0 0
        %1462 = vmatprep.subr.bf16.mxu0 0
        %1463 = vmatpush1.bf16.msra.mxu0 0
        %1464 = vmatprep.subr.bf16.mxu0 0
        %1465 = vmatpush1.bf16.msra.mxu0 0
        %1466 = vmatprep.subr.bf16.mxu0 0
        %1467 = vmatpush1.bf16.msra.mxu0 0
        %1468 = vmatprep.subr.bf16.mxu0 0
        %1469 = vmatpush1.bf16.msra.mxu0 0
        %1470 = vmatprep.subr.bf16.mxu0 0
        %1471 = vmatpush1.bf16.msra.mxu0 0
        %1472 = vmatprep.subr.bf16.mxu0 0
        %1473 = vmatpush1.bf16.msra.mxu0 0
        %1474 = vmatprep.subr.bf16.mxu0 0
        %1475 = vmatpush1.bf16.msra.mxu0 0
        %1476 = vmatprep.mubr.bf16.mxu0 0
        %1477 = vmatmul.mubr.bf16.gmra.mrb[0].mxu0 %v1435
        %v1478 = vpop.f32.mrb[0].mxu0
        %v1479 = vadd.f32 0.0, %v1478
        %v1480 = vpop.f32.mrb[0].mxu0
        %v1481 = vpop.f32.mrb[0].mxu0
        %v1482 = vadd.f32 0.0, %v1481
        %v1483 = vpop.f32.mrb[0].mxu0
        %1484 = vmatprep.mubr.bf16.mxu0 0
        %1485 = vmatmul.mubr.bf16.gmra.mrb[0].mxu0 %v1438
        %v1486 = vpop.f32.mrb[0].mxu0
        %v1487 = vadd.f32 0.0, %v1486
        %v1488 = vpop.f32.mrb[0].mxu0
        %v1489 = vpop.f32.mrb[0].mxu0
        %v1490 = vadd.f32 0.0, %v1489
        %v1491 = vpop.f32.mrb[0].mxu0
        %1492 = vdwg.mxu0
        %v1494 = vsel %vm947, %v1186, 0
        %v1497 = vsel %vm947, %v1187, 0
        %v1500 = vsel %vm1440, %v936, 0
        %1502 = vmatprep.subr.bf16.mxu0 0
        %1503 = vmatpush1.bf16.msra.mxu0 %v1500
        %1504 = vmatprep.subr.bf16.mxu0 0
        %1505 = vmatpush1.bf16.msra.mxu0 0
        %1506 = vmatprep.subr.bf16.mxu0 0
        %1507 = vmatpush1.bf16.msra.mxu0 0
        %1508 = vmatprep.subr.bf16.mxu0 0
        %1509 = vmatpush1.bf16.msra.mxu0 0
        %1510 = vmatprep.subr.bf16.mxu0 0
        %1511 = vmatpush1.bf16.msra.mxu0 0
        %1512 = vmatprep.subr.bf16.mxu0 0
        %1513 = vmatpush1.bf16.msra.mxu0 0
        %1514 = vmatprep.subr.bf16.mxu0 0
        %1515 = vmatpush1.bf16.msra.mxu0 0
        %1516 = vmatprep.subr.bf16.mxu0 0
        %1517 = vmatpush1.bf16.msra.mxu0 0
        %1518 = vmatprep.subr.bf16.mxu0 0
        %1519 = vmatpush1.bf16.msra.mxu0 0
        %1520 = vmatprep.subr.bf16.mxu0 0
        %1521 = vmatpush1.bf16.msra.mxu0 0
        %1522 = vmatprep.subr.bf16.mxu0 0
        %1523 = vmatpush1.bf16.msra.mxu0 0
        %1524 = vmatprep.subr.bf16.mxu0 0
        %1525 = vmatpush1.bf16.msra.mxu0 0
        %1526 = vmatprep.subr.bf16.mxu0 0
        %1527 = vmatpush1.bf16.msra.mxu0 0
        %1528 = vmatprep.subr.bf16.mxu0 0
        %1529 = vmatpush1.bf16.msra.mxu0 0
        %1530 = vmatprep.subr.bf16.mxu0 0
        %1531 = vmatpush1.bf16.msra.mxu0 0
        %1532 = vmatprep.subr.bf16.mxu0 0
        %1533 = vmatpush1.bf16.msra.mxu0 0
        %1534 = vmatprep.mubr.bf16.mxu0 0
        %1535 = vmatmul.mubr.bf16.gmra.mrb[0].mxu0 %v1494
        %v1536 = vpop.f32.mrb[0].mxu0
        %v1537 = vadd.f32 %v1479, %v1536
        %v1538 = vpop.f32.mrb[0].mxu0
        %v1539 = vpop.f32.mrb[0].mxu0
        %v1540 = vadd.f32 %v1482, %v1539
        %v1541 = vpop.f32.mrb[0].mxu0
        %1542 = vmatprep.mubr.bf16.mxu0 0
        %1543 = vmatmul.mubr.bf16.gmra.mrb[0].mxu0 %v1497
        %v1544 = vpop.f32.mrb[0].mxu0
        %v1545 = vadd.f32 %v1487, %v1544
        %v1546 = vpop.f32.mrb[0].mxu0
        %v1547 = vpop.f32.mrb[0].mxu0
        %v1548 = vadd.f32 %v1490, %v1547
        %v1549 = vpop.f32.mrb[0].mxu0
        %1550 = vdwg.mxu0
        %1551 = vrot.lane.b32.xlu0 %v940, 112
        %v1552 = vpop.permute.xlu0 %1551
        %1553 = vrot.lane.b32.xlu0 %v942, 80
        %v1554 = vpop.permute.xlu0 %1553
        %v1556 = vsel %vm947, %v1552, 0
        %v1559 = vsel %vm947, %v1554, 0
        %1561 = vmatprep.subr.bf16.mxu0 0
        %1562 = vmatpush1.bf16.xpose.msra.mxu0 %v1559
        %1563 = vmatprep.subr.bf16.mxu0 0
        %1564 = vmatpush1.bf16.xpose.msra.mxu0 0
        %1565 = vmatprep.subr.bf16.mxu0 0
        %1566 = vmatpush1.bf16.xpose.msra.mxu0 0
        %1567 = vmatprep.subr.bf16.mxu0 0
        %1568 = vmatpush1.bf16.xpose.msra.mxu0 0
        %1569 = vmatprep.subr.bf16.mxu0 0
        %1570 = vmatpush1.bf16.xpose.msra.mxu0 0
        %1571 = vmatprep.subr.bf16.mxu0 0
        %1572 = vmatpush1.bf16.xpose.msra.mxu0 0
        %1573 = vmatprep.subr.bf16.mxu0 0
        %1574 = vmatpush1.bf16.xpose.msra.mxu0 0
        %1575 = vmatprep.subr.bf16.mxu0 0
        %1576 = vmatpush1.bf16.xpose.msra.mxu0 0
        %1577 = vmatprep.subr.bf16.mxu0 0
        %1578 = vmatpush1.bf16.xpose.msra.mxu0 0
        %1579 = vmatprep.subr.bf16.mxu0 0
        %1580 = vmatpush1.bf16.xpose.msra.mxu0 0
        %1581 = vmatprep.subr.bf16.mxu0 0
        %1582 = vmatpush1.bf16.xpose.msra.mxu0 0
        %1583 = vmatprep.subr.bf16.mxu0 0
        %1584 = vmatpush1.bf16.xpose.msra.mxu0 0
        %1585 = vmatprep.subr.bf16.mxu0 0
        %1586 = vmatpush1.bf16.xpose.msra.mxu0 0
        %1587 = vmatprep.subr.bf16.mxu0 0
        %1588 = vmatpush1.bf16.xpose.msra.mxu0 0
        %1589 = vmatprep.subr.bf16.mxu0 0
        %1590 = vmatpush1.bf16.xpose.msra.mxu0 0
        %1591 = vmatprep.subr.bf16.mxu0 0
        %1592 = vmatpush1.bf16.xpose.msra.mxu0 0
        %1593 = vmatprep.mubr.bf16.mxu0 0
        %1594 = vmatmul.mubr.bf16.gmra.mrb[0].mxu0 %v1556
        %v1595 = vpop.f32.mrb[0].mxu0
        %v1596 = vadd.f32 0.0, %v1595
        %v1597 = vpop.f32.mrb[0].mxu0
        %v1598 = vpop.f32.mrb[0].mxu0
        %v1599 = vadd.f32 0.0, %v1598
        %v1600 = vpop.f32.mrb[0].mxu0
        %1601 = vdwg.mxu0
        %1602 = vrot.lane.b32.xlu0 %v941, 112
        %v1603 = vpop.permute.xlu0 %1602
        %1604 = vrot.lane.b32.xlu0 %v943, 80
        %v1605 = vpop.permute.xlu0 %1604
        %v1607 = vsel %vm947, %v1603, 0
        %v1610 = vsel %vm947, %v1605, 0
        %1612 = vmatprep.subr.bf16.mxu0 0
        %1613 = vmatpush1.bf16.xpose.msra.mxu0 %v1610
        %1614 = vmatprep.subr.bf16.mxu0 0
        %1615 = vmatpush1.bf16.xpose.msra.mxu0 0
        %1616 = vmatprep.subr.bf16.mxu0 0
        %1617 = vmatpush1.bf16.xpose.msra.mxu0 0
        %1618 = vmatprep.subr.bf16.mxu0 0
        %1619 = vmatpush1.bf16.xpose.msra.mxu0 0
        %1620 = vmatprep.subr.bf16.mxu0 0
        %1621 = vmatpush1.bf16.xpose.msra.mxu0 0
        %1622 = vmatprep.subr.bf16.mxu0 0
        %1623 = vmatpush1.bf16.xpose.msra.mxu0 0
        %1624 = vmatprep.subr.bf16.mxu0 0
        %1625 = vmatpush1.bf16.xpose.msra.mxu0 0
        %1626 = vmatprep.subr.bf16.mxu0 0
        %1627 = vmatpush1.bf16.xpose.msra.mxu0 0
        %1628 = vmatprep.subr.bf16.mxu0 0
        %1629 = vmatpush1.bf16.xpose.msra.mxu0 0
        %1630 = vmatprep.subr.bf16.mxu0 0
        %1631 = vmatpush1.bf16.xpose.msra.mxu0 0
        %1632 = vmatprep.subr.bf16.mxu0 0
        %1633 = vmatpush1.bf16.xpose.msra.mxu0 0
        %1634 = vmatprep.subr.bf16.mxu0 0
        %1635 = vmatpush1.bf16.xpose.msra.mxu0 0
        %1636 = vmatprep.subr.bf16.mxu0 0
        %1637 = vmatpush1.bf16.xpose.msra.mxu0 0
        %1638 = vmatprep.subr.bf16.mxu0 0
        %1639 = vmatpush1.bf16.xpose.msra.mxu0 0
        %1640 = vmatprep.subr.bf16.mxu0 0
        %1641 = vmatpush1.bf16.xpose.msra.mxu0 0
        %1642 = vmatprep.subr.bf16.mxu0 0
        %1643 = vmatpush1.bf16.xpose.msra.mxu0 0
        %1644 = vmatprep.mubr.bf16.mxu0 0
        %1645 = vmatmul.mubr.bf16.gmra.mrb[0].mxu0 %v1607
        %v1646 = vpop.f32.mrb[0].mxu0
        %v1647 = vadd.f32 0.0, %v1646
        %v1648 = vpop.f32.mrb[0].mxu0
        %v1649 = vpop.f32.mrb[0].mxu0
        %v1650 = vadd.f32 0.0, %v1649
        %v1651 = vpop.f32.mrb[0].mxu0
        %1652 = vdwg.mxu0
        %v1653 = vsel %vm1045, %v1596, -inf
        %1654 = vmax.xlane.f32.xlu0 %v1653
        %v1655 = vpop.xlane.xlu0 %1654
        %v1656 = vsel %vm1045, %v1599, -inf
        %1657 = vmax.xlane.f32.xlu0 %v1656
        %v1658 = vpop.xlane.xlu0 %1657
        %v1659 = vsel %vm1045, %v1647, -inf
        %1660 = vmax.xlane.f32.xlu0 %v1659
        %v1661 = vpop.xlane.xlu0 %1660
        %v1662 = vsel %vm1045, %v1650, -inf
        %1663 = vmax.xlane.f32.xlu0 %v1662
        %v1664 = vpop.xlane.xlu0 %1663
        %v1665 = vsub.f32 %v1596, %v1655
        %v1666 = vsub.f32 %v1599, %v1658
        %v1667 = vsub.f32 %v1647, %v1661
        %v1668 = vsub.f32 %v1650, %v1664
        %v1669 = vmul.f32 %v1665, 1.442695
        %v1670 = vpow.pop %v1669
        %v1671 = vmul.f32 %v1666, 1.442695
        %v1672 = vpow.pop %v1671
        %v1673 = vmul.f32 %v1667, 1.442695
        %v1674 = vpow.pop %v1673
        %v1675 = vmul.f32 %v1668, 1.442695
        %v1676 = vpow.pop %v1675
        %v1677 = vsel %vm1045, %v1670, 0.0
        %1678 = vadd.xlane.f32.xlu0 %v1677
        %v1679 = vpop.xlane.xlu0 %1678
        %v1680 = vsel %vm1045, %v1672, 0.0
        %1681 = vadd.xlane.f32.xlu0 %v1680
        %v1682 = vpop.xlane.xlu0 %1681
        %v1683 = vsel %vm1045, %v1674, 0.0
        %1684 = vadd.xlane.f32.xlu0 %v1683
        %v1685 = vpop.xlane.xlu0 %1684
        %v1686 = vsel %vm1045, %v1676, 0.0
        %1687 = vadd.xlane.f32.xlu0 %v1686
        %v1688 = vpop.xlane.xlu0 %1687
        %v1689 = vrcp.pop %v1679
        %v1690 = vrcp.pop %v1682
        %v1691 = vrcp.pop %v1685
        %v1692 = vrcp.pop %v1688
        %v1693 = vmul.f32 %v1670, %v1689
        %v1694 = vmul.f32 %v1672, %v1690
        %v1695 = vmul.f32 %v1674, %v1691
        %v1696 = vmul.f32 %v1676, %v1692
        %v1697 = vpack.c.bf16 %v1694, %v1693
        %v1698 = vpack.c.bf16 %v1696, %v1695
        %1699 = vrot.lane.b32.xlu0 %v942, 48
        %v1700 = vpop.permute.xlu0 %1699
        %v1703 = vsel %vm1045, %v1697, 0
        %1705 = vmatprep.subr.bf16.mxu0 0
        %1706 = vmatpush1.bf16.msra.mxu0 %v1700
        %1707 = vmatprep.subr.bf16.mxu0 0
        %1708 = vmatpush1.bf16.msra.mxu0 0
        %1709 = vmatprep.subr.bf16.mxu0 0
        %1710 = vmatpush1.bf16.msra.mxu0 0
        %1711 = vmatprep.subr.bf16.mxu0 0
        %1712 = vmatpush1.bf16.msra.mxu0 0
        %1713 = vmatprep.subr.bf16.mxu0 0
        %1714 = vmatpush1.bf16.msra.mxu0 0
        %1715 = vmatprep.subr.bf16.mxu0 0
        %1716 = vmatpush1.bf16.msra.mxu0 0
        %1717 = vmatprep.subr.bf16.mxu0 0
        %1718 = vmatpush1.bf16.msra.mxu0 0
        %1719 = vmatprep.subr.bf16.mxu0 0
        %1720 = vmatpush1.bf16.msra.mxu0 0
        %1721 = vmatprep.subr.bf16.mxu0 0
        %1722 = vmatpush1.bf16.msra.mxu0 0
        %1723 = vmatprep.subr.bf16.mxu0 0
        %1724 = vmatpush1.bf16.msra.mxu0 0
        %1725 = vmatprep.subr.bf16.mxu0 0
        %1726 = vmatpush1.bf16.msra.mxu0 0
        %1727 = vmatprep.subr.bf16.mxu0 0
        %1728 = vmatpush1.bf16.msra.mxu0 0
        %1729 = vmatprep.subr.bf16.mxu0 0
        %1730 = vmatpush1.bf16.msra.mxu0 0
        %1731 = vmatprep.subr.bf16.mxu0 0
        %1732 = vmatpush1.bf16.msra.mxu0 0
        %1733 = vmatprep.subr.bf16.mxu0 0
        %1734 = vmatpush1.bf16.msra.mxu0 0
        %1735 = vmatprep.subr.bf16.mxu0 0
        %1736 = vmatpush1.bf16.msra.mxu0 0
        %1737 = vmatprep.mubr.bf16.mxu0 0
        %1738 = vmatmul.mubr.bf16.gmra.mrb[0].mxu0 %v1703
        %v1739 = vpop.f32.mrb[0].mxu0
        %v1740 = vadd.f32 0.0, %v1739
        %v1741 = vpop.f32.mrb[0].mxu0
        %v1742 = vpop.f32.mrb[0].mxu0
        %v1743 = vadd.f32 0.0, %v1742
        %v1744 = vpop.f32.mrb[0].mxu0
        %1745 = vdwg.mxu0
        %1746 = vrot.lane.b32.xlu0 %v943, 48
        %v1747 = vpop.permute.xlu0 %1746
        %v1750 = vsel %vm1045, %v1698, 0
        %1752 = vmatprep.subr.bf16.mxu0 0
        %1753 = vmatpush1.bf16.msra.mxu0 %v1747
        %1754 = vmatprep.subr.bf16.mxu0 0
        %1755 = vmatpush1.bf16.msra.mxu0 0
        %1756 = vmatprep.subr.bf16.mxu0 0
        %1757 = vmatpush1.bf16.msra.mxu0 0
        %1758 = vmatprep.subr.bf16.mxu0 0
        %1759 = vmatpush1.bf16.msra.mxu0 0
        %1760 = vmatprep.subr.bf16.mxu0 0
        %1761 = vmatpush1.bf16.msra.mxu0 0
        %1762 = vmatprep.subr.bf16.mxu0 0
        %1763 = vmatpush1.bf16.msra.mxu0 0
        %1764 = vmatprep.subr.bf16.mxu0 0
        %1765 = vmatpush1.bf16.msra.mxu0 0
        %1766 = vmatprep.subr.bf16.mxu0 0
        %1767 = vmatpush1.bf16.msra.mxu0 0
        %1768 = vmatprep.subr.bf16.mxu0 0
        %1769 = vmatpush1.bf16.msra.mxu0 0
        %1770 = vmatprep.subr.bf16.mxu0 0
        %1771 = vmatpush1.bf16.msra.mxu0 0
        %1772 = vmatprep.subr.bf16.mxu0 0
        %1773 = vmatpush1.bf16.msra.mxu0 0
        %1774 = vmatprep.subr.bf16.mxu0 0
        %1775 = vmatpush1.bf16.msra.mxu0 0
        %1776 = vmatprep.subr.bf16.mxu0 0
        %1777 = vmatpush1.bf16.msra.mxu0 0
        %1778 = vmatprep.subr.bf16.mxu0 0
        %1779 = vmatpush1.bf16.msra.mxu0 0
        %1780 = vmatprep.subr.bf16.mxu0 0
        %1781 = vmatpush1.bf16.msra.mxu0 0
        %1782 = vmatprep.subr.bf16.mxu0 0
        %1783 = vmatpush1.bf16.msra.mxu0 0
        %1784 = vmatprep.mubr.bf16.mxu0 0
        %1785 = vmatmul.mubr.bf16.gmra.mrb[0].mxu0 %v1750
        %v1786 = vpop.f32.mrb[0].mxu0
        %v1787 = vadd.f32 0.0, %v1786
        %v1788 = vpop.f32.mrb[0].mxu0
        %v1789 = vpop.f32.mrb[0].mxu0
        %v1790 = vadd.f32 0.0, %v1789
        %v1791 = vpop.f32.mrb[0].mxu0
        %1792 = vdwg.mxu0
        %v1793 = vpack.c.bf16 %v1743, %v1740
        %v1794 = vpack.c.bf16 %v1790, %v1787
        %v1796 = vsel %vm947, %v1793, 0
        %v1799 = vsel %vm947, %v1794, 0
        %v1802 = vsel %vm1440, %v938, 0
        %1804 = vmatprep.subr.bf16.mxu0 0
        %1805 = vmatpush1.bf16.msra.mxu0 %v1802
        %1806 = vmatprep.subr.bf16.mxu0 0
        %1807 = vmatpush1.bf16.msra.mxu0 0
        %1808 = vmatprep.subr.bf16.mxu0 0
        %1809 = vmatpush1.bf16.msra.mxu0 0
        %1810 = vmatprep.subr.bf16.mxu0 0
        %1811 = vmatpush1.bf16.msra.mxu0 0
        %1812 = vmatprep.subr.bf16.mxu0 0
        %1813 = vmatpush1.bf16.msra.mxu0 0
        %1814 = vmatprep.subr.bf16.mxu0 0
        %1815 = vmatpush1.bf16.msra.mxu0 0
        %1816 = vmatprep.subr.bf16.mxu0 0
        %1817 = vmatpush1.bf16.msra.mxu0 0
        %1818 = vmatprep.subr.bf16.mxu0 0
        %1819 = vmatpush1.bf16.msra.mxu0 0
        %1820 = vmatprep.subr.bf16.mxu0 0
        %1821 = vmatpush1.bf16.msra.mxu0 0
        %1822 = vmatprep.subr.bf16.mxu0 0
        %1823 = vmatpush1.bf16.msra.mxu0 0
        %1824 = vmatprep.subr.bf16.mxu0 0
        %1825 = vmatpush1.bf16.msra.mxu0 0
        %1826 = vmatprep.subr.bf16.mxu0 0
        %1827 = vmatpush1.bf16.msra.mxu0 0
        %1828 = vmatprep.subr.bf16.mxu0 0
        %1829 = vmatpush1.bf16.msra.mxu0 0
        %1830 = vmatprep.subr.bf16.mxu0 0
        %1831 = vmatpush1.bf16.msra.mxu0 0
        %1832 = vmatprep.subr.bf16.mxu0 0
        %1833 = vmatpush1.bf16.msra.mxu0 0
        %1834 = vmatprep.subr.bf16.mxu0 0
        %1835 = vmatpush1.bf16.msra.mxu0 0
        %1836 = vmatprep.mubr.bf16.mxu0 0
        %1837 = vmatmul.mubr.bf16.gmra.mrb[0].mxu0 %v1796
        %v1838 = vpop.f32.mrb[0].mxu0
        %v1839 = vadd.f32 0.0, %v1838
        %v1840 = vpop.f32.mrb[0].mxu0
        %v1841 = vpop.f32.mrb[0].mxu0
        %v1842 = vadd.f32 0.0, %v1841
        %v1843 = vpop.f32.mrb[0].mxu0
        %1844 = vmatprep.mubr.bf16.mxu0 0
        %1845 = vmatmul.mubr.bf16.gmra.mrb[0].mxu0 %v1799
        %v1846 = vpop.f32.mrb[0].mxu0
        %v1847 = vadd.f32 0.0, %v1846
        %v1848 = vpop.f32.mrb[0].mxu0
        %v1849 = vpop.f32.mrb[0].mxu0
        %v1850 = vadd.f32 0.0, %v1849
        %v1851 = vpop.f32.mrb[0].mxu0
        %1852 = vdwg.mxu0
        %v1853 = vadd.f32 %v1537, %v1839
        %v1854 = vadd.f32 %v1540, %v1842
        %v1855 = vadd.f32 %v1545, %v1847
        %v1856 = vadd.f32 %v1548, %v1850
        %1857 = vrot.lane.b32.xlu0 %v940, 104
        %v1858 = vpop.permute.xlu0 %1857
        %1859 = vrot.lane.b32.xlu0 %v942, 72
        %v1860 = vpop.permute.xlu0 %1859
        %v1862 = vsel %vm947, %v1858, 0
        %v1865 = vsel %vm947, %v1860, 0
        %1867 = vmatprep.subr.bf16.mxu0 0
        %1868 = vmatpush1.bf16.xpose.msra.mxu0 %v1865
        %1869 = vmatprep.subr.bf16.mxu0 0
        %1870 = vmatpush1.bf16.xpose.msra.mxu0 0
        %1871 = vmatprep.subr.bf16.mxu0 0
        %1872 = vmatpush1.bf16.xpose.msra.mxu0 0
        %1873 = vmatprep.subr.bf16.mxu0 0
        %1874 = vmatpush1.bf16.xpose.msra.mxu0 0
        %1875 = vmatprep.subr.bf16.mxu0 0
        %1876 = vmatpush1.bf16.xpose.msra.mxu0 0
        %1877 = vmatprep.subr.bf16.mxu0 0
        %1878 = vmatpush1.bf16.xpose.msra.mxu0 0
        %1879 = vmatprep.subr.bf16.mxu0 0
        %1880 = vmatpush1.bf16.xpose.msra.mxu0 0
        %1881 = vmatprep.subr.bf16.mxu0 0
        %1882 = vmatpush1.bf16.xpose.msra.mxu0 0
        %1883 = vmatprep.subr.bf16.mxu0 0
        %1884 = vmatpush1.bf16.xpose.msra.mxu0 0
        %1885 = vmatprep.subr.bf16.mxu0 0
        %1886 = vmatpush1.bf16.xpose.msra.mxu0 0
        %1887 = vmatprep.subr.bf16.mxu0 0
        %1888 = vmatpush1.bf16.xpose.msra.mxu0 0
        %1889 = vmatprep.subr.bf16.mxu0 0
        %1890 = vmatpush1.bf16.xpose.msra.mxu0 0
        %1891 = vmatprep.subr.bf16.mxu0 0
        %1892 = vmatpush1.bf16.xpose.msra.mxu0 0
        %1893 = vmatprep.subr.bf16.mxu0 0
        %1894 = vmatpush1.bf16.xpose.msra.mxu0 0
        %1895 = vmatprep.subr.bf16.mxu0 0
        %1896 = vmatpush1.bf16.xpose.msra.mxu0 0
        %1897 = vmatprep.subr.bf16.mxu0 0
        %1898 = vmatpush1.bf16.xpose.msra.mxu0 0
        %1899 = vmatprep.mubr.bf16.mxu0 0
        %1900 = vmatmul.mubr.bf16.gmra.mrb[0].mxu0 %v1862
        %v1901 = vpop.f32.mrb[0].mxu0
        %v1902 = vadd.f32 0.0, %v1901
        %v1903 = vpop.f32.mrb[0].mxu0
        %v1904 = vpop.f32.mrb[0].mxu0
        %v1905 = vadd.f32 0.0, %v1904
        %v1906 = vpop.f32.mrb[0].mxu0
        %1907 = vdwg.mxu0
        %1908 = vrot.lane.b32.xlu0 %v941, 104
        %v1909 = vpop.permute.xlu0 %1908
        %1910 = vrot.lane.b32.xlu0 %v943, 72
        %v1911 = vpop.permute.xlu0 %1910
        %v1913 = vsel %vm947, %v1909, 0
        %v1916 = vsel %vm947, %v1911, 0
        %1918 = vmatprep.subr.bf16.mxu0 0
        %1919 = vmatpush1.bf16.xpose.msra.mxu0 %v1916
        %1920 = vmatprep.subr.bf16.mxu0 0
        %1921 = vmatpush1.bf16.xpose.msra.mxu0 0
        %1922 = vmatprep.subr.bf16.mxu0 0
        %1923 = vmatpush1.bf16.xpose.msra.mxu0 0
        %1924 = vmatprep.subr.bf16.mxu0 0
        %1925 = vmatpush1.bf16.xpose.msra.mxu0 0
        %1926 = vmatprep.subr.bf16.mxu0 0
        %1927 = vmatpush1.bf16.xpose.msra.mxu0 0
        %1928 = vmatprep.subr.bf16.mxu0 0
        %1929 = vmatpush1.bf16.xpose.msra.mxu0 0
        %1930 = vmatprep.subr.bf16.mxu0 0
        %1931 = vmatpush1.bf16.xpose.msra.mxu0 0
        %1932 = vmatprep.subr.bf16.mxu0 0
        %1933 = vmatpush1.bf16.xpose.msra.mxu0 0
        %1934 = vmatprep.subr.bf16.mxu0 0
        %1935 = vmatpush1.bf16.xpose.msra.mxu0 0
        %1936 = vmatprep.subr.bf16.mxu0 0
        %1937 = vmatpush1.bf16.xpose.msra.mxu0 0
        %1938 = vmatprep.subr.bf16.mxu0 0
        %1939 = vmatpush1.bf16.xpose.msra.mxu0 0
        %1940 = vmatprep.subr.bf16.mxu0 0
        %1941 = vmatpush1.bf16.xpose.msra.mxu0 0
        %1942 = vmatprep.subr.bf16.mxu0 0
        %1943 = vmatpush1.bf16.xpose.msra.mxu0 0
        %1944 = vmatprep.subr.bf16.mxu0 0
        %1945 = vmatpush1.bf16.xpose.msra.mxu0 0
        %1946 = vmatprep.subr.bf16.mxu0 0
        %1947 = vmatpush1.bf16.xpose.msra.mxu0 0
        %1948 = vmatprep.subr.bf16.mxu0 0
        %1949 = vmatpush1.bf16.xpose.msra.mxu0 0
        %1950 = vmatprep.mubr.bf16.mxu0 0
        %1951 = vmatmul.mubr.bf16.gmra.mrb[0].mxu0 %v1913
        %v1952 = vpop.f32.mrb[0].mxu0
        %v1953 = vadd.f32 0.0, %v1952
        %v1954 = vpop.f32.mrb[0].mxu0
        %v1955 = vpop.f32.mrb[0].mxu0
        %v1956 = vadd.f32 0.0, %v1955
        %v1957 = vpop.f32.mrb[0].mxu0
        %1958 = vdwg.mxu0
        %v1959 = vsel %vm1045, %v1902, -inf
        %1960 = vmax.xlane.f32.xlu0 %v1959
        %v1961 = vpop.xlane.xlu0 %1960
        %v1962 = vsel %vm1045, %v1905, -inf
        %1963 = vmax.xlane.f32.xlu0 %v1962
        %v1964 = vpop.xlane.xlu0 %1963
        %v1965 = vsel %vm1045, %v1953, -inf
        %1966 = vmax.xlane.f32.xlu0 %v1965
        %v1967 = vpop.xlane.xlu0 %1966
        %v1968 = vsel %vm1045, %v1956, -inf
        %1969 = vmax.xlane.f32.xlu0 %v1968
        %v1970 = vpop.xlane.xlu0 %1969
        %v1971 = vsub.f32 %v1902, %v1961
        %v1972 = vsub.f32 %v1905, %v1964
        %v1973 = vsub.f32 %v1953, %v1967
        %v1974 = vsub.f32 %v1956, %v1970
        %v1975 = vmul.f32 %v1971, 1.442695
        %v1976 = vpow.pop %v1975
        %v1977 = vmul.f32 %v1972, 1.442695
        %v1978 = vpow.pop %v1977
        %v1979 = vmul.f32 %v1973, 1.442695
        %v1980 = vpow.pop %v1979
        %v1981 = vmul.f32 %v1974, 1.442695
        %v1982 = vpow.pop %v1981
        %v1983 = vsel %vm1045, %v1976, 0.0
        %1984 = vadd.xlane.f32.xlu0 %v1983
        %v1985 = vpop.xlane.xlu0 %1984
        %v1986 = vsel %vm1045, %v1978, 0.0
        %1987 = vadd.xlane.f32.xlu0 %v1986
        %v1988 = vpop.xlane.xlu0 %1987
        %v1989 = vsel %vm1045, %v1980, 0.0
        %1990 = vadd.xlane.f32.xlu0 %v1989
        %v1991 = vpop.xlane.xlu0 %1990
        %v1992 = vsel %vm1045, %v1982, 0.0
        %1993 = vadd.xlane.f32.xlu0 %v1992
        %v1994 = vpop.xlane.xlu0 %1993
        %v1995 = vrcp.pop %v1985
        %v1996 = vrcp.pop %v1988
        %v1997 = vrcp.pop %v1991
        %v1998 = vrcp.pop %v1994
        %v1999 = vmul.f32 %v1976, %v1995
        %v2000 = vmul.f32 %v1978, %v1996
        %v2001 = vmul.f32 %v1980, %v1997
        %v2002 = vmul.f32 %v1982, %v1998
        %v2003 = vpack.c.bf16 %v2000, %v1999
        %v2004 = vpack.c.bf16 %v2002, %v2001
        %2005 = vrot.lane.b32.xlu0 %v942, 40
        %v2006 = vpop.permute.xlu0 %2005
        %v2009 = vsel %vm1045, %v2003, 0
        %2011 = vmatprep.subr.bf16.mxu0 0
        %2012 = vmatpush1.bf16.msra.mxu0 %v2006
        %2013 = vmatprep.subr.bf16.mxu0 0
        %2014 = vmatpush1.bf16.msra.mxu0 0
        %2015 = vmatprep.subr.bf16.mxu0 0
        %2016 = vmatpush1.bf16.msra.mxu0 0
        %2017 = vmatprep.subr.bf16.mxu0 0
        %2018 = vmatpush1.bf16.msra.mxu0 0
        %2019 = vmatprep.subr.bf16.mxu0 0
        %2020 = vmatpush1.bf16.msra.mxu0 0
        %2021 = vmatprep.subr.bf16.mxu0 0
        %2022 = vmatpush1.bf16.msra.mxu0 0
        %2023 = vmatprep.subr.bf16.mxu0 0
        %2024 = vmatpush1.bf16.msra.mxu0 0
        %2025 = vmatprep.subr.bf16.mxu0 0
        %2026 = vmatpush1.bf16.msra.mxu0 0
        %2027 = vmatprep.subr.bf16.mxu0 0
        %2028 = vmatpush1.bf16.msra.mxu0 0
        %2029 = vmatprep.subr.bf16.mxu0 0
        %2030 = vmatpush1.bf16.msra.mxu0 0
        %2031 = vmatprep.subr.bf16.mxu0 0
        %2032 = vmatpush1.bf16.msra.mxu0 0
        %2033 = vmatprep.subr.bf16.mxu0 0
        %2034 = vmatpush1.bf16.msra.mxu0 0
        %2035 = vmatprep.subr.bf16.mxu0 0
        %2036 = vmatpush1.bf16.msra.mxu0 0
        %2037 = vmatprep.subr.bf16.mxu0 0
        %2038 = vmatpush1.bf16.msra.mxu0 0
        %2039 = vmatprep.subr.bf16.mxu0 0
        %2040 = vmatpush1.bf16.msra.mxu0 0
        %2041 = vmatprep.subr.bf16.mxu0 0
        %2042 = vmatpush1.bf16.msra.mxu0 0
        %2043 = vmatprep.mubr.bf16.mxu0 0
        %2044 = vmatmul.mubr.bf16.gmra.mrb[0].mxu0 %v2009
        %v2045 = vpop.f32.mrb[0].mxu0
        %v2046 = vadd.f32 0.0, %v2045
        %v2047 = vpop.f32.mrb[0].mxu0
        %v2048 = vpop.f32.mrb[0].mxu0
        %v2049 = vadd.f32 0.0, %v2048
        %v2050 = vpop.f32.mrb[0].mxu0
        %2051 = vdwg.mxu0
        %2052 = vrot.lane.b32.xlu0 %v943, 40
        %v2053 = vpop.permute.xlu0 %2052
        %v2056 = vsel %vm1045, %v2004, 0
        %2058 = vmatprep.subr.bf16.mxu0 0
        %2059 = vmatpush1.bf16.msra.mxu0 %v2053
        %2060 = vmatprep.subr.bf16.mxu0 0
        %2061 = vmatpush1.bf16.msra.mxu0 0
        %2062 = vmatprep.subr.bf16.mxu0 0
        %2063 = vmatpush1.bf16.msra.mxu0 0
        %2064 = vmatprep.subr.bf16.mxu0 0
        %2065 = vmatpush1.bf16.msra.mxu0 0
        %2066 = vmatprep.subr.bf16.mxu0 0
        %2067 = vmatpush1.bf16.msra.mxu0 0
        %2068 = vmatprep.subr.bf16.mxu0 0
        %2069 = vmatpush1.bf16.msra.mxu0 0
        %2070 = vmatprep.subr.bf16.mxu0 0
        %2071 = vmatpush1.bf16.msra.mxu0 0
        %2072 = vmatprep.subr.bf16.mxu0 0
        %2073 = vmatpush1.bf16.msra.mxu0 0
        %2074 = vmatprep.subr.bf16.mxu0 0
        %2075 = vmatpush1.bf16.msra.mxu0 0
        %2076 = vmatprep.subr.bf16.mxu0 0
        %2077 = vmatpush1.bf16.msra.mxu0 0
        %2078 = vmatprep.subr.bf16.mxu0 0
        %2079 = vmatpush1.bf16.msra.mxu0 0
        %2080 = vmatprep.subr.bf16.mxu0 0
        %2081 = vmatpush1.bf16.msra.mxu0 0
        %2082 = vmatprep.subr.bf16.mxu0 0
        %2083 = vmatpush1.bf16.msra.mxu0 0
        %2084 = vmatprep.subr.bf16.mxu0 0
        %2085 = vmatpush1.bf16.msra.mxu0 0
        %2086 = vmatprep.subr.bf16.mxu0 0
        %2087 = vmatpush1.bf16.msra.mxu0 0
        %2088 = vmatprep.subr.bf16.mxu0 0
        %2089 = vmatpush1.bf16.msra.mxu0 0
        %2090 = vmatprep.mubr.bf16.mxu0 0
        %2091 = vmatmul.mubr.bf16.gmra.mrb[0].mxu0 %v2056
        %v2092 = vpop.f32.mrb[0].mxu0
        %v2093 = vadd.f32 0.0, %v2092
        %v2094 = vpop.f32.mrb[0].mxu0
        %v2095 = vpop.f32.mrb[0].mxu0
        %v2096 = vadd.f32 0.0, %v2095
        %v2097 = vpop.f32.mrb[0].mxu0
        %2098 = vdwg.mxu0
        %v2099 = vpack.c.bf16 %v2049, %v2046
        %v2100 = vpack.c.bf16 %v2096, %v2093
        %v2102 = vsel %vm947, %v2099, 0
        %v2105 = vsel %vm947, %v2100, 0
        %v2108 = vsel %vm1440, %v939, 0
        %2110 = vmatprep.subr.bf16.mxu0 0
        %2111 = vmatpush1.bf16.msra.mxu0 %v2108
        %2112 = vmatprep.subr.bf16.mxu0 0
        %2113 = vmatpush1.bf16.msra.mxu0 0
        %2114 = vmatprep.subr.bf16.mxu0 0
        %2115 = vmatpush1.bf16.msra.mxu0 0
        %2116 = vmatprep.subr.bf16.mxu0 0
        %2117 = vmatpush1.bf16.msra.mxu0 0
        %2118 = vmatprep.subr.bf16.mxu0 0
        %2119 = vmatpush1.bf16.msra.mxu0 0
        %2120 = vmatprep.subr.bf16.mxu0 0
        %2121 = vmatpush1.bf16.msra.mxu0 0
        %2122 = vmatprep.subr.bf16.mxu0 0
        %2123 = vmatpush1.bf16.msra.mxu0 0
        %2124 = vmatprep.subr.bf16.mxu0 0
        %2125 = vmatpush1.bf16.msra.mxu0 0
        %2126 = vmatprep.subr.bf16.mxu0 0
        %2127 = vmatpush1.bf16.msra.mxu0 0
        %2128 = vmatprep.subr.bf16.mxu0 0
        %2129 = vmatpush1.bf16.msra.mxu0 0
        %2130 = vmatprep.subr.bf16.mxu0 0
        %2131 = vmatpush1.bf16.msra.mxu0 0
        %2132 = vmatprep.subr.bf16.mxu0 0
        %2133 = vmatpush1.bf16.msra.mxu0 0
        %2134 = vmatprep.subr.bf16.mxu0 0
        %2135 = vmatpush1.bf16.msra.mxu0 0
        %2136 = vmatprep.subr.bf16.mxu0 0
        %2137 = vmatpush1.bf16.msra.mxu0 0
        %2138 = vmatprep.subr.bf16.mxu0 0
        %2139 = vmatpush1.bf16.msra.mxu0 0
        %2140 = vmatprep.subr.bf16.mxu0 0
        %2141 = vmatpush1.bf16.msra.mxu0 0
        %2142 = vmatprep.mubr.bf16.mxu0 0
        %2143 = vmatmul.mubr.bf16.gmra.mrb[0].mxu0 %v2102
        %v2144 = vpop.f32.mrb[0].mxu0
        %v2145 = vadd.f32 0.0, %v2144
        %v2146 = vpop.f32.mrb[0].mxu0
        %v2147 = vpop.f32.mrb[0].mxu0
        %v2148 = vadd.f32 0.0, %v2147
        %v2149 = vpop.f32.mrb[0].mxu0
        %2150 = vmatprep.mubr.bf16.mxu0 0
        %2151 = vmatmul.mubr.bf16.gmra.mrb[0].mxu0 %v2105
        %v2152 = vpop.f32.mrb[0].mxu0
        %v2153 = vadd.f32 0.0, %v2152
        %v2154 = vpop.f32.mrb[0].mxu0
        %v2155 = vpop.f32.mrb[0].mxu0
        %v2156 = vadd.f32 0.0, %v2155
        %v2157 = vpop.f32.mrb[0].mxu0
        %2158 = vdwg.mxu0
        %v2159 = vadd.f32 %v1853, %v2145
        %v2160 = vadd.f32 %v1854, %v2148
        %v2161 = vadd.f32 %v1855, %v2153
        %v2162 = vadd.f32 %v1856, %v2156
        %v2163 = vadd.f32 %v779, %v2159
        %v2164 = vadd.f32 %v780, %v2160
        %v2165 = vadd.f32 %v781, %v2161
        %v2166 = vadd.f32 %v782, %v2162
        %v2167 = vld [vmem:[%s644] sm:$0x1]
        %v2169 = vlaneseq
        %v2170 = vshrl.u32 %v2169, 7
        %v2171 = vsub.s32 0, %v2170
        %v2172 = vrot.slane %v2167, %v2171
        %v2174 = vadd.f32 %v2163, %v2172
        %v2175 = vadd.f32 %v2164, %v2172
        %v2176 = vadd.f32 %v2165, %v2172
        %v2177 = vadd.f32 %v2166, %v2172
        %v2178 = vld [vmem:[%s647] sm:$0x1]
        %v2179 = vld [vmem:[%s650] sm:$0x1]
        %v2180 = vsel %vm785, %v2174, 0.0
        %2181 = vadd.xlane.f32.xlu0 %v2180
        %v2182 = vpop.xlane.xlu0 %2181
        %v2183 = vsel %vm785, %v2175, 0.0
        %2184 = vadd.xlane.f32.xlu0 %v2183
        %v2185 = vpop.xlane.xlu0 %2184
        %v2186 = vsel %vm785, %v2176, 0.0
        %2187 = vadd.xlane.f32.xlu0 %v2186
        %v2188 = vpop.xlane.xlu0 %2187
        %v2189 = vsel %vm785, %v2177, 0.0
        %2190 = vadd.xlane.f32.xlu0 %v2189
        %v2191 = vpop.xlane.xlu0 %2190
        %v2192 = vmul.f32 %v2182, %v798
        %v2193 = vmul.f32 %v2185, %v798
        %v2194 = vmul.f32 %v2188, %v798
        %v2195 = vmul.f32 %v2191, %v798
        %v2196 = vsub.f32 %v2174, %v2192
        %v2197 = vsub.f32 %v2175, %v2193
        %v2198 = vsub.f32 %v2176, %v2194
        %v2199 = vsub.f32 %v2177, %v2195
        %v2200 = vmul.f32 %v2196, %v2196
        %v2201 = vmul.f32 %v2197, %v2197
        %v2202 = vmul.f32 %v2198, %v2198
        %v2203 = vmul.f32 %v2199, %v2199
        %v2204 = vsel %vm785, %v2200, 0.0
        %2205 = vadd.xlane.f32.xlu0 %v2204
        %v2206 = vpop.xlane.xlu0 %2205
        %v2207 = vsel %vm785, %v2201, 0.0
        %2208 = vadd.xlane.f32.xlu0 %v2207
        %v2209 = vpop.xlane.xlu0 %2208
        %v2210 = vsel %vm785, %v2202, 0.0
        %2211 = vadd.xlane.f32.xlu0 %v2210
        %v2212 = vpop.xlane.xlu0 %2211
        %v2213 = vsel %vm785, %v2203, 0.0
        %2214 = vadd.xlane.f32.xlu0 %v2213
        %v2215 = vpop.xlane.xlu0 %2214
        %v2216 = vmul.f32 %v2206, %v798
        %v2217 = vmul.f32 %v2209, %v798
        %v2218 = vmul.f32 %v2212, %v798
        %v2219 = vmul.f32 %v2215, %v798
        %v2220 = vadd.f32 %v2216, 1e-05
        %v2221 = vadd.f32 %v2217, 1e-05
        %v2222 = vadd.f32 %v2218, 1e-05
        %v2223 = vadd.f32 %v2219, 1e-05
        %v2224 = vrsqrt.pop %v2220
        %v2225 = vrsqrt.pop %v2221
        %v2226 = vrsqrt.pop %v2222
        %v2227 = vrsqrt.pop %v2223
        %v2228 = vmul.f32 %v2196, %v2224
        %v2229 = vmul.f32 %v2197, %v2225
        %v2230 = vmul.f32 %v2198, %v2226
        %v2231 = vmul.f32 %v2199, %v2227
        %v2233 = vlaneseq
        %v2234 = vshrl.u32 %v2233, 7
        %v2235 = vsub.s32 0, %v2234
        %v2236 = vrot.slane %v2178, %v2235
        %v2238 = vmul.f32 %v2228, %v2236
        %v2239 = vmul.f32 %v2229, %v2236
        %v2240 = vmul.f32 %v2230, %v2236
        %v2241 = vmul.f32 %v2231, %v2236
        %v2243 = vlaneseq
        %v2244 = vshrl.u32 %v2243, 7
        %v2245 = vsub.s32 0, %v2244
        %v2246 = vrot.slane %v2179, %v2245
        %v2248 = vadd.f32 %v2238, %v2246
        %v2249 = vadd.f32 %v2239, %v2246
        %v2250 = vadd.f32 %v2240, %v2246
        %v2251 = vadd.f32 %v2241, %v2246
        %v2252 = vpack.c.bf16 %v2249, %v2248
        %v2253 = vpack.c.bf16 %v2251, %v2250
        %v2254 = vld [vmem:[%s655] sm:$0xf]
        %v2255 = vld [vmem:[%s655 + $0x4] sm:$0xf]
        %v2256 = vld [vmem:[%s655 + $0x8] sm:$0xf]
        %v2257 = vld [vmem:[%s655 + $0xc] sm:$0xf]
        %v2258 = vld [vmem:[%s658] sm:$0x1]
        %v2260 = vlaneseq
        %v2261 = vshrl.u32 %v2260, 7
        %v2262 = vsub.s32 0, %v2261
        %v2263 = vrot.slane %v2258, %v2262
        %v2269 = vunpack.c.l.b16 %v2254
        %v2270 = vunpack.c.l.b16 %v2255
        %v2271 = vunpack.c.l.b16 %v2256
        %v2272 = vunpack.c.l.b16 %v2257
        %v2273 = vpack.c.b16 %v2270, %v2269
        %v2274 = vpack.c.b16 %v2272, %v2271
        %v2278 = vsel %vm785, %v2252, 0
        %v2281 = vsel %vm785, %v2253, 0
        %2283 = vmatprep.subr.bf16.mxu0 0
        %2284 = vmatpush1.bf16.msra.mxu0 %v2273
        %2285 = vmatprep.subr.bf16.mxu0 0
        %2286 = vmatpush1.bf16.msra.mxu0 %v2274
        %2287 = vmatprep.subr.bf16.mxu0 0
        %2288 = vmatpush1.bf16.msra.mxu0 0
        %2289 = vmatprep.subr.bf16.mxu0 0
        %2290 = vmatpush1.bf16.msra.mxu0 0
        %2291 = vmatprep.subr.bf16.mxu0 0
        %2292 = vmatpush1.bf16.msra.mxu0 0
        %2293 = vmatprep.subr.bf16.mxu0 0
        %2294 = vmatpush1.bf16.msra.mxu0 0
        %2295 = vmatprep.subr.bf16.mxu0 0
        %2296 = vmatpush1.bf16.msra.mxu0 0
        %2297 = vmatprep.subr.bf16.mxu0 0
        %2298 = vmatpush1.bf16.msra.mxu0 0
        %2299 = vmatprep.subr.bf16.mxu0 0
        %2300 = vmatpush1.bf16.msra.mxu0 0
        %2301 = vmatprep.subr.bf16.mxu0 0
        %2302 = vmatpush1.bf16.msra.mxu0 0
        %2303 = vmatprep.subr.bf16.mxu0 0
        %2304 = vmatpush1.bf16.msra.mxu0 0
        %2305 = vmatprep.subr.bf16.mxu0 0
        %2306 = vmatpush1.bf16.msra.mxu0 0
        %2307 = vmatprep.subr.bf16.mxu0 0
        %2308 = vmatpush1.bf16.msra.mxu0 0
        %2309 = vmatprep.subr.bf16.mxu0 0
        %2310 = vmatpush1.bf16.msra.mxu0 0
        %2311 = vmatprep.subr.bf16.mxu0 0
        %2312 = vmatpush1.bf16.msra.mxu0 0
        %2313 = vmatprep.subr.bf16.mxu0 0
        %2314 = vmatpush1.bf16.msra.mxu0 0
        %2315 = vmatprep.mubr.bf16.mxu0 0
        %2316 = vmatmul.mubr.bf16.gmra.mrb[0].mxu0 %v2278
        %v2317 = vpop.f32.mrb[0].mxu0
        %v2318 = vadd.f32 %v2263, %v2317
        %v2319 = vpop.f32.mrb[0].mxu0
        %v2320 = vpop.f32.mrb[0].mxu0
        %v2321 = vadd.f32 %v2263, %v2320
        %v2322 = vpop.f32.mrb[0].mxu0
        %2323 = vmatprep.mubr.bf16.mxu0 0
        %2324 = vmatmul.mubr.bf16.gmra.mrb[0].mxu0 %v2281
        %v2325 = vpop.f32.mrb[0].mxu0
        %v2326 = vadd.f32 %v2263, %v2325
        %v2327 = vpop.f32.mrb[0].mxu0
        %v2328 = vpop.f32.mrb[0].mxu0
        %v2329 = vadd.f32 %v2263, %v2328
        %v2330 = vpop.f32.mrb[0].mxu0
        %2331 = vdwg.mxu0
        %v2332 = vmul.f32 %v2318, 0.5
        %v2333 = vmul.f32 %v2321, 0.5
        %v2334 = vmul.f32 %v2326, 0.5
        %v2335 = vmul.f32 %v2329, 0.5
        %v2336 = vmul.f32 %v2318, 0.70710677
        %v2337 = vmul.f32 %v2321, 0.70710677
        %v2338 = vmul.f32 %v2326, 0.70710677
        %v2339 = vmul.f32 %v2329, 0.70710677
        %v2340 = vand.u32 2147483647, %v2336
        %v2341 = vand.u32 2147483647, %v2337
        %v2342 = vand.u32 2147483647, %v2338
        %v2343 = vand.u32 2147483647, %v2339
        %v2344 = vmul.f32 %v2340, 0.3275911
        %v2345 = vmul.f32 %v2341, 0.3275911
        %v2346 = vmul.f32 %v2342, 0.3275911
        %v2347 = vmul.f32 %v2343, 0.3275911
        %v2348 = vadd.f32 %v2344, 1.0
        %v2349 = vadd.f32 %v2345, 1.0
        %v2350 = vadd.f32 %v2346, 1.0
        %v2351 = vadd.f32 %v2347, 1.0
        %v2352 = vrcp.pop %v2348
        %v2353 = vmul.f32 1.0, %v2352
        %v2354 = vrcp.pop %v2349
        %v2355 = vmul.f32 1.0, %v2354
        %v2356 = vrcp.pop %v2350
        %v2357 = vmul.f32 1.0, %v2356
        %v2358 = vrcp.pop %v2351
        %v2359 = vmul.f32 1.0, %v2358
        %v2360 = vmul.f32 %v2353, 1.0614054
        %v2361 = vmul.f32 %v2355, 1.0614054
        %v2362 = vmul.f32 %v2357, 1.0614054
        %v2363 = vmul.f32 %v2359, 1.0614054
        %v2364 = vadd.f32 %v2360, -1.4531521
        %v2365 = vadd.f32 %v2361, -1.4531521
        %v2366 = vadd.f32 %v2362, -1.4531521
        %v2367 = vadd.f32 %v2363, -1.4531521
        %v2368 = vmul.f32 %v2364, %v2353
        %v2369 = vmul.f32 %v2365, %v2355
        %v2370 = vmul.f32 %v2366, %v2357
        %v2371 = vmul.f32 %v2367, %v2359
        %v2372 = vadd.f32 %v2368, 1.4214138
        %v2373 = vadd.f32 %v2369, 1.4214138
        %v2374 = vadd.f32 %v2370, 1.4214138
        %v2375 = vadd.f32 %v2371, 1.4214138
        %v2376 = vmul.f32 %v2372, %v2353
        %v2377 = vmul.f32 %v2373, %v2355
        %v2378 = vmul.f32 %v2374, %v2357
        %v2379 = vmul.f32 %v2375, %v2359
        %v2380 = vadd.f32 %v2376, -0.28449672
        %v2381 = vadd.f32 %v2377, -0.28449672
        %v2382 = vadd.f32 %v2378, -0.28449672
        %v2383 = vadd.f32 %v2379, -0.28449672
        %v2384 = vmul.f32 %v2380, %v2353
        %v2385 = vmul.f32 %v2381, %v2355
        %v2386 = vmul.f32 %v2382, %v2357
        %v2387 = vmul.f32 %v2383, %v2359
        %v2388 = vadd.f32 %v2384, 0.2548296
        %v2389 = vadd.f32 %v2385, 0.2548296
        %v2390 = vadd.f32 %v2386, 0.2548296
        %v2391 = vadd.f32 %v2387, 0.2548296
        %v2392 = vmul.f32 %v2388, %v2353
        %v2393 = vmul.f32 %v2389, %v2355
        %v2394 = vmul.f32 %v2390, %v2357
        %v2395 = vmul.f32 %v2391, %v2359
        %v2396 = vsub.f32 0.0, %v2340
        %v2397 = vsub.f32 0.0, %v2341
        %v2398 = vsub.f32 0.0, %v2342
        %v2399 = vsub.f32 0.0, %v2343
        %v2400 = vmul.f32 %v2396, %v2340
        %v2401 = vmul.f32 %v2397, %v2341
        %v2402 = vmul.f32 %v2398, %v2342
        %v2403 = vmul.f32 %v2399, %v2343
        %v2404 = vmul.f32 %v2400, 1.442695
        %v2405 = vpow.pop %v2404
        %v2406 = vmul.f32 %v2401, 1.442695
        %v2407 = vpow.pop %v2406
        %v2408 = vmul.f32 %v2402, 1.442695
        %v2409 = vpow.pop %v2408
        %v2410 = vmul.f32 %v2403, 1.442695
        %v2411 = vpow.pop %v2410
        %v2412 = vmul.f32 %v2392, %v2405
        %v2413 = vmul.f32 %v2393, %v2407
        %v2414 = vmul.f32 %v2394, %v2409
        %v2415 = vmul.f32 %v2395, %v2411
        %v2416 = vsub.f32 1.0, %v2412
        %v2417 = vsub.f32 1.0, %v2413
        %v2418 = vsub.f32 1.0, %v2414
        %v2419 = vsub.f32 1.0, %v2415
        %vm2420 = vcmp.lt.f32.partialorder %v2336, 0.0
        %vm2421 = vcmp.lt.f32.partialorder %v2337, 0.0
        %vm2422 = vcmp.lt.f32.partialorder %v2338, 0.0
        %vm2423 = vcmp.lt.f32.partialorder %v2339, 0.0
        %v2424 = vsub.f32 0.0, %v2416
        %v2425 = vsub.f32 0.0, %v2417
        %v2426 = vsub.f32 0.0, %v2418
        %v2427 = vsub.f32 0.0, %v2419
        %v2428 = vsel %vm2420, %v2424, %v2416
        %v2429 = vsel %vm2421, %v2425, %v2417
        %v2430 = vsel %vm2422, %v2426, %v2418
        %v2431 = vsel %vm2423, %v2427, %v2419
        %v2432 = vadd.f32 %v2428, 1.0
        %v2433 = vadd.f32 %v2429, 1.0
        %v2434 = vadd.f32 %v2430, 1.0
        %v2435 = vadd.f32 %v2431, 1.0
        %v2436 = vmul.f32 %v2332, %v2432
        %v2437 = vmul.f32 %v2333, %v2433
        %v2438 = vmul.f32 %v2334, %v2434
        %v2439 = vmul.f32 %v2335, %v2435
        %v2440 = vpack.c.bf16 %v2437, %v2436
        %v2441 = vpack.c.bf16 %v2439, %v2438
        %v2442 = vld [vmem:[%s663] sm:$0xf]
        %v2443 = vld [vmem:[%s663 + $0x4] sm:$0xf]
        %v2444 = vld [vmem:[%s663 + $0x8] sm:$0xf]
        %v2445 = vld [vmem:[%s663 + $0xc] sm:$0xf]
        %v2446 = vld [vmem:[%s663 + $0x10] sm:$0xf]
        %v2447 = vld [vmem:[%s663 + $0x14] sm:$0xf]
        %v2448 = vld [vmem:[%s663 + $0x18] sm:$0xf]
        %v2449 = vld [vmem:[%s663 + $0x1c] sm:$0xf]
        %v2450 = vld [vmem:[%s666] sm:$0x1]
        %v2452 = vlaneseq
        %v2453 = vshrl.u32 %v2452, 7
        %v2454 = vsub.s32 0, %v2453
        %v2455 = vrot.slane %v2450, %v2454
        %v2465 = vunpack.c.l.b16 %v2442
        %v2466 = vunpack.c.l.b16 %v2443
        %v2467 = vunpack.c.l.b16 %v2444
        %v2468 = vunpack.c.l.b16 %v2445
        %v2469 = vunpack.c.l.b16 %v2446
        %v2470 = vunpack.c.l.b16 %v2447
        %v2471 = vunpack.c.l.b16 %v2448
        %v2472 = vunpack.c.l.b16 %v2449
        %v2473 = vpack.c.b16 %v2466, %v2465
        %v2474 = vpack.c.b16 %v2468, %v2467
        %v2475 = vpack.c.b16 %v2470, %v2469
        %v2476 = vpack.c.b16 %v2472, %v2471
        %vm2481 = vcmask 523264
        %v2483 = vsel %vm2481, %v2440, 0
        %v2486 = vsel %vm2481, %v2441, 0
        %2488 = vmatprep.subr.bf16.mxu0 0
        %2489 = vmatpush1.bf16.msra.mxu0 %v2473
        %2490 = vmatprep.subr.bf16.mxu0 0
        %2491 = vmatpush1.bf16.msra.mxu0 %v2474
        %2492 = vmatprep.subr.bf16.mxu0 0
        %2493 = vmatpush1.bf16.msra.mxu0 %v2475
        %2494 = vmatprep.subr.bf16.mxu0 0
        %2495 = vmatpush1.bf16.msra.mxu0 %v2476
        %2496 = vmatprep.subr.bf16.mxu0 0
        %2497 = vmatpush1.bf16.msra.mxu0 0
        %2498 = vmatprep.subr.bf16.mxu0 0
        %2499 = vmatpush1.bf16.msra.mxu0 0
        %2500 = vmatprep.subr.bf16.mxu0 0
        %2501 = vmatpush1.bf16.msra.mxu0 0
        %2502 = vmatprep.subr.bf16.mxu0 0
        %2503 = vmatpush1.bf16.msra.mxu0 0
        %2504 = vmatprep.subr.bf16.mxu0 0
        %2505 = vmatpush1.bf16.msra.mxu0 0
        %2506 = vmatprep.subr.bf16.mxu0 0
        %2507 = vmatpush1.bf16.msra.mxu0 0
        %2508 = vmatprep.subr.bf16.mxu0 0
        %2509 = vmatpush1.bf16.msra.mxu0 0
        %2510 = vmatprep.subr.bf16.mxu0 0
        %2511 = vmatpush1.bf16.msra.mxu0 0
        %2512 = vmatprep.subr.bf16.mxu0 0
        %2513 = vmatpush1.bf16.msra.mxu0 0
        %2514 = vmatprep.subr.bf16.mxu0 0
        %2515 = vmatpush1.bf16.msra.mxu0 0
        %2516 = vmatprep.subr.bf16.mxu0 0
        %2517 = vmatpush1.bf16.msra.mxu0 0
        %2518 = vmatprep.subr.bf16.mxu0 0
        %2519 = vmatpush1.bf16.msra.mxu0 0
        %2520 = vmatprep.mubr.bf16.mxu0 0
        %2521 = vmatmul.mubr.bf16.gmra.mrb[0].mxu0 %v2483
        %v2522 = vpop.f32.mrb[0].mxu0
        %v2523 = vadd.f32 %v2455, %v2522
        %v2524 = vpop.f32.mrb[0].mxu0
        %v2525 = vpop.f32.mrb[0].mxu0
        %v2526 = vadd.f32 %v2455, %v2525
        %v2527 = vpop.f32.mrb[0].mxu0
        %2528 = vmatprep.mubr.bf16.mxu0 0
        %2529 = vmatmul.mubr.bf16.gmra.mrb[0].mxu0 %v2486
        %v2530 = vpop.f32.mrb[0].mxu0
        %v2531 = vadd.f32 %v2455, %v2530
        %v2532 = vpop.f32.mrb[0].mxu0
        %v2533 = vpop.f32.mrb[0].mxu0
        %v2534 = vadd.f32 %v2455, %v2533
        %v2535 = vpop.f32.mrb[0].mxu0
        %2536 = vdwg.mxu0
        %v2537 = vadd.f32 %v2174, %v2523
        %v2538 = vadd.f32 %v2175, %v2526
        %v2539 = vadd.f32 %v2176, %v2531
        %v2540 = vadd.f32 %v2177, %v2534
        %2541 = vst.msk [vmem:[#allocation5] sm:$0xff] %vm785, %v2537
        %2542 = vst.msk [vmem:[#allocation5 + $0x8] sm:$0xff] %vm785, %v2538
        %2543 = vst.msk [vmem:[#allocation5 + $0x10] sm:$0xff] %vm785, %v2539
        %2544 = vst.msk [vmem:[#allocation5 + $0x18] sm:$0xff] %vm785, %v2540
        // Predicated region
        $region85: #{tpu_custom_call.1} parent=75 // pred_check
          %p2545 = pneg %p411
        $region86: #{tpu_custom_call.1} parent=75 // pred_check_branch
          %2547 = sbr.rel (%p2545) target = $region88
        $region87: #{tpu_custom_call.1} parent=75 // pred_region
          %s2548 = smul.u32 2, %s31
          %s2550 = ssub.s32 512, 512
          %2551 = vsyncadd [#allocation4], %s2550
          %s2552 = smul.addr %s2548, 2
          %s2553 = smul.addr %s2552, 128
          %s2554 = scalar_lea.hbm %s14, %s2553
          %s2555 = sshll.u32 [#allocation5], 4
          %s2556 = int_to_ptr.vmem [resolvable:$true] %s2555
          %2561 = dma.vmem_to_hbm [thread:$0]  %s2556, 512, %s2554, [#allocation4], 128, 128, 8
        $region88: #{tpu_custom_call.1} parent=75 // pred_fallthru
          _
        // Predicated region
        $region89: #{tpu_custom_call.1} parent=75 // pred_check
          %p2562 = pneg %p411
        $region90: #{tpu_custom_call.1} parent=75 // pred_check_branch
          %2564 = sbr.rel (%p2562) target = $region92
        $region91: #{tpu_custom_call.1} parent=75 // pred_region
          %2565 = dma.done [#allocation4], 512
        $region92: #{tpu_custom_call.1} parent=75 // pred_fallthru
          _
      $region76: #{tpu_custom_call.1} parent=5 // pred_fallthru
        _
      %p2566 = scmp.le.s32.totalorder 2, %s22
      // Predicated region
      $region93: #{tpu_custom_call.1} parent=5 // pred_check
        %p2567 = pneg %p2566
      $region94: #{tpu_custom_call.1} parent=5 // pred_check_branch
        %2569 = sbr.rel (%p2567) target = $region96
      $region95: #{tpu_custom_call.1} parent=5 // pred_region
        %s2570 = ssub.s32 %s22, 2
      $region96: #{tpu_custom_call.1} parent=5 // pred_fallthru
        _
    $region6: #{tpu_custom_call.1} parent=1 // loop_footer
      %s26 = sadd.s32 1, %s22
    $region7: #{tpu_custom_call.1} parent=1 // loop_footer_branch
      %21 = sbr.rel target = $region3
    $region8: #{tpu_custom_call.1} parent=1 // loop_exit
      _
    %2571 = vsyncpa [#allocation3], 1
    %s2572 = scalar_lea.sflag [#allocation3], 1
    %2573 = vsyncpa %s2572, 1
    %2574 = vsyncpa [#allocation4], 1
    %s2575 = scalar_lea.sflag [#allocation4], 1
    %2576 = vsyncpa %s2575, 1

</llo_original>
